<compile_context>
chip_gen: v7x
topology: tpu7x:2x2x1
jax: 0.10.0
libtpu: 0.0.40
codegen_flags: <defaults>
</compile_context>

<pallas_src>
import functools

import jax
import jax.numpy as jnp
from jax import lax
from jax.experimental import pallas as pl
from jax.experimental.pallas import tpu as pltpu


# ----------------------------------------------------------------------------- kernel
def _gru_recurrence_kernel(len_ref,         # (Bblk, 1) int32
                           gi0_ref,         # (Tc, Bblk, 3*Hg) f32  layer-0 input gates (biases folded in)
                           whhcat_ref,      # (2*Hg, 6*Hg) f32      block-diag [whh0 | whh1], gate-padded
                           wih1_ref,        # (Hg, 3*Hg) f32        layer-1 input weights, gate-padded
                           bih1_ref,        # (1, 3*Hg) f32         layer-1 input bias (+ folded r/z hidden bias)
                           bhn0_ref,        # (1, Hg) f32           layer-0 n-gate hidden bias
                           bhn1_ref,        # (1, Hg) f32           layer-1 n-gate hidden bias
                           out_ref,         # (Tc, Bblk, Hg) f32    masked GRU layer-2 states
                           h1_sc, h2_sc,    # VMEM (Bblk, Hg) f32   carries across time chunks
                           *, Tc, Hg):
    tc = pl.program_id(1)

    @pl.when(tc == 0)
    def _():
        h1_sc[...] = jnp.zeros_like(h1_sc)
        h2_sc[...] = jnp.zeros_like(h2_sc)

    lenc = len_ref[...]                       # (Bblk, 1) int32
    whhcat = whhcat_ref[...]                  # (2Hg, 6Hg)
    wih1 = wih1_ref[...]                      # (Hg, 3Hg)
    bih1 = bih1_ref[...]                      # (1, 3Hg)
    bhn0 = bhn0_ref[...]                      # (1, Hg)
    bhn1 = bhn1_ref[...]                      # (1, Hg)
    t_base = tc * Tc

    def cell(gi, gh, bhn, h_prev):
        # PyTorch GRU gate order (r, z, n); slices are 128-lane aligned (offsets 0, Hg, 2Hg).
        r = jax.nn.sigmoid(gi[:, :Hg] + gh[:, :Hg])
        z = jax.nn.sigmoid(gi[:, Hg:2 * Hg] + gh[:, Hg:2 * Hg])
        n = jnp.tanh(gi[:, 2 * Hg:] + r * (gh[:, 2 * Hg:] + bhn))
        return (1.0 - z) * n + z * h_prev

    def body(tt, carry):
        h1, h2 = carry
        valid = (t_base + tt) < lenc                              # (Bblk, 1) bool
        gi0 = gi0_ref[tt]                                         # (Bblk, 3Hg)
        # ONE fused hidden-to-hidden matmul for both layers (block-diagonal weights).
        hcat = jnp.concatenate([h1, h2], axis=-1)                 # (Bblk, 2Hg)
        gh = jnp.dot(hcat, whhcat, preferred_element_type=jnp.float32)   # (Bblk, 6Hg)
        h1n = cell(gi0, gh[:, :3 * Hg], bhn0, h1)
        gi1 = jnp.dot(h1n, wih1, preferred_element_type=jnp.float32) + bih1
        h2n = cell(gi1, gh[:, 3 * Hg:], bhn1, h2)
        # packed-sequence semantics: freeze carries past length, zero padded outputs.
        out_ref[tt] = jnp.where(valid, h2n, 0.0)
        return (jnp.where(valid, h1n, h1), jnp.where(valid, h2n, h2))

    h1, h2 = lax.fori_loop(0, Tc, body, (h1_sc[...], h2_sc[...]),
                           unroll=(True if Tc <= 64 else 8))
    h1_sc[...] = h1
    h2_sc[...] = h2


# ----------------------------------------------------------------------------- wrapper
def tracknet_v2_bes_forward(x, lengths, params, *, max_block_b=128, max_time_chunk=256,
                            return_gru_states=False):
    """x: (B, T, Cin) float32 (batch_first), lengths: (B,) int.  Returns (B, T, 4)."""
    B, T, Cin = x.shape
    H = params["conv_w"].shape[0]
    eps = 1e-5
    Hg = ((H + 127) // 128) * 128            # gate stride: each gate padded to 128-lane boundary

    # ---------------- Conv1d + ReLU + BatchNorm (eval) and layer-0 input gates: plain XLA ----------
    xpad = jnp.pad(x.astype(jnp.float32), ((0, 0), (1, 1), (0, 0)))
    y = jnp.zeros((B, T, H), jnp.float32)
    for k in range(3):
        y = y + jnp.einsum("btc,oc->bto", xpad[:, k:k + T, :], params["conv_w"][:, :, k])
    y = jnp.maximum(y, 0.0)
    scale = params["bn_gamma"] / jnp.sqrt(params["bn_var"] + eps)
    y = y * scale + (params["bn_beta"] - params["bn_mean"] * scale)

    def pad_gates_w(w):
        # PyTorch (3H, in) gate-stacked weight -> fused (in, 3*Hg), gate g at columns [g*Hg, g*Hg+H).
        in_dim = w.shape[1]
        out = jnp.zeros((in_dim, 3 * Hg), jnp.float32)
        for g in range(3):
            out = out.at[:, g * Hg:g * Hg + H].set(w[g * H:(g + 1) * H, :].T)
        return out

    def pad_gates_b(b):
        out = jnp.zeros((3 * Hg,), jnp.float32)
        for g in range(3):
            out = out.at[g * Hg:g * Hg + H].set(b[g * H:(g + 1) * H])
        return out

    def pad_rows(w):                          # (H, cols) -> (Hg, cols) zero-padded
        return jnp.pad(w, ((0, Hg - w.shape[0]), (0, 0)))

    # layer 0: precompute gi0 = y @ W_ih0 + b_ih0 (+ folded r/z hidden biases)
    wih0p = pad_gates_w(params["w_ih_l0"])                                  # (H, 3Hg)
    bhh0p = pad_gates_b(params["b_hh_l0"])
    bias0 = pad_gates_b(params["b_ih_l0"]).at[:2 * Hg].add(bhh0p[:2 * Hg])  # fold r,z hidden biases
    bhn0 = bhh0p[2 * Hg:].reshape(1, Hg)                                    # n-gate hidden bias stays
    gi0 = jnp.einsum("bth,hg->btg", y, wih0p) + bias0                       # (B, T, 3Hg)

    # layer 1 weights / biases
    wih1p = pad_rows(pad_gates_w(params["w_ih_l1"]))                        # (Hg, 3Hg)
    bhh1p = pad_gates_b(params["b_hh_l1"])
    bih1p = (pad_gates_b(params["b_ih_l1"]).at[:2 * Hg].add(bhh1p[:2 * Hg])).reshape(1, 3 * Hg)
    bhn1 = bhh1p[2 * Hg:].reshape(1, Hg)

    # fused carry weights: block_diag(whh0, whh1) -> (2Hg, 6Hg)
    whh0p = pad_rows(pad_gates_w(params["w_hh_l0"]))
    whh1p = pad_rows(pad_gates_w(params["w_hh_l1"]))
    whhcat = jnp.zeros((2 * Hg, 6 * Hg), jnp.float32)
    whhcat = whhcat.at[:Hg, :3 * Hg].set(whh0p)
    whhcat = whhcat.at[Hg:, 3 * Hg:].set(whh1p)

    # ---------------- batch / time blocking ----------------
    Bblk = max(8, min(max_block_b, ((B + 7) // 8) * 8))
    Bblk = (Bblk // 8) * 8
    B_pad = ((B + Bblk - 1) // Bblk) * Bblk
    n_blocks = B_pad // Bblk                  # NOTE: on v7x with large B, use >=2 blocks for megacore
    Tc = min(T, max_time_chunk)
    T_pad = ((T + Tc - 1) // Tc) * Tc
    n_tc = T_pad // Tc

    gi0_tm = jnp.transpose(jnp.pad(gi0, ((0, B_pad - B), (0, T_pad - T), (0, 0))),
                           (1, 0, 2))         # (T_pad, B_pad, 3Hg) time-major
    lengths_p = jnp.pad(lengths.astype(jnp.int32), (0, B_pad - B)).reshape(B_pad, 1)

    # ---------------- VMEM budget (double-buffered blocks + weights + scratch) ----------------
    f4 = 4
    need = (2 * Tc * Bblk * 3 * Hg * f4            # gi0 input block (x2 buffers)
            + 2 * Tc * Bblk * Hg * f4              # output block (x2 buffers)
            + 2 * (2 * Hg * 6 * Hg + Hg * 3 * Hg + 5 * Hg) * f4   # weights/biases (x2 buffers)
            + 2 * Bblk * Hg * f4                   # carry scratch
            + 2 * Bblk * 2 * f4)                   # lengths
    vmem_limit = int(min(max(need + (8 << 20), 32 << 20), 100 << 20))

    grid_spec = pltpu.PrefetchScalarGridSpec(
        num_scalar_prefetch=0,
        grid=(n_blocks, n_tc),
        in_specs=[
            pl.BlockSpec((Bblk, 1), lambda i, t: (i, 0)),                 # lengths
            pl.BlockSpec((Tc, Bblk, 3 * Hg), lambda i, t: (t, i, 0)),     # gi0 (time-chunked)
            pl.BlockSpec((2 * Hg, 6 * Hg), lambda i, t: (0, 0)),          # whhcat
            pl.BlockSpec((Hg, 3 * Hg), lambda i, t: (0, 0)),              # wih1
            pl.BlockSpec((1, 3 * Hg), lambda i, t: (0, 0)),               # bih1
            pl.BlockSpec((1, Hg), lambda i, t: (0, 0)),                   # bhn0
            pl.BlockSpec((1, Hg), lambda i, t: (0, 0)),                   # bhn1
        ],
        out_specs=pl.BlockSpec((Tc, Bblk, Hg), lambda i, t: (t, i, 0)),   # lane-dense (Hg>=128)
        scratch_shapes=[pltpu.VMEM((Bblk, Hg), jnp.float32),
                        pltpu.VMEM((Bblk, Hg), jnp.float32)],
    )

    kernel = functools.partial(_gru_recurrence_kernel, Tc=Tc, Hg=Hg)
    gru_tm = pl.pallas_call(
        kernel,
        out_shape=jax.ShapeDtypeStruct((T_pad, B_pad, Hg), jnp.float32),
        grid_spec=grid_spec,
        compiler_params=pltpu.CompilerParams(
            dimension_semantics=("parallel", "arbitrary"),   # batch blocks parallel, time sequential
            vmem_limit_bytes=vmem_limit,
        ),
    )(lengths_p, gi0_tm, whhcat, wih1p, bih1p, bhn0, bhn1)

    # back to batch-first, drop batch/time/gate padding
    gru_outs = jnp.transpose(gru_tm, (1, 0, 2))[:B, :T, :H]              # (B, T, H)

    # ---------------- heads in plain XLA (tiny N=2 matmuls; keeps kernel output lane-dense) ------
    xy = gru_outs @ params["w_xy"].T + params["b_xy"]
    rr = jax.nn.softplus(gru_outs @ params["w_r"].T + params["b_r"])
    out = jnp.concatenate([xy, rr], axis=-1)
    if return_gru_states:
        return out, gru_outs
    return out


# ----------------------------------------------------------------------------- reference
def reference_forward(x, lengths, params):
    B, T, Cin = x.shape
    H = params["conv_w"].shape[0]
    eps = 1e-5
    xp = jnp.pad(x.astype(jnp.float32), ((0, 0), (1, 1), (0, 0)))
    y = jnp.zeros((B, T, H), jnp.float32)
    for k in range(3):
        y = y + jnp.einsum("btc,oc->bto", xp[:, k:k + T, :], params["conv_w"][:, :, k])
    y = jnp.maximum(y, 0.0)
    scale = params["bn_gamma"] / jnp.sqrt(params["bn_var"] + eps)
    shift = params["bn_beta"] - params["bn_mean"] * scale
    y = y * scale + shift

    def cell(x_t, h, wih, whh, bih, bhh):
        gi = x_t @ wih.T + bih
        gh = h @ whh.T + bhh
        r = jax.nn.sigmoid(gi[:, :H] + gh[:, :H])
        z = jax.nn.sigmoid(gi[:, H:2 * H] + gh[:, H:2 * H])
        n = jnp.tanh(gi[:, 2 * H:] + r * gh[:, 2 * H:])
        return (1.0 - z) * n + z * h

    h1 = jnp.zeros((B, H)); h2 = jnp.zeros((B, H))
    outs = []
    for t in range(T):
        valid = (t < lengths)[:, None]
        h1n = cell(y[:, t], h1, params["w_ih_l0"], params["w_hh_l0"],
                   params["b_ih_l0"], params["b_hh_l0"])
        h2n = cell(h1n, h2, params["w_ih_l1"], params["w_hh_l1"],
                   params["b_ih_l1"], params["b_hh_l1"])
        h1 = jnp.where(valid, h1n, h1)
        h2 = jnp.where(valid, h2n, h2)
        outs.append(jnp.where(valid, h2n, 0.0))
    gru_outs = jnp.stack(outs, axis=1)
    xy = gru_outs @ params["w_xy"].T + params["b_xy"]
    rr = jax.nn.softplus(gru_outs @ params["w_r"].T + params["b_r"])
    return jnp.concatenate([xy, rr], axis=-1)


# ----------------------------------------------------------------------------- params / main
def make_params(key, Cin, H):
    ks = jax.random.split(key, 16)
    u = lambda k, shape, s: jax.random.uniform(k, shape, jnp.float32, -s, s)
    sc = 1.0 / jnp.sqrt(jnp.float32(H))
    p = {
        "conv_w": u(ks[0], (H, Cin, 3), 1.0 / jnp.sqrt(jnp.float32(Cin * 3))),
        "bn_gamma": jax.random.uniform(ks[1], (H,), jnp.float32, 0.5, 1.5),
        "bn_beta": u(ks[2], (H,), 0.1),
        "bn_mean": jnp.zeros((H,), jnp.float32),   # eval-mode running stats
        "bn_var": jnp.ones((H,), jnp.float32),
        "w_ih_l0": u(ks[3], (3 * H, H), sc), "w_hh_l0": u(ks[4], (3 * H, H), sc),
        "b_ih_l0": u(ks[5], (3 * H,), sc),  "b_hh_l0": u(ks[6], (3 * H,), sc),
        "w_ih_l1": u(ks[7], (3 * H, H), sc), "w_hh_l1": u(ks[8], (3 * H, H), sc),
        "b_ih_l1": u(ks[9], (3 * H,), sc),  "b_hh_l1": u(ks[10], (3 * H,), sc),
        "w_xy": u(ks[11], (2, H), sc), "b_xy": u(ks[12], (2,), sc),
        "w_r": u(ks[13], (2, H), sc),  "b_r": u(ks[14], (2,), sc),
    }
    return p, ks[15]


if __name__ == "__main__":
    B, T, Cin, H = 2, 8, 4, 32
    params, key = make_params(jax.random.PRNGKey(0), Cin, H)
    x = jax.random.normal(key, (B, T, Cin), jnp.float32)
    lengths = jnp.array([T, 5], jnp.int32)          # max(lengths) == T

    out = tracknet_v2_bes_forward(x, lengths, params)
    out = jax.block_until_ready(out)

    ref = reference_forward(x, lengths, params)
    assert out.shape == (B, T, 4)
    assert jnp.allclose(out, ref, rtol=1e-3, atol=1e-3), float(jnp.max(jnp.abs(out - ref)))
    print("KERNEL_OK")
</pallas_src>

<mosaic_0001>
module attributes {stable_mosaic.version = 11 : i64} {
  func.func @_gru_recurrence_kernel(%arg0: i32, %arg1: i32, %arg2: memref<8x1xi32, #tpu.memory_space<vmem>>, %arg3: memref<8x8x384xf32, #tpu.memory_space<vmem>>, %arg4: memref<256x768xf32, #tpu.memory_space<vmem>>, %arg5: memref<128x384xf32, #tpu.memory_space<vmem>>, %arg6: memref<1x384xf32, #tpu.memory_space<vmem>>, %arg7: memref<1x128xf32, #tpu.memory_space<vmem>>, %arg8: memref<1x128xf32, #tpu.memory_space<vmem>>, %arg9: memref<8x8x128xf32, #tpu.memory_space<vmem>>, %arg10: memref<8x128xf32, #tpu.memory_space<vmem>>, %arg11: memref<8x128xf32, #tpu.memory_space<vmem>>) attributes {dimension_semantics = [#tpu.dimension_semantics<parallel>, #tpu.dimension_semantics<arbitrary>], iteration_bounds = array<i64: 1, 1>, scalar_prefetch = 0 : i64, scratch_operands = 2 : i64, tpu.core_type = #tpu.core_type<tc>, window_params = [{transform_indices = @transform_0, window_bounds = array<i64: 8, 1>}, {transform_indices = @transform_1, window_bounds = array<i64: 8, 8, 384>}, {pipeline_mode = #tpu.pipeline_mode<synchronous>, transform_indices = @transform_2, window_bounds = array<i64: 256, 768>}, {pipeline_mode = #tpu.pipeline_mode<synchronous>, transform_indices = @transform_3, window_bounds = array<i64: 128, 384>}, {pipeline_mode = #tpu.pipeline_mode<synchronous>, transform_indices = @transform_4, window_bounds = array<i64: 1, 384>}, {pipeline_mode = #tpu.pipeline_mode<synchronous>, transform_indices = @transform_5, window_bounds = array<i64: 1, 128>}, {pipeline_mode = #tpu.pipeline_mode<synchronous>, transform_indices = @transform_6, window_bounds = array<i64: 1, 128>}, {transform_indices = @transform_7, window_bounds = array<i64: 8, 8, 128>}]} {
    %c0_i32 = arith.constant 0 : i32
    %0 = arith.cmpi eq, %arg1, %c0_i32 : i32
    %1 = arith.extui %0 : i1 to i32
    %c0_i32_0 = arith.constant 0 : i32
    %2 = arith.cmpi ne, %1, %c0_i32_0 : i32
    scf.if %2 {
      %cst_125 = arith.constant 0.000000e+00 : f32
      %678 = vector.broadcast %cst_125 : f32 to vector<8x128xf32>
      %c0_126 = arith.constant 0 : index
      %c0_127 = arith.constant 0 : index
      %679 = vector.load %arg10[%c0_126, %c0_127] : memref<8x128xf32, #tpu.memory_space<vmem>>, vector<8x128xf32>
      tpu.vector_store %arg10[%c0_126, %c0_127], %678 {strides = array<i32>} : memref<8x128xf32, #tpu.memory_space<vmem>>, vector<8x128xf32>,
      %cst_128 = arith.constant 0.000000e+00 : f32
      %680 = vector.broadcast %cst_128 : f32 to vector<8x128xf32>
      %c0_129 = arith.constant 0 : index
      %c0_130 = arith.constant 0 : index
      %681 = vector.load %arg11[%c0_129, %c0_130] : memref<8x128xf32, #tpu.memory_space<vmem>>, vector<8x128xf32>
      tpu.vector_store %arg11[%c0_129, %c0_130], %680 {strides = array<i32>} : memref<8x128xf32, #tpu.memory_space<vmem>>, vector<8x128xf32>,
    } else {
    }
    %c0 = arith.constant 0 : index
    %c0_1 = arith.constant 0 : index
    %3 = vector.load %arg2[%c0, %c0_1] : memref<8x1xi32, #tpu.memory_space<vmem>>, vector<8x1xi32>
    %c0_2 = arith.constant 0 : index
    %c0_3 = arith.constant 0 : index
    %4 = vector.load %arg4[%c0_2, %c0_3] : memref<256x768xf32, #tpu.memory_space<vmem>>, vector<256x768xf32>
    %c0_4 = arith.constant 0 : index
    %c0_5 = arith.constant 0 : index
    %5 = vector.load %arg5[%c0_4, %c0_5] : memref<128x384xf32, #tpu.memory_space<vmem>>, vector<128x384xf32>
    %c0_6 = arith.constant 0 : index
    %c0_7 = arith.constant 0 : index
    %6 = vector.load %arg6[%c0_6, %c0_7] : memref<1x384xf32, #tpu.memory_space<vmem>>, vector<1x384xf32>
    %c0_8 = arith.constant 0 : index
    %c0_9 = arith.constant 0 : index
    %7 = vector.load %arg7[%c0_8, %c0_9] : memref<1x128xf32, #tpu.memory_space<vmem>>, vector<1x128xf32>
    %c0_10 = arith.constant 0 : index
    %c0_11 = arith.constant 0 : index
    %8 = vector.load %arg8[%c0_10, %c0_11] : memref<1x128xf32, #tpu.memory_space<vmem>>, vector<1x128xf32>
    %c8_i32 = arith.constant 8 : i32
    %9 = arith.muli %arg1, %c8_i32 : i32
    %c0_12 = arith.constant 0 : index
    %c0_13 = arith.constant 0 : index
    %10 = vector.load %arg10[%c0_12, %c0_13] : memref<8x128xf32, #tpu.memory_space<vmem>>, vector<8x128xf32>
    %c0_14 = arith.constant 0 : index
    %c0_15 = arith.constant 0 : index
    %11 = vector.load %arg11[%c0_14, %c0_15] : memref<8x128xf32, #tpu.memory_space<vmem>>, vector<8x128xf32>
    %c0_i32_16 = arith.constant 0 : i32
    %12 = arith.addi %9, %c0_i32_16 : i32
    %13 = vector.broadcast %12 : i32 to vector<8x1xi32>
    %14 = arith.cmpi slt, %13, %3 : vector<8x1xi32>
    %15 = arith.index_cast %c0_i32_16 : i32 to index
    %c0_17 = arith.constant 0 : index
    %c0_18 = arith.constant 0 : index
    %16 = vector.load %arg3[%15, %c0_17, %c0_18] : memref<8x8x384xf32, #tpu.memory_space<vmem>>, vector<1x8x384xf32>
    %17 = vector.shape_cast %16 : vector<1x8x384xf32> to vector<8x384xf32>
    %18 = tpu.concatenate %10, %11 in 1 : vector<8x128xf32>, vector<8x128xf32> -> vector<8x256xf32>
    %cst = arith.constant dense<0.000000e+00> : vector<8x768xf32>
    %19 = tpu.matmul %18, %4, %cst {dimension_numbers = #tpu.dot_dimension_numbers<[1], [0], [0], [1], [0, 0, 1, 1], [], []>} : vector<8x256xf32>, vector<256x768xf32>, vector<8x768xf32> -> vector<8x768xf32>
    %20 = vector.extract_strided_slice %19 {offsets = [0, 0], sizes = [8, 384], strides = [1, 1]} : vector<8x768xf32> to vector<8x384xf32>
    %21 = vector.extract_strided_slice %17 {offsets = [0, 0], sizes = [8, 128], strides = [1, 1]} : vector<8x384xf32> to vector<8x128xf32>
    %22 = vector.extract_strided_slice %20 {offsets = [0, 0], sizes = [8, 128], strides = [1, 1]} : vector<8x384xf32> to vector<8x128xf32>
    %23 = arith.addf %21, %22 : vector<8x128xf32>
    %24 = arith.negf %23 : vector<8x128xf32>
    %25 = math.exp %24 : vector<8x128xf32>
    %cst_19 = arith.constant 1.000000e+00 : f32
    %26 = vector.broadcast %cst_19 : f32 to vector<8x128xf32>
    %27 = arith.addf %26, %25 : vector<8x128xf32>
    %28 = arith.divf %26, %27 : vector<8x128xf32>
    %29 = vector.extract_strided_slice %17 {offsets = [0, 128], sizes = [8, 128], strides = [1, 1]} : vector<8x384xf32> to vector<8x128xf32>
    %30 = vector.extract_strided_slice %20 {offsets = [0, 128], sizes = [8, 128], strides = [1, 1]} : vector<8x384xf32> to vector<8x128xf32>
    %31 = arith.addf %29, %30 : vector<8x128xf32>
    %32 = arith.negf %31 : vector<8x128xf32>
    %33 = math.exp %32 : vector<8x128xf32>
    %cst_20 = arith.constant 1.000000e+00 : f32
    %34 = vector.broadcast %cst_20 : f32 to vector<8x128xf32>
    %35 = arith.addf %34, %33 : vector<8x128xf32>
    %36 = arith.divf %34, %35 : vector<8x128xf32>
    %37 = vector.extract_strided_slice %17 {offsets = [0, 256], sizes = [8, 128], strides = [1, 1]} : vector<8x384xf32> to vector<8x128xf32>
    %38 = vector.extract_strided_slice %20 {offsets = [0, 256], sizes = [8, 128], strides = [1, 1]} : vector<8x384xf32> to vector<8x128xf32>
    %39 = vector.broadcast %7 : vector<1x128xf32> to vector<8x128xf32>
    %40 = arith.addf %38, %39 : vector<8x128xf32>
    %41 = arith.mulf %28, %40 : vector<8x128xf32>
    %42 = arith.addf %37, %41 : vector<8x128xf32>
    %43 = math.tanh %42 : vector<8x128xf32>
    %cst_21 = arith.constant 1.000000e+00 : f32
    %44 = vector.broadcast %cst_21 : f32 to vector<8x128xf32>
    %45 = arith.subf %44, %36 : vector<8x128xf32>
    %46 = arith.mulf %45, %43 : vector<8x128xf32>
    %47 = arith.mulf %36, %10 : vector<8x128xf32>
    %48 = arith.addf %46, %47 : vector<8x128xf32>
    %cst_22 = arith.constant dense<0.000000e+00> : vector<8x384xf32>
    %49 = tpu.matmul %48, %5, %cst_22 {dimension_numbers = #tpu.dot_dimension_numbers<[1], [0], [0], [1], [0, 0, 1, 1], [], []>} : vector<8x128xf32>, vector<128x384xf32>, vector<8x384xf32> -> vector<8x384xf32>
    %50 = vector.broadcast %6 : vector<1x384xf32> to vector<8x384xf32>
    %51 = arith.addf %49, %50 : vector<8x384xf32>
    %52 = vector.extract_strided_slice %19 {offsets = [0, 384], sizes = [8, 384], strides = [1, 1]} : vector<8x768xf32> to vector<8x384xf32>
    %53 = vector.extract_strided_slice %51 {offsets = [0, 0], sizes = [8, 128], strides = [1, 1]} : vector<8x384xf32> to vector<8x128xf32>
    %54 = vector.extract_strided_slice %52 {offsets = [0, 0], sizes = [8, 128], strides = [1, 1]} : vector<8x384xf32> to vector<8x128xf32>
    %55 = arith.addf %53, %54 : vector<8x128xf32>
    %56 = arith.negf %55 : vector<8x128xf32>
    %57 = math.exp %56 : vector<8x128xf32>
    %cst_23 = arith.constant 1.000000e+00 : f32
    %58 = vector.broadcast %cst_23 : f32 to vector<8x128xf32>
    %59 = arith.addf %58, %57 : vector<8x128xf32>
    %60 = arith.divf %58, %59 : vector<8x128xf32>
    %61 = vector.extract_strided_slice %51 {offsets = [0, 128], sizes = [8, 128], strides = [1, 1]} : vector<8x384xf32> to vector<8x128xf32>
    %62 = vector.extract_strided_slice %52 {offsets = [0, 128], sizes = [8, 128], strides = [1, 1]} : vector<8x384xf32> to vector<8x128xf32>
    %63 = arith.addf %61, %62 : vector<8x128xf32>
    %64 = arith.negf %63 : vector<8x128xf32>
    %65 = math.exp %64 : vector<8x128xf32>
    %cst_24 = arith.constant 1.000000e+00 : f32
    %66 = vector.broadcast %cst_24 : f32 to vector<8x128xf32>
    %67 = arith.addf %66, %65 : vector<8x128xf32>
    %68 = arith.divf %66, %67 : vector<8x128xf32>
    %69 = vector.extract_strided_slice %51 {offsets = [0, 256], sizes = [8, 128], strides = [1, 1]} : vector<8x384xf32> to vector<8x128xf32>
    %70 = vector.extract_strided_slice %52 {offsets = [0, 256], sizes = [8, 128], strides = [1, 1]} : vector<8x384xf32> to vector<8x128xf32>
    %71 = vector.broadcast %8 : vector<1x128xf32> to vector<8x128xf32>
    %72 = arith.addf %70, %71 : vector<8x128xf32>
    %73 = arith.mulf %60, %72 : vector<8x128xf32>
    %74 = arith.addf %69, %73 : vector<8x128xf32>
    %75 = math.tanh %74 : vector<8x128xf32>
    %cst_25 = arith.constant 1.000000e+00 : f32
    %76 = vector.broadcast %cst_25 : f32 to vector<8x128xf32>
    %77 = arith.subf %76, %68 : vector<8x128xf32>
    %78 = arith.mulf %77, %75 : vector<8x128xf32>
    %79 = arith.mulf %68, %11 : vector<8x128xf32>
    %80 = arith.addf %78, %79 : vector<8x128xf32>
    %cst_26 = arith.constant 0.000000e+00 : f32
    %81 = vector.shape_cast %14 : vector<8x1xi1> to vector<8x1xi1>
    %82 = vector.broadcast %81 : vector<8x1xi1> to vector<8x128xi1>
    %83 = vector.broadcast %cst_26 : f32 to vector<8x128xf32>
    %84 = arith.select %82, %80, %83 : vector<8x128xi1>, vector<8x128xf32>
    %85 = arith.index_cast %c0_i32_16 : i32 to index
    %c0_27 = arith.constant 0 : index
    %c0_28 = arith.constant 0 : index
    %86 = vector.load %arg9[%85, %c0_27, %c0_28] : memref<8x8x128xf32, #tpu.memory_space<vmem>>, vector<1x8x128xf32>
    %87 = vector.shape_cast %86 : vector<1x8x128xf32> to vector<8x128xf32>
    %88 = vector.shape_cast %84 : vector<8x128xf32> to vector<1x8x128xf32>
    tpu.vector_store %arg9[%85, %c0_27, %c0_28], %88 {strides = array<i32>} : memref<8x8x128xf32, #tpu.memory_space<vmem>>, vector<1x8x128xf32>,
    %89 = vector.shape_cast %14 : vector<8x1xi1> to vector<8x1xi1>
    %90 = vector.broadcast %89 : vector<8x1xi1> to vector<8x128xi1>
    %91 = arith.select %90, %48, %10 : vector<8x128xi1>, vector<8x128xf32>
    %92 = vector.shape_cast %14 : vector<8x1xi1> to vector<8x1xi1>
    %93 = vector.broadcast %92 : vector<8x1xi1> to vector<8x128xi1>
    %94 = arith.select %93, %80, %11 : vector<8x128xi1>, vector<8x128xf32>
    %c1_i32 = arith.constant 1 : i32
    %95 = arith.addi %9, %c1_i32 : i32
    %96 = vector.broadcast %95 : i32 to vector<8x1xi32>
    %97 = arith.cmpi slt, %96, %3 : vector<8x1xi32>
    %98 = arith.index_cast %c1_i32 : i32 to index
    %c0_29 = arith.constant 0 : index
    %c0_30 = arith.constant 0 : index
    %99 = vector.load %arg3[%98, %c0_29, %c0_30] : memref<8x8x384xf32, #tpu.memory_space<vmem>>, vector<1x8x384xf32>
    %100 = vector.shape_cast %99 : vector<1x8x384xf32> to vector<8x384xf32>
    %101 = tpu.concatenate %91, %94 in 1 : vector<8x128xf32>, vector<8x128xf32> -> vector<8x256xf32>
    %cst_31 = arith.constant dense<0.000000e+00> : vector<8x768xf32>
    %102 = tpu.matmul %101, %4, %cst_31 {dimension_numbers = #tpu.dot_dimension_numbers<[1], [0], [0], [1], [0, 0, 1, 1], [], []>} : vector<8x256xf32>, vector<256x768xf32>, vector<8x768xf32> -> vector<8x768xf32>
    %103 = vector.extract_strided_slice %102 {offsets = [0, 0], sizes = [8, 384], strides = [1, 1]} : vector<8x768xf32> to vector<8x384xf32>
    %104 = vector.extract_strided_slice %100 {offsets = [0, 0], sizes = [8, 128], strides = [1, 1]} : vector<8x384xf32> to vector<8x128xf32>
    %105 = vector.extract_strided_slice %103 {offsets = [0, 0], sizes = [8, 128], strides = [1, 1]} : vector<8x384xf32> to vector<8x128xf32>
    %106 = arith.addf %104, %105 : vector<8x128xf32>
    %107 = arith.negf %106 : vector<8x128xf32>
    %108 = math.exp %107 : vector<8x128xf32>
    %cst_32 = arith.constant 1.000000e+00 : f32
    %109 = vector.broadcast %cst_32 : f32 to vector<8x128xf32>
    %110 = arith.addf %109, %108 : vector<8x128xf32>
    %111 = arith.divf %109, %110 : vector<8x128xf32>
    %112 = vector.extract_strided_slice %100 {offsets = [0, 128], sizes = [8, 128], strides = [1, 1]} : vector<8x384xf32> to vector<8x128xf32>
    %113 = vector.extract_strided_slice %103 {offsets = [0, 128], sizes = [8, 128], strides = [1, 1]} : vector<8x384xf32> to vector<8x128xf32>
    %114 = arith.addf %112, %113 : vector<8x128xf32>
    %115 = arith.negf %114 : vector<8x128xf32>
    %116 = math.exp %115 : vector<8x128xf32>
    %cst_33 = arith.constant 1.000000e+00 : f32
    %117 = vector.broadcast %cst_33 : f32 to vector<8x128xf32>
    %118 = arith.addf %117, %116 : vector<8x128xf32>
    %119 = arith.divf %117, %118 : vector<8x128xf32>
    %120 = vector.extract_strided_slice %100 {offsets = [0, 256], sizes = [8, 128], strides = [1, 1]} : vector<8x384xf32> to vector<8x128xf32>
    %121 = vector.extract_strided_slice %103 {offsets = [0, 256], sizes = [8, 128], strides = [1, 1]} : vector<8x384xf32> to vector<8x128xf32>
    %122 = vector.broadcast %7 : vector<1x128xf32> to vector<8x128xf32>
    %123 = arith.addf %121, %122 : vector<8x128xf32>
    %124 = arith.mulf %111, %123 : vector<8x128xf32>
    %125 = arith.addf %120, %124 : vector<8x128xf32>
    %126 = math.tanh %125 : vector<8x128xf32>
    %cst_34 = arith.constant 1.000000e+00 : f32
    %127 = vector.broadcast %cst_34 : f32 to vector<8x128xf32>
    %128 = arith.subf %127, %119 : vector<8x128xf32>
    %129 = arith.mulf %128, %126 : vector<8x128xf32>
    %130 = arith.mulf %119, %91 : vector<8x128xf32>
    %131 = arith.addf %129, %130 : vector<8x128xf32>
    %cst_35 = arith.constant dense<0.000000e+00> : vector<8x384xf32>
    %132 = tpu.matmul %131, %5, %cst_35 {dimension_numbers = #tpu.dot_dimension_numbers<[1], [0], [0], [1], [0, 0, 1, 1], [], []>} : vector<8x128xf32>, vector<128x384xf32>, vector<8x384xf32> -> vector<8x384xf32>
    %133 = vector.broadcast %6 : vector<1x384xf32> to vector<8x384xf32>
    %134 = arith.addf %132, %133 : vector<8x384xf32>
    %135 = vector.extract_strided_slice %102 {offsets = [0, 384], sizes = [8, 384], strides = [1, 1]} : vector<8x768xf32> to vector<8x384xf32>
    %136 = vector.extract_strided_slice %134 {offsets = [0, 0], sizes = [8, 128], strides = [1, 1]} : vector<8x384xf32> to vector<8x128xf32>
    %137 = vector.extract_strided_slice %135 {offsets = [0, 0], sizes = [8, 128], strides = [1, 1]} : vector<8x384xf32> to vector<8x128xf32>
    %138 = arith.addf %136, %137 : vector<8x128xf32>
    %139 = arith.negf %138 : vector<8x128xf32>
    %140 = math.exp %139 : vector<8x128xf32>
    %cst_36 = arith.constant 1.000000e+00 : f32
    %141 = vector.broadcast %cst_36 : f32 to vector<8x128xf32>
    %142 = arith.addf %141, %140 : vector<8x128xf32>
    %143 = arith.divf %141, %142 : vector<8x128xf32>
    %144 = vector.extract_strided_slice %134 {offsets = [0, 128], sizes = [8, 128], strides = [1, 1]} : vector<8x384xf32> to vector<8x128xf32>
    %145 = vector.extract_strided_slice %135 {offsets = [0, 128], sizes = [8, 128], strides = [1, 1]} : vector<8x384xf32> to vector<8x128xf32>
    %146 = arith.addf %144, %145 : vector<8x128xf32>
    %147 = arith.negf %146 : vector<8x128xf32>
    %148 = math.exp %147 : vector<8x128xf32>
    %cst_37 = arith.constant 1.000000e+00 : f32
    %149 = vector.broadcast %cst_37 : f32 to vector<8x128xf32>
    %150 = arith.addf %149, %148 : vector<8x128xf32>
    %151 = arith.divf %149, %150 : vector<8x128xf32>
    %152 = vector.extract_strided_slice %134 {offsets = [0, 256], sizes = [8, 128], strides = [1, 1]} : vector<8x384xf32> to vector<8x128xf32>
    %153 = vector.extract_strided_slice %135 {offsets = [0, 256], sizes = [8, 128], strides = [1, 1]} : vector<8x384xf32> to vector<8x128xf32>
    %154 = vector.broadcast %8 : vector<1x128xf32> to vector<8x128xf32>
    %155 = arith.addf %153, %154 : vector<8x128xf32>
    %156 = arith.mulf %143, %155 : vector<8x128xf32>
    %157 = arith.addf %152, %156 : vector<8x128xf32>
    %158 = math.tanh %157 : vector<8x128xf32>
    %cst_38 = arith.constant 1.000000e+00 : f32
    %159 = vector.broadcast %cst_38 : f32 to vector<8x128xf32>
    %160 = arith.subf %159, %151 : vector<8x128xf32>
    %161 = arith.mulf %160, %158 : vector<8x128xf32>
    %162 = arith.mulf %151, %94 : vector<8x128xf32>
    %163 = arith.addf %161, %162 : vector<8x128xf32>
    %cst_39 = arith.constant 0.000000e+00 : f32
    %164 = vector.shape_cast %97 : vector<8x1xi1> to vector<8x1xi1>
    %165 = vector.broadcast %164 : vector<8x1xi1> to vector<8x128xi1>
    %166 = vector.broadcast %cst_39 : f32 to vector<8x128xf32>
    %167 = arith.select %165, %163, %166 : vector<8x128xi1>, vector<8x128xf32>
    %168 = arith.index_cast %c1_i32 : i32 to index
    %c0_40 = arith.constant 0 : index
    %c0_41 = arith.constant 0 : index
    %169 = vector.load %arg9[%168, %c0_40, %c0_41] : memref<8x8x128xf32, #tpu.memory_space<vmem>>, vector<1x8x128xf32>
    %170 = vector.shape_cast %169 : vector<1x8x128xf32> to vector<8x128xf32>
    %171 = vector.shape_cast %167 : vector<8x128xf32> to vector<1x8x128xf32>
    tpu.vector_store %arg9[%168, %c0_40, %c0_41], %171 {strides = array<i32>} : memref<8x8x128xf32, #tpu.memory_space<vmem>>, vector<1x8x128xf32>,
    %172 = vector.shape_cast %97 : vector<8x1xi1> to vector<8x1xi1>
    %173 = vector.broadcast %172 : vector<8x1xi1> to vector<8x128xi1>
    %174 = arith.select %173, %131, %91 : vector<8x128xi1>, vector<8x128xf32>
    %175 = vector.shape_cast %97 : vector<8x1xi1> to vector<8x1xi1>
    %176 = vector.broadcast %175 : vector<8x1xi1> to vector<8x128xi1>
    %177 = arith.select %176, %163, %94 : vector<8x128xi1>, vector<8x128xf32>
    %c2_i32 = arith.constant 2 : i32
    %178 = arith.addi %9, %c2_i32 : i32
    %179 = vector.broadcast %178 : i32 to vector<8x1xi32>
    %180 = arith.cmpi slt, %179, %3 : vector<8x1xi32>
    %181 = arith.index_cast %c2_i32 : i32 to index
    %c0_42 = arith.constant 0 : index
    %c0_43 = arith.constant 0 : index
    %182 = vector.load %arg3[%181, %c0_42, %c0_43] : memref<8x8x384xf32, #tpu.memory_space<vmem>>, vector<1x8x384xf32>
    %183 = vector.shape_cast %182 : vector<1x8x384xf32> to vector<8x384xf32>
    %184 = tpu.concatenate %174, %177 in 1 : vector<8x128xf32>, vector<8x128xf32> -> vector<8x256xf32>
    %cst_44 = arith.constant dense<0.000000e+00> : vector<8x768xf32>
    %185 = tpu.matmul %184, %4, %cst_44 {dimension_numbers = #tpu.dot_dimension_numbers<[1], [0], [0], [1], [0, 0, 1, 1], [], []>} : vector<8x256xf32>, vector<256x768xf32>, vector<8x768xf32> -> vector<8x768xf32>
    %186 = vector.extract_strided_slice %185 {offsets = [0, 0], sizes = [8, 384], strides = [1, 1]} : vector<8x768xf32> to vector<8x384xf32>
    %187 = vector.extract_strided_slice %183 {offsets = [0, 0], sizes = [8, 128], strides = [1, 1]} : vector<8x384xf32> to vector<8x128xf32>
    %188 = vector.extract_strided_slice %186 {offsets = [0, 0], sizes = [8, 128], strides = [1, 1]} : vector<8x384xf32> to vector<8x128xf32>
    %189 = arith.addf %187, %188 : vector<8x128xf32>
    %190 = arith.negf %189 : vector<8x128xf32>
    %191 = math.exp %190 : vector<8x128xf32>
    %cst_45 = arith.constant 1.000000e+00 : f32
    %192 = vector.broadcast %cst_45 : f32 to vector<8x128xf32>
    %193 = arith.addf %192, %191 : vector<8x128xf32>
    %194 = arith.divf %192, %193 : vector<8x128xf32>
    %195 = vector.extract_strided_slice %183 {offsets = [0, 128], sizes = [8, 128], strides = [1, 1]} : vector<8x384xf32> to vector<8x128xf32>
    %196 = vector.extract_strided_slice %186 {offsets = [0, 128], sizes = [8, 128], strides = [1, 1]} : vector<8x384xf32> to vector<8x128xf32>
    %197 = arith.addf %195, %196 : vector<8x128xf32>
    %198 = arith.negf %197 : vector<8x128xf32>
    %199 = math.exp %198 : vector<8x128xf32>
    %cst_46 = arith.constant 1.000000e+00 : f32
    %200 = vector.broadcast %cst_46 : f32 to vector<8x128xf32>
    %201 = arith.addf %200, %199 : vector<8x128xf32>
    %202 = arith.divf %200, %201 : vector<8x128xf32>
    %203 = vector.extract_strided_slice %183 {offsets = [0, 256], sizes = [8, 128], strides = [1, 1]} : vector<8x384xf32> to vector<8x128xf32>
    %204 = vector.extract_strided_slice %186 {offsets = [0, 256], sizes = [8, 128], strides = [1, 1]} : vector<8x384xf32> to vector<8x128xf32>
    %205 = vector.broadcast %7 : vector<1x128xf32> to vector<8x128xf32>
    %206 = arith.addf %204, %205 : vector<8x128xf32>
    %207 = arith.mulf %194, %206 : vector<8x128xf32>
    %208 = arith.addf %203, %207 : vector<8x128xf32>
    %209 = math.tanh %208 : vector<8x128xf32>
    %cst_47 = arith.constant 1.000000e+00 : f32
    %210 = vector.broadcast %cst_47 : f32 to vector<8x128xf32>
    %211 = arith.subf %210, %202 : vector<8x128xf32>
    %212 = arith.mulf %211, %209 : vector<8x128xf32>
    %213 = arith.mulf %202, %174 : vector<8x128xf32>
    %214 = arith.addf %212, %213 : vector<8x128xf32>
    %cst_48 = arith.constant dense<0.000000e+00> : vector<8x384xf32>
    %215 = tpu.matmul %214, %5, %cst_48 {dimension_numbers = #tpu.dot_dimension_numbers<[1], [0], [0], [1], [0, 0, 1, 1], [], []>} : vector<8x128xf32>, vector<128x384xf32>, vector<8x384xf32> -> vector<8x384xf32>
    %216 = vector.broadcast %6 : vector<1x384xf32> to vector<8x384xf32>
    %217 = arith.addf %215, %216 : vector<8x384xf32>
    %218 = vector.extract_strided_slice %185 {offsets = [0, 384], sizes = [8, 384], strides = [1, 1]} : vector<8x768xf32> to vector<8x384xf32>
    %219 = vector.extract_strided_slice %217 {offsets = [0, 0], sizes = [8, 128], strides = [1, 1]} : vector<8x384xf32> to vector<8x128xf32>
    %220 = vector.extract_strided_slice %218 {offsets = [0, 0], sizes = [8, 128], strides = [1, 1]} : vector<8x384xf32> to vector<8x128xf32>
    %221 = arith.addf %219, %220 : vector<8x128xf32>
    %222 = arith.negf %221 : vector<8x128xf32>
    %223 = math.exp %222 : vector<8x128xf32>
    %cst_49 = arith.constant 1.000000e+00 : f32
    %224 = vector.broadcast %cst_49 : f32 to vector<8x128xf32>
    %225 = arith.addf %224, %223 : vector<8x128xf32>
    %226 = arith.divf %224, %225 : vector<8x128xf32>
    %227 = vector.extract_strided_slice %217 {offsets = [0, 128], sizes = [8, 128], strides = [1, 1]} : vector<8x384xf32> to vector<8x128xf32>
    %228 = vector.extract_strided_slice %218 {offsets = [0, 128], sizes = [8, 128], strides = [1, 1]} : vector<8x384xf32> to vector<8x128xf32>
    %229 = arith.addf %227, %228 : vector<8x128xf32>
    %230 = arith.negf %229 : vector<8x128xf32>
    %231 = math.exp %230 : vector<8x128xf32>
    %cst_50 = arith.constant 1.000000e+00 : f32
    %232 = vector.broadcast %cst_50 : f32 to vector<8x128xf32>
    %233 = arith.addf %232, %231 : vector<8x128xf32>
    %234 = arith.divf %232, %233 : vector<8x128xf32>
    %235 = vector.extract_strided_slice %217 {offsets = [0, 256], sizes = [8, 128], strides = [1, 1]} : vector<8x384xf32> to vector<8x128xf32>
    %236 = vector.extract_strided_slice %218 {offsets = [0, 256], sizes = [8, 128], strides = [1, 1]} : vector<8x384xf32> to vector<8x128xf32>
    %237 = vector.broadcast %8 : vector<1x128xf32> to vector<8x128xf32>
    %238 = arith.addf %236, %237 : vector<8x128xf32>
    %239 = arith.mulf %226, %238 : vector<8x128xf32>
    %240 = arith.addf %235, %239 : vector<8x128xf32>
    %241 = math.tanh %240 : vector<8x128xf32>
    %cst_51 = arith.constant 1.000000e+00 : f32
    %242 = vector.broadcast %cst_51 : f32 to vector<8x128xf32>
    %243 = arith.subf %242, %234 : vector<8x128xf32>
    %244 = arith.mulf %243, %241 : vector<8x128xf32>
    %245 = arith.mulf %234, %177 : vector<8x128xf32>
    %246 = arith.addf %244, %245 : vector<8x128xf32>
    %cst_52 = arith.constant 0.000000e+00 : f32
    %247 = vector.shape_cast %180 : vector<8x1xi1> to vector<8x1xi1>
    %248 = vector.broadcast %247 : vector<8x1xi1> to vector<8x128xi1>
    %249 = vector.broadcast %cst_52 : f32 to vector<8x128xf32>
    %250 = arith.select %248, %246, %249 : vector<8x128xi1>, vector<8x128xf32>
    %251 = arith.index_cast %c2_i32 : i32 to index
    %c0_53 = arith.constant 0 : index
    %c0_54 = arith.constant 0 : index
    %252 = vector.load %arg9[%251, %c0_53, %c0_54] : memref<8x8x128xf32, #tpu.memory_space<vmem>>, vector<1x8x128xf32>
    %253 = vector.shape_cast %252 : vector<1x8x128xf32> to vector<8x128xf32>
    %254 = vector.shape_cast %250 : vector<8x128xf32> to vector<1x8x128xf32>
    tpu.vector_store %arg9[%251, %c0_53, %c0_54], %254 {strides = array<i32>} : memref<8x8x128xf32, #tpu.memory_space<vmem>>, vector<1x8x128xf32>,
    %255 = vector.shape_cast %180 : vector<8x1xi1> to vector<8x1xi1>
    %256 = vector.broadcast %255 : vector<8x1xi1> to vector<8x128xi1>
    %257 = arith.select %256, %214, %174 : vector<8x128xi1>, vector<8x128xf32>
    %258 = vector.shape_cast %180 : vector<8x1xi1> to vector<8x1xi1>
    %259 = vector.broadcast %258 : vector<8x1xi1> to vector<8x128xi1>
    %260 = arith.select %259, %246, %177 : vector<8x128xi1>, vector<8x128xf32>
    %c3_i32 = arith.constant 3 : i32
    %261 = arith.addi %9, %c3_i32 : i32
    %262 = vector.broadcast %261 : i32 to vector<8x1xi32>
    %263 = arith.cmpi slt, %262, %3 : vector<8x1xi32>
    %264 = arith.index_cast %c3_i32 : i32 to index
    %c0_55 = arith.constant 0 : index
    %c0_56 = arith.constant 0 : index
    %265 = vector.load %arg3[%264, %c0_55, %c0_56] : memref<8x8x384xf32, #tpu.memory_space<vmem>>, vector<1x8x384xf32>
    %266 = vector.shape_cast %265 : vector<1x8x384xf32> to vector<8x384xf32>
    %267 = tpu.concatenate %257, %260 in 1 : vector<8x128xf32>, vector<8x128xf32> -> vector<8x256xf32>
    %cst_57 = arith.constant dense<0.000000e+00> : vector<8x768xf32>
    %268 = tpu.matmul %267, %4, %cst_57 {dimension_numbers = #tpu.dot_dimension_numbers<[1], [0], [0], [1], [0, 0, 1, 1], [], []>} : vector<8x256xf32>, vector<256x768xf32>, vector<8x768xf32> -> vector<8x768xf32>
    %269 = vector.extract_strided_slice %268 {offsets = [0, 0], sizes = [8, 384], strides = [1, 1]} : vector<8x768xf32> to vector<8x384xf32>
    %270 = vector.extract_strided_slice %266 {offsets = [0, 0], sizes = [8, 128], strides = [1, 1]} : vector<8x384xf32> to vector<8x128xf32>
    %271 = vector.extract_strided_slice %269 {offsets = [0, 0], sizes = [8, 128], strides = [1, 1]} : vector<8x384xf32> to vector<8x128xf32>
    %272 = arith.addf %270, %271 : vector<8x128xf32>
    %273 = arith.negf %272 : vector<8x128xf32>
    %274 = math.exp %273 : vector<8x128xf32>
    %cst_58 = arith.constant 1.000000e+00 : f32
    %275 = vector.broadcast %cst_58 : f32 to vector<8x128xf32>
    %276 = arith.addf %275, %274 : vector<8x128xf32>
    %277 = arith.divf %275, %276 : vector<8x128xf32>
    %278 = vector.extract_strided_slice %266 {offsets = [0, 128], sizes = [8, 128], strides = [1, 1]} : vector<8x384xf32> to vector<8x128xf32>
    %279 = vector.extract_strided_slice %269 {offsets = [0, 128], sizes = [8, 128], strides = [1, 1]} : vector<8x384xf32> to vector<8x128xf32>
    %280 = arith.addf %278, %279 : vector<8x128xf32>
    %281 = arith.negf %280 : vector<8x128xf32>
    %282 = math.exp %281 : vector<8x128xf32>
    %cst_59 = arith.constant 1.000000e+00 : f32
    %283 = vector.broadcast %cst_59 : f32 to vector<8x128xf32>
    %284 = arith.addf %283, %282 : vector<8x128xf32>
    %285 = arith.divf %283, %284 : vector<8x128xf32>
    %286 = vector.extract_strided_slice %266 {offsets = [0, 256], sizes = [8, 128], strides = [1, 1]} : vector<8x384xf32> to vector<8x128xf32>
    %287 = vector.extract_strided_slice %269 {offsets = [0, 256], sizes = [8, 128], strides = [1, 1]} : vector<8x384xf32> to vector<8x128xf32>
    %288 = vector.broadcast %7 : vector<1x128xf32> to vector<8x128xf32>
    %289 = arith.addf %287, %288 : vector<8x128xf32>
    %290 = arith.mulf %277, %289 : vector<8x128xf32>
    %291 = arith.addf %286, %290 : vector<8x128xf32>
    %292 = math.tanh %291 : vector<8x128xf32>
    %cst_60 = arith.constant 1.000000e+00 : f32
    %293 = vector.broadcast %cst_60 : f32 to vector<8x128xf32>
    %294 = arith.subf %293, %285 : vector<8x128xf32>
    %295 = arith.mulf %294, %292 : vector<8x128xf32>
    %296 = arith.mulf %285, %257 : vector<8x128xf32>
    %297 = arith.addf %295, %296 : vector<8x128xf32>
    %cst_61 = arith.constant dense<0.000000e+00> : vector<8x384xf32>
    %298 = tpu.matmul %297, %5, %cst_61 {dimension_numbers = #tpu.dot_dimension_numbers<[1], [0], [0], [1], [0, 0, 1, 1], [], []>} : vector<8x128xf32>, vector<128x384xf32>, vector<8x384xf32> -> vector<8x384xf32>
    %299 = vector.broadcast %6 : vector<1x384xf32> to vector<8x384xf32>
    %300 = arith.addf %298, %299 : vector<8x384xf32>
    %301 = vector.extract_strided_slice %268 {offsets = [0, 384], sizes = [8, 384], strides = [1, 1]} : vector<8x768xf32> to vector<8x384xf32>
    %302 = vector.extract_strided_slice %300 {offsets = [0, 0], sizes = [8, 128], strides = [1, 1]} : vector<8x384xf32> to vector<8x128xf32>
    %303 = vector.extract_strided_slice %301 {offsets = [0, 0], sizes = [8, 128], strides = [1, 1]} : vector<8x384xf32> to vector<8x128xf32>
    %304 = arith.addf %302, %303 : vector<8x128xf32>
    %305 = arith.negf %304 : vector<8x128xf32>
    %306 = math.exp %305 : vector<8x128xf32>
    %cst_62 = arith.constant 1.000000e+00 : f32
    %307 = vector.broadcast %cst_62 : f32 to vector<8x128xf32>
    %308 = arith.addf %307, %306 : vector<8x128xf32>
    %309 = arith.divf %307, %308 : vector<8x128xf32>
    %310 = vector.extract_strided_slice %300 {offsets = [0, 128], sizes = [8, 128], strides = [1, 1]} : vector<8x384xf32> to vector<8x128xf32>
    %311 = vector.extract_strided_slice %301 {offsets = [0, 128], sizes = [8, 128], strides = [1, 1]} : vector<8x384xf32> to vector<8x128xf32>
    %312 = arith.addf %310, %311 : vector<8x128xf32>
    %313 = arith.negf %312 : vector<8x128xf32>
    %314 = math.exp %313 : vector<8x128xf32>
    %cst_63 = arith.constant 1.000000e+00 : f32
    %315 = vector.broadcast %cst_63 : f32 to vector<8x128xf32>
    %316 = arith.addf %315, %314 : vector<8x128xf32>
    %317 = arith.divf %315, %316 : vector<8x128xf32>
    %318 = vector.extract_strided_slice %300 {offsets = [0, 256], sizes = [8, 128], strides = [1, 1]} : vector<8x384xf32> to vector<8x128xf32>
    %319 = vector.extract_strided_slice %301 {offsets = [0, 256], sizes = [8, 128], strides = [1, 1]} : vector<8x384xf32> to vector<8x128xf32>
    %320 = vector.broadcast %8 : vector<1x128xf32> to vector<8x128xf32>
    %321 = arith.addf %319, %320 : vector<8x128xf32>
    %322 = arith.mulf %309, %321 : vector<8x128xf32>
    %323 = arith.addf %318, %322 : vector<8x128xf32>
    %324 = math.tanh %323 : vector<8x128xf32>
    %cst_64 = arith.constant 1.000000e+00 : f32
    %325 = vector.broadcast %cst_64 : f32 to vector<8x128xf32>
    %326 = arith.subf %325, %317 : vector<8x128xf32>
    %327 = arith.mulf %326, %324 : vector<8x128xf32>
    %328 = arith.mulf %317, %260 : vector<8x128xf32>
    %329 = arith.addf %327, %328 : vector<8x128xf32>
    %cst_65 = arith.constant 0.000000e+00 : f32
    %330 = vector.shape_cast %263 : vector<8x1xi1> to vector<8x1xi1>
    %331 = vector.broadcast %330 : vector<8x1xi1> to vector<8x128xi1>
    %332 = vector.broadcast %cst_65 : f32 to vector<8x128xf32>
    %333 = arith.select %331, %329, %332 : vector<8x128xi1>, vector<8x128xf32>
    %334 = arith.index_cast %c3_i32 : i32 to index
    %c0_66 = arith.constant 0 : index
    %c0_67 = arith.constant 0 : index
    %335 = vector.load %arg9[%334, %c0_66, %c0_67] : memref<8x8x128xf32, #tpu.memory_space<vmem>>, vector<1x8x128xf32>
    %336 = vector.shape_cast %335 : vector<1x8x128xf32> to vector<8x128xf32>
    %337 = vector.shape_cast %333 : vector<8x128xf32> to vector<1x8x128xf32>
    tpu.vector_store %arg9[%334, %c0_66, %c0_67], %337 {strides = array<i32>} : memref<8x8x128xf32, #tpu.memory_space<vmem>>, vector<1x8x128xf32>,
    %338 = vector.shape_cast %263 : vector<8x1xi1> to vector<8x1xi1>
    %339 = vector.broadcast %338 : vector<8x1xi1> to vector<8x128xi1>
    %340 = arith.select %339, %297, %257 : vector<8x128xi1>, vector<8x128xf32>
    %341 = vector.shape_cast %263 : vector<8x1xi1> to vector<8x1xi1>
    %342 = vector.broadcast %341 : vector<8x1xi1> to vector<8x128xi1>
    %343 = arith.select %342, %329, %260 : vector<8x128xi1>, vector<8x128xf32>
    %c4_i32 = arith.constant 4 : i32
    %344 = arith.addi %9, %c4_i32 : i32
    %345 = vector.broadcast %344 : i32 to vector<8x1xi32>
    %346 = arith.cmpi slt, %345, %3 : vector<8x1xi32>
    %347 = arith.index_cast %c4_i32 : i32 to index
    %c0_68 = arith.constant 0 : index
    %c0_69 = arith.constant 0 : index
    %348 = vector.load %arg3[%347, %c0_68, %c0_69] : memref<8x8x384xf32, #tpu.memory_space<vmem>>, vector<1x8x384xf32>
    %349 = vector.shape_cast %348 : vector<1x8x384xf32> to vector<8x384xf32>
    %350 = tpu.concatenate %340, %343 in 1 : vector<8x128xf32>, vector<8x128xf32> -> vector<8x256xf32>
    %cst_70 = arith.constant dense<0.000000e+00> : vector<8x768xf32>
    %351 = tpu.matmul %350, %4, %cst_70 {dimension_numbers = #tpu.dot_dimension_numbers<[1], [0], [0], [1], [0, 0, 1, 1], [], []>} : vector<8x256xf32>, vector<256x768xf32>, vector<8x768xf32> -> vector<8x768xf32>
    %352 = vector.extract_strided_slice %351 {offsets = [0, 0], sizes = [8, 384], strides = [1, 1]} : vector<8x768xf32> to vector<8x384xf32>
    %353 = vector.extract_strided_slice %349 {offsets = [0, 0], sizes = [8, 128], strides = [1, 1]} : vector<8x384xf32> to vector<8x128xf32>
    %354 = vector.extract_strided_slice %352 {offsets = [0, 0], sizes = [8, 128], strides = [1, 1]} : vector<8x384xf32> to vector<8x128xf32>
    %355 = arith.addf %353, %354 : vector<8x128xf32>
    %356 = arith.negf %355 : vector<8x128xf32>
    %357 = math.exp %356 : vector<8x128xf32>
    %cst_71 = arith.constant 1.000000e+00 : f32
    %358 = vector.broadcast %cst_71 : f32 to vector<8x128xf32>
    %359 = arith.addf %358, %357 : vector<8x128xf32>
    %360 = arith.divf %358, %359 : vector<8x128xf32>
    %361 = vector.extract_strided_slice %349 {offsets = [0, 128], sizes = [8, 128], strides = [1, 1]} : vector<8x384xf32> to vector<8x128xf32>
    %362 = vector.extract_strided_slice %352 {offsets = [0, 128], sizes = [8, 128], strides = [1, 1]} : vector<8x384xf32> to vector<8x128xf32>
    %363 = arith.addf %361, %362 : vector<8x128xf32>
    %364 = arith.negf %363 : vector<8x128xf32>
    %365 = math.exp %364 : vector<8x128xf32>
    %cst_72 = arith.constant 1.000000e+00 : f32
    %366 = vector.broadcast %cst_72 : f32 to vector<8x128xf32>
    %367 = arith.addf %366, %365 : vector<8x128xf32>
    %368 = arith.divf %366, %367 : vector<8x128xf32>
    %369 = vector.extract_strided_slice %349 {offsets = [0, 256], sizes = [8, 128], strides = [1, 1]} : vector<8x384xf32> to vector<8x128xf32>
    %370 = vector.extract_strided_slice %352 {offsets = [0, 256], sizes = [8, 128], strides = [1, 1]} : vector<8x384xf32> to vector<8x128xf32>
    %371 = vector.broadcast %7 : vector<1x128xf32> to vector<8x128xf32>
    %372 = arith.addf %370, %371 : vector<8x128xf32>
    %373 = arith.mulf %360, %372 : vector<8x128xf32>
    %374 = arith.addf %369, %373 : vector<8x128xf32>
    %375 = math.tanh %374 : vector<8x128xf32>
    %cst_73 = arith.constant 1.000000e+00 : f32
    %376 = vector.broadcast %cst_73 : f32 to vector<8x128xf32>
    %377 = arith.subf %376, %368 : vector<8x128xf32>
    %378 = arith.mulf %377, %375 : vector<8x128xf32>
    %379 = arith.mulf %368, %340 : vector<8x128xf32>
    %380 = arith.addf %378, %379 : vector<8x128xf32>
    %cst_74 = arith.constant dense<0.000000e+00> : vector<8x384xf32>
    %381 = tpu.matmul %380, %5, %cst_74 {dimension_numbers = #tpu.dot_dimension_numbers<[1], [0], [0], [1], [0, 0, 1, 1], [], []>} : vector<8x128xf32>, vector<128x384xf32>, vector<8x384xf32> -> vector<8x384xf32>
    %382 = vector.broadcast %6 : vector<1x384xf32> to vector<8x384xf32>
    %383 = arith.addf %381, %382 : vector<8x384xf32>
    %384 = vector.extract_strided_slice %351 {offsets = [0, 384], sizes = [8, 384], strides = [1, 1]} : vector<8x768xf32> to vector<8x384xf32>
    %385 = vector.extract_strided_slice %383 {offsets = [0, 0], sizes = [8, 128], strides = [1, 1]} : vector<8x384xf32> to vector<8x128xf32>
    %386 = vector.extract_strided_slice %384 {offsets = [0, 0], sizes = [8, 128], strides = [1, 1]} : vector<8x384xf32> to vector<8x128xf32>
    %387 = arith.addf %385, %386 : vector<8x128xf32>
    %388 = arith.negf %387 : vector<8x128xf32>
    %389 = math.exp %388 : vector<8x128xf32>
    %cst_75 = arith.constant 1.000000e+00 : f32
    %390 = vector.broadcast %cst_75 : f32 to vector<8x128xf32>
    %391 = arith.addf %390, %389 : vector<8x128xf32>
    %392 = arith.divf %390, %391 : vector<8x128xf32>
    %393 = vector.extract_strided_slice %383 {offsets = [0, 128], sizes = [8, 128], strides = [1, 1]} : vector<8x384xf32> to vector<8x128xf32>
    %394 = vector.extract_strided_slice %384 {offsets = [0, 128], sizes = [8, 128], strides = [1, 1]} : vector<8x384xf32> to vector<8x128xf32>
    %395 = arith.addf %393, %394 : vector<8x128xf32>
    %396 = arith.negf %395 : vector<8x128xf32>
    %397 = math.exp %396 : vector<8x128xf32>
    %cst_76 = arith.constant 1.000000e+00 : f32
    %398 = vector.broadcast %cst_76 : f32 to vector<8x128xf32>
    %399 = arith.addf %398, %397 : vector<8x128xf32>
    %400 = arith.divf %398, %399 : vector<8x128xf32>
    %401 = vector.extract_strided_slice %383 {offsets = [0, 256], sizes = [8, 128], strides = [1, 1]} : vector<8x384xf32> to vector<8x128xf32>
    %402 = vector.extract_strided_slice %384 {offsets = [0, 256], sizes = [8, 128], strides = [1, 1]} : vector<8x384xf32> to vector<8x128xf32>
    %403 = vector.broadcast %8 : vector<1x128xf32> to vector<8x128xf32>
    %404 = arith.addf %402, %403 : vector<8x128xf32>
    %405 = arith.mulf %392, %404 : vector<8x128xf32>
    %406 = arith.addf %401, %405 : vector<8x128xf32>
    %407 = math.tanh %406 : vector<8x128xf32>
    %cst_77 = arith.constant 1.000000e+00 : f32
    %408 = vector.broadcast %cst_77 : f32 to vector<8x128xf32>
    %409 = arith.subf %408, %400 : vector<8x128xf32>
    %410 = arith.mulf %409, %407 : vector<8x128xf32>
    %411 = arith.mulf %400, %343 : vector<8x128xf32>
    %412 = arith.addf %410, %411 : vector<8x128xf32>
    %cst_78 = arith.constant 0.000000e+00 : f32
    %413 = vector.shape_cast %346 : vector<8x1xi1> to vector<8x1xi1>
    %414 = vector.broadcast %413 : vector<8x1xi1> to vector<8x128xi1>
    %415 = vector.broadcast %cst_78 : f32 to vector<8x128xf32>
    %416 = arith.select %414, %412, %415 : vector<8x128xi1>, vector<8x128xf32>
    %417 = arith.index_cast %c4_i32 : i32 to index
    %c0_79 = arith.constant 0 : index
    %c0_80 = arith.constant 0 : index
    %418 = vector.load %arg9[%417, %c0_79, %c0_80] : memref<8x8x128xf32, #tpu.memory_space<vmem>>, vector<1x8x128xf32>
    %419 = vector.shape_cast %418 : vector<1x8x128xf32> to vector<8x128xf32>
    %420 = vector.shape_cast %416 : vector<8x128xf32> to vector<1x8x128xf32>
    tpu.vector_store %arg9[%417, %c0_79, %c0_80], %420 {strides = array<i32>} : memref<8x8x128xf32, #tpu.memory_space<vmem>>, vector<1x8x128xf32>,
    %421 = vector.shape_cast %346 : vector<8x1xi1> to vector<8x1xi1>
    %422 = vector.broadcast %421 : vector<8x1xi1> to vector<8x128xi1>
    %423 = arith.select %422, %380, %340 : vector<8x128xi1>, vector<8x128xf32>
    %424 = vector.shape_cast %346 : vector<8x1xi1> to vector<8x1xi1>
    %425 = vector.broadcast %424 : vector<8x1xi1> to vector<8x128xi1>
    %426 = arith.select %425, %412, %343 : vector<8x128xi1>, vector<8x128xf32>
    %c5_i32 = arith.constant 5 : i32
    %427 = arith.addi %9, %c5_i32 : i32
    %428 = vector.broadcast %427 : i32 to vector<8x1xi32>
    %429 = arith.cmpi slt, %428, %3 : vector<8x1xi32>
    %430 = arith.index_cast %c5_i32 : i32 to index
    %c0_81 = arith.constant 0 : index
    %c0_82 = arith.constant 0 : index
    %431 = vector.load %arg3[%430, %c0_81, %c0_82] : memref<8x8x384xf32, #tpu.memory_space<vmem>>, vector<1x8x384xf32>
    %432 = vector.shape_cast %431 : vector<1x8x384xf32> to vector<8x384xf32>
    %433 = tpu.concatenate %423, %426 in 1 : vector<8x128xf32>, vector<8x128xf32> -> vector<8x256xf32>
    %cst_83 = arith.constant dense<0.000000e+00> : vector<8x768xf32>
    %434 = tpu.matmul %433, %4, %cst_83 {dimension_numbers = #tpu.dot_dimension_numbers<[1], [0], [0], [1], [0, 0, 1, 1], [], []>} : vector<8x256xf32>, vector<256x768xf32>, vector<8x768xf32> -> vector<8x768xf32>
    %435 = vector.extract_strided_slice %434 {offsets = [0, 0], sizes = [8, 384], strides = [1, 1]} : vector<8x768xf32> to vector<8x384xf32>
    %436 = vector.extract_strided_slice %432 {offsets = [0, 0], sizes = [8, 128], strides = [1, 1]} : vector<8x384xf32> to vector<8x128xf32>
    %437 = vector.extract_strided_slice %435 {offsets = [0, 0], sizes = [8, 128], strides = [1, 1]} : vector<8x384xf32> to vector<8x128xf32>
    %438 = arith.addf %436, %437 : vector<8x128xf32>
    %439 = arith.negf %438 : vector<8x128xf32>
    %440 = math.exp %439 : vector<8x128xf32>
    %cst_84 = arith.constant 1.000000e+00 : f32
    %441 = vector.broadcast %cst_84 : f32 to vector<8x128xf32>
    %442 = arith.addf %441, %440 : vector<8x128xf32>
    %443 = arith.divf %441, %442 : vector<8x128xf32>
    %444 = vector.extract_strided_slice %432 {offsets = [0, 128], sizes = [8, 128], strides = [1, 1]} : vector<8x384xf32> to vector<8x128xf32>
    %445 = vector.extract_strided_slice %435 {offsets = [0, 128], sizes = [8, 128], strides = [1, 1]} : vector<8x384xf32> to vector<8x128xf32>
    %446 = arith.addf %444, %445 : vector<8x128xf32>
    %447 = arith.negf %446 : vector<8x128xf32>
    %448 = math.exp %447 : vector<8x128xf32>
    %cst_85 = arith.constant 1.000000e+00 : f32
    %449 = vector.broadcast %cst_85 : f32 to vector<8x128xf32>
    %450 = arith.addf %449, %448 : vector<8x128xf32>
    %451 = arith.divf %449, %450 : vector<8x128xf32>
    %452 = vector.extract_strided_slice %432 {offsets = [0, 256], sizes = [8, 128], strides = [1, 1]} : vector<8x384xf32> to vector<8x128xf32>
    %453 = vector.extract_strided_slice %435 {offsets = [0, 256], sizes = [8, 128], strides = [1, 1]} : vector<8x384xf32> to vector<8x128xf32>
    %454 = vector.broadcast %7 : vector<1x128xf32> to vector<8x128xf32>
    %455 = arith.addf %453, %454 : vector<8x128xf32>
    %456 = arith.mulf %443, %455 : vector<8x128xf32>
    %457 = arith.addf %452, %456 : vector<8x128xf32>
    %458 = math.tanh %457 : vector<8x128xf32>
    %cst_86 = arith.constant 1.000000e+00 : f32
    %459 = vector.broadcast %cst_86 : f32 to vector<8x128xf32>
    %460 = arith.subf %459, %451 : vector<8x128xf32>
    %461 = arith.mulf %460, %458 : vector<8x128xf32>
    %462 = arith.mulf %451, %423 : vector<8x128xf32>
    %463 = arith.addf %461, %462 : vector<8x128xf32>
    %cst_87 = arith.constant dense<0.000000e+00> : vector<8x384xf32>
    %464 = tpu.matmul %463, %5, %cst_87 {dimension_numbers = #tpu.dot_dimension_numbers<[1], [0], [0], [1], [0, 0, 1, 1], [], []>} : vector<8x128xf32>, vector<128x384xf32>, vector<8x384xf32> -> vector<8x384xf32>
    %465 = vector.broadcast %6 : vector<1x384xf32> to vector<8x384xf32>
    %466 = arith.addf %464, %465 : vector<8x384xf32>
    %467 = vector.extract_strided_slice %434 {offsets = [0, 384], sizes = [8, 384], strides = [1, 1]} : vector<8x768xf32> to vector<8x384xf32>
    %468 = vector.extract_strided_slice %466 {offsets = [0, 0], sizes = [8, 128], strides = [1, 1]} : vector<8x384xf32> to vector<8x128xf32>
    %469 = vector.extract_strided_slice %467 {offsets = [0, 0], sizes = [8, 128], strides = [1, 1]} : vector<8x384xf32> to vector<8x128xf32>
    %470 = arith.addf %468, %469 : vector<8x128xf32>
    %471 = arith.negf %470 : vector<8x128xf32>
    %472 = math.exp %471 : vector<8x128xf32>
    %cst_88 = arith.constant 1.000000e+00 : f32
    %473 = vector.broadcast %cst_88 : f32 to vector<8x128xf32>
    %474 = arith.addf %473, %472 : vector<8x128xf32>
    %475 = arith.divf %473, %474 : vector<8x128xf32>
    %476 = vector.extract_strided_slice %466 {offsets = [0, 128], sizes = [8, 128], strides = [1, 1]} : vector<8x384xf32> to vector<8x128xf32>
    %477 = vector.extract_strided_slice %467 {offsets = [0, 128], sizes = [8, 128], strides = [1, 1]} : vector<8x384xf32> to vector<8x128xf32>
    %478 = arith.addf %476, %477 : vector<8x128xf32>
    %479 = arith.negf %478 : vector<8x128xf32>
    %480 = math.exp %479 : vector<8x128xf32>
    %cst_89 = arith.constant 1.000000e+00 : f32
    %481 = vector.broadcast %cst_89 : f32 to vector<8x128xf32>
    %482 = arith.addf %481, %480 : vector<8x128xf32>
    %483 = arith.divf %481, %482 : vector<8x128xf32>
    %484 = vector.extract_strided_slice %466 {offsets = [0, 256], sizes = [8, 128], strides = [1, 1]} : vector<8x384xf32> to vector<8x128xf32>
    %485 = vector.extract_strided_slice %467 {offsets = [0, 256], sizes = [8, 128], strides = [1, 1]} : vector<8x384xf32> to vector<8x128xf32>
    %486 = vector.broadcast %8 : vector<1x128xf32> to vector<8x128xf32>
    %487 = arith.addf %485, %486 : vector<8x128xf32>
    %488 = arith.mulf %475, %487 : vector<8x128xf32>
    %489 = arith.addf %484, %488 : vector<8x128xf32>
    %490 = math.tanh %489 : vector<8x128xf32>
    %cst_90 = arith.constant 1.000000e+00 : f32
    %491 = vector.broadcast %cst_90 : f32 to vector<8x128xf32>
    %492 = arith.subf %491, %483 : vector<8x128xf32>
    %493 = arith.mulf %492, %490 : vector<8x128xf32>
    %494 = arith.mulf %483, %426 : vector<8x128xf32>
    %495 = arith.addf %493, %494 : vector<8x128xf32>
    %cst_91 = arith.constant 0.000000e+00 : f32
    %496 = vector.shape_cast %429 : vector<8x1xi1> to vector<8x1xi1>
    %497 = vector.broadcast %496 : vector<8x1xi1> to vector<8x128xi1>
    %498 = vector.broadcast %cst_91 : f32 to vector<8x128xf32>
    %499 = arith.select %497, %495, %498 : vector<8x128xi1>, vector<8x128xf32>
    %500 = arith.index_cast %c5_i32 : i32 to index
    %c0_92 = arith.constant 0 : index
    %c0_93 = arith.constant 0 : index
    %501 = vector.load %arg9[%500, %c0_92, %c0_93] : memref<8x8x128xf32, #tpu.memory_space<vmem>>, vector<1x8x128xf32>
    %502 = vector.shape_cast %501 : vector<1x8x128xf32> to vector<8x128xf32>
    %503 = vector.shape_cast %499 : vector<8x128xf32> to vector<1x8x128xf32>
    tpu.vector_store %arg9[%500, %c0_92, %c0_93], %503 {strides = array<i32>} : memref<8x8x128xf32, #tpu.memory_space<vmem>>, vector<1x8x128xf32>,
    %504 = vector.shape_cast %429 : vector<8x1xi1> to vector<8x1xi1>
    %505 = vector.broadcast %504 : vector<8x1xi1> to vector<8x128xi1>
    %506 = arith.select %505, %463, %423 : vector<8x128xi1>, vector<8x128xf32>
    %507 = vector.shape_cast %429 : vector<8x1xi1> to vector<8x1xi1>
    %508 = vector.broadcast %507 : vector<8x1xi1> to vector<8x128xi1>
    %509 = arith.select %508, %495, %426 : vector<8x128xi1>, vector<8x128xf32>
    %c6_i32 = arith.constant 6 : i32
    %510 = arith.addi %9, %c6_i32 : i32
    %511 = vector.broadcast %510 : i32 to vector<8x1xi32>
    %512 = arith.cmpi slt, %511, %3 : vector<8x1xi32>
    %513 = arith.index_cast %c6_i32 : i32 to index
    %c0_94 = arith.constant 0 : index
    %c0_95 = arith.constant 0 : index
    %514 = vector.load %arg3[%513, %c0_94, %c0_95] : memref<8x8x384xf32, #tpu.memory_space<vmem>>, vector<1x8x384xf32>
    %515 = vector.shape_cast %514 : vector<1x8x384xf32> to vector<8x384xf32>
    %516 = tpu.concatenate %506, %509 in 1 : vector<8x128xf32>, vector<8x128xf32> -> vector<8x256xf32>
    %cst_96 = arith.constant dense<0.000000e+00> : vector<8x768xf32>
    %517 = tpu.matmul %516, %4, %cst_96 {dimension_numbers = #tpu.dot_dimension_numbers<[1], [0], [0], [1], [0, 0, 1, 1], [], []>} : vector<8x256xf32>, vector<256x768xf32>, vector<8x768xf32> -> vector<8x768xf32>
    %518 = vector.extract_strided_slice %517 {offsets = [0, 0], sizes = [8, 384], strides = [1, 1]} : vector<8x768xf32> to vector<8x384xf32>
    %519 = vector.extract_strided_slice %515 {offsets = [0, 0], sizes = [8, 128], strides = [1, 1]} : vector<8x384xf32> to vector<8x128xf32>
    %520 = vector.extract_strided_slice %518 {offsets = [0, 0], sizes = [8, 128], strides = [1, 1]} : vector<8x384xf32> to vector<8x128xf32>
    %521 = arith.addf %519, %520 : vector<8x128xf32>
    %522 = arith.negf %521 : vector<8x128xf32>
    %523 = math.exp %522 : vector<8x128xf32>
    %cst_97 = arith.constant 1.000000e+00 : f32
    %524 = vector.broadcast %cst_97 : f32 to vector<8x128xf32>
    %525 = arith.addf %524, %523 : vector<8x128xf32>
    %526 = arith.divf %524, %525 : vector<8x128xf32>
    %527 = vector.extract_strided_slice %515 {offsets = [0, 128], sizes = [8, 128], strides = [1, 1]} : vector<8x384xf32> to vector<8x128xf32>
    %528 = vector.extract_strided_slice %518 {offsets = [0, 128], sizes = [8, 128], strides = [1, 1]} : vector<8x384xf32> to vector<8x128xf32>
    %529 = arith.addf %527, %528 : vector<8x128xf32>
    %530 = arith.negf %529 : vector<8x128xf32>
    %531 = math.exp %530 : vector<8x128xf32>
    %cst_98 = arith.constant 1.000000e+00 : f32
    %532 = vector.broadcast %cst_98 : f32 to vector<8x128xf32>
    %533 = arith.addf %532, %531 : vector<8x128xf32>
    %534 = arith.divf %532, %533 : vector<8x128xf32>
    %535 = vector.extract_strided_slice %515 {offsets = [0, 256], sizes = [8, 128], strides = [1, 1]} : vector<8x384xf32> to vector<8x128xf32>
    %536 = vector.extract_strided_slice %518 {offsets = [0, 256], sizes = [8, 128], strides = [1, 1]} : vector<8x384xf32> to vector<8x128xf32>
    %537 = vector.broadcast %7 : vector<1x128xf32> to vector<8x128xf32>
    %538 = arith.addf %536, %537 : vector<8x128xf32>
    %539 = arith.mulf %526, %538 : vector<8x128xf32>
    %540 = arith.addf %535, %539 : vector<8x128xf32>
    %541 = math.tanh %540 : vector<8x128xf32>
    %cst_99 = arith.constant 1.000000e+00 : f32
    %542 = vector.broadcast %cst_99 : f32 to vector<8x128xf32>
    %543 = arith.subf %542, %534 : vector<8x128xf32>
    %544 = arith.mulf %543, %541 : vector<8x128xf32>
    %545 = arith.mulf %534, %506 : vector<8x128xf32>
    %546 = arith.addf %544, %545 : vector<8x128xf32>
    %cst_100 = arith.constant dense<0.000000e+00> : vector<8x384xf32>
    %547 = tpu.matmul %546, %5, %cst_100 {dimension_numbers = #tpu.dot_dimension_numbers<[1], [0], [0], [1], [0, 0, 1, 1], [], []>} : vector<8x128xf32>, vector<128x384xf32>, vector<8x384xf32> -> vector<8x384xf32>
    %548 = vector.broadcast %6 : vector<1x384xf32> to vector<8x384xf32>
    %549 = arith.addf %547, %548 : vector<8x384xf32>
    %550 = vector.extract_strided_slice %517 {offsets = [0, 384], sizes = [8, 384], strides = [1, 1]} : vector<8x768xf32> to vector<8x384xf32>
    %551 = vector.extract_strided_slice %549 {offsets = [0, 0], sizes = [8, 128], strides = [1, 1]} : vector<8x384xf32> to vector<8x128xf32>
    %552 = vector.extract_strided_slice %550 {offsets = [0, 0], sizes = [8, 128], strides = [1, 1]} : vector<8x384xf32> to vector<8x128xf32>
    %553 = arith.addf %551, %552 : vector<8x128xf32>
    %554 = arith.negf %553 : vector<8x128xf32>
    %555 = math.exp %554 : vector<8x128xf32>
    %cst_101 = arith.constant 1.000000e+00 : f32
    %556 = vector.broadcast %cst_101 : f32 to vector<8x128xf32>
    %557 = arith.addf %556, %555 : vector<8x128xf32>
    %558 = arith.divf %556, %557 : vector<8x128xf32>
    %559 = vector.extract_strided_slice %549 {offsets = [0, 128], sizes = [8, 128], strides = [1, 1]} : vector<8x384xf32> to vector<8x128xf32>
    %560 = vector.extract_strided_slice %550 {offsets = [0, 128], sizes = [8, 128], strides = [1, 1]} : vector<8x384xf32> to vector<8x128xf32>
    %561 = arith.addf %559, %560 : vector<8x128xf32>
    %562 = arith.negf %561 : vector<8x128xf32>
    %563 = math.exp %562 : vector<8x128xf32>
    %cst_102 = arith.constant 1.000000e+00 : f32
    %564 = vector.broadcast %cst_102 : f32 to vector<8x128xf32>
    %565 = arith.addf %564, %563 : vector<8x128xf32>
    %566 = arith.divf %564, %565 : vector<8x128xf32>
    %567 = vector.extract_strided_slice %549 {offsets = [0, 256], sizes = [8, 128], strides = [1, 1]} : vector<8x384xf32> to vector<8x128xf32>
    %568 = vector.extract_strided_slice %550 {offsets = [0, 256], sizes = [8, 128], strides = [1, 1]} : vector<8x384xf32> to vector<8x128xf32>
    %569 = vector.broadcast %8 : vector<1x128xf32> to vector<8x128xf32>
    %570 = arith.addf %568, %569 : vector<8x128xf32>
    %571 = arith.mulf %558, %570 : vector<8x128xf32>
    %572 = arith.addf %567, %571 : vector<8x128xf32>
    %573 = math.tanh %572 : vector<8x128xf32>
    %cst_103 = arith.constant 1.000000e+00 : f32
    %574 = vector.broadcast %cst_103 : f32 to vector<8x128xf32>
    %575 = arith.subf %574, %566 : vector<8x128xf32>
    %576 = arith.mulf %575, %573 : vector<8x128xf32>
    %577 = arith.mulf %566, %509 : vector<8x128xf32>
    %578 = arith.addf %576, %577 : vector<8x128xf32>
    %cst_104 = arith.constant 0.000000e+00 : f32
    %579 = vector.shape_cast %512 : vector<8x1xi1> to vector<8x1xi1>
    %580 = vector.broadcast %579 : vector<8x1xi1> to vector<8x128xi1>
    %581 = vector.broadcast %cst_104 : f32 to vector<8x128xf32>
    %582 = arith.select %580, %578, %581 : vector<8x128xi1>, vector<8x128xf32>
    %583 = arith.index_cast %c6_i32 : i32 to index
    %c0_105 = arith.constant 0 : index
    %c0_106 = arith.constant 0 : index
    %584 = vector.load %arg9[%583, %c0_105, %c0_106] : memref<8x8x128xf32, #tpu.memory_space<vmem>>, vector<1x8x128xf32>
    %585 = vector.shape_cast %584 : vector<1x8x128xf32> to vector<8x128xf32>
    %586 = vector.shape_cast %582 : vector<8x128xf32> to vector<1x8x128xf32>
    tpu.vector_store %arg9[%583, %c0_105, %c0_106], %586 {strides = array<i32>} : memref<8x8x128xf32, #tpu.memory_space<vmem>>, vector<1x8x128xf32>,
    %587 = vector.shape_cast %512 : vector<8x1xi1> to vector<8x1xi1>
    %588 = vector.broadcast %587 : vector<8x1xi1> to vector<8x128xi1>
    %589 = arith.select %588, %546, %506 : vector<8x128xi1>, vector<8x128xf32>
    %590 = vector.shape_cast %512 : vector<8x1xi1> to vector<8x1xi1>
    %591 = vector.broadcast %590 : vector<8x1xi1> to vector<8x128xi1>
    %592 = arith.select %591, %578, %509 : vector<8x128xi1>, vector<8x128xf32>
    %c7_i32 = arith.constant 7 : i32
    %593 = arith.addi %9, %c7_i32 : i32
    %594 = vector.broadcast %593 : i32 to vector<8x1xi32>
    %595 = arith.cmpi slt, %594, %3 : vector<8x1xi32>
    %596 = arith.index_cast %c7_i32 : i32 to index
    %c0_107 = arith.constant 0 : index
    %c0_108 = arith.constant 0 : index
    %597 = vector.load %arg3[%596, %c0_107, %c0_108] : memref<8x8x384xf32, #tpu.memory_space<vmem>>, vector<1x8x384xf32>
    %598 = vector.shape_cast %597 : vector<1x8x384xf32> to vector<8x384xf32>
    %599 = tpu.concatenate %589, %592 in 1 : vector<8x128xf32>, vector<8x128xf32> -> vector<8x256xf32>
    %cst_109 = arith.constant dense<0.000000e+00> : vector<8x768xf32>
    %600 = tpu.matmul %599, %4, %cst_109 {dimension_numbers = #tpu.dot_dimension_numbers<[1], [0], [0], [1], [0, 0, 1, 1], [], []>} : vector<8x256xf32>, vector<256x768xf32>, vector<8x768xf32> -> vector<8x768xf32>
    %601 = vector.extract_strided_slice %600 {offsets = [0, 0], sizes = [8, 384], strides = [1, 1]} : vector<8x768xf32> to vector<8x384xf32>
    %602 = vector.extract_strided_slice %598 {offsets = [0, 0], sizes = [8, 128], strides = [1, 1]} : vector<8x384xf32> to vector<8x128xf32>
    %603 = vector.extract_strided_slice %601 {offsets = [0, 0], sizes = [8, 128], strides = [1, 1]} : vector<8x384xf32> to vector<8x128xf32>
    %604 = arith.addf %602, %603 : vector<8x128xf32>
    %605 = arith.negf %604 : vector<8x128xf32>
    %606 = math.exp %605 : vector<8x128xf32>
    %cst_110 = arith.constant 1.000000e+00 : f32
    %607 = vector.broadcast %cst_110 : f32 to vector<8x128xf32>
    %608 = arith.addf %607, %606 : vector<8x128xf32>
    %609 = arith.divf %607, %608 : vector<8x128xf32>
    %610 = vector.extract_strided_slice %598 {offsets = [0, 128], sizes = [8, 128], strides = [1, 1]} : vector<8x384xf32> to vector<8x128xf32>
    %611 = vector.extract_strided_slice %601 {offsets = [0, 128], sizes = [8, 128], strides = [1, 1]} : vector<8x384xf32> to vector<8x128xf32>
    %612 = arith.addf %610, %611 : vector<8x128xf32>
    %613 = arith.negf %612 : vector<8x128xf32>
    %614 = math.exp %613 : vector<8x128xf32>
    %cst_111 = arith.constant 1.000000e+00 : f32
    %615 = vector.broadcast %cst_111 : f32 to vector<8x128xf32>
    %616 = arith.addf %615, %614 : vector<8x128xf32>
    %617 = arith.divf %615, %616 : vector<8x128xf32>
    %618 = vector.extract_strided_slice %598 {offsets = [0, 256], sizes = [8, 128], strides = [1, 1]} : vector<8x384xf32> to vector<8x128xf32>
    %619 = vector.extract_strided_slice %601 {offsets = [0, 256], sizes = [8, 128], strides = [1, 1]} : vector<8x384xf32> to vector<8x128xf32>
    %620 = vector.broadcast %7 : vector<1x128xf32> to vector<8x128xf32>
    %621 = arith.addf %619, %620 : vector<8x128xf32>
    %622 = arith.mulf %609, %621 : vector<8x128xf32>
    %623 = arith.addf %618, %622 : vector<8x128xf32>
    %624 = math.tanh %623 : vector<8x128xf32>
    %cst_112 = arith.constant 1.000000e+00 : f32
    %625 = vector.broadcast %cst_112 : f32 to vector<8x128xf32>
    %626 = arith.subf %625, %617 : vector<8x128xf32>
    %627 = arith.mulf %626, %624 : vector<8x128xf32>
    %628 = arith.mulf %617, %589 : vector<8x128xf32>
    %629 = arith.addf %627, %628 : vector<8x128xf32>
    %cst_113 = arith.constant dense<0.000000e+00> : vector<8x384xf32>
    %630 = tpu.matmul %629, %5, %cst_113 {dimension_numbers = #tpu.dot_dimension_numbers<[1], [0], [0], [1], [0, 0, 1, 1], [], []>} : vector<8x128xf32>, vector<128x384xf32>, vector<8x384xf32> -> vector<8x384xf32>
    %631 = vector.broadcast %6 : vector<1x384xf32> to vector<8x384xf32>
    %632 = arith.addf %630, %631 : vector<8x384xf32>
    %633 = vector.extract_strided_slice %600 {offsets = [0, 384], sizes = [8, 384], strides = [1, 1]} : vector<8x768xf32> to vector<8x384xf32>
    %634 = vector.extract_strided_slice %632 {offsets = [0, 0], sizes = [8, 128], strides = [1, 1]} : vector<8x384xf32> to vector<8x128xf32>
    %635 = vector.extract_strided_slice %633 {offsets = [0, 0], sizes = [8, 128], strides = [1, 1]} : vector<8x384xf32> to vector<8x128xf32>
    %636 = arith.addf %634, %635 : vector<8x128xf32>
    %637 = arith.negf %636 : vector<8x128xf32>
    %638 = math.exp %637 : vector<8x128xf32>
    %cst_114 = arith.constant 1.000000e+00 : f32
    %639 = vector.broadcast %cst_114 : f32 to vector<8x128xf32>
    %640 = arith.addf %639, %638 : vector<8x128xf32>
    %641 = arith.divf %639, %640 : vector<8x128xf32>
    %642 = vector.extract_strided_slice %632 {offsets = [0, 128], sizes = [8, 128], strides = [1, 1]} : vector<8x384xf32> to vector<8x128xf32>
    %643 = vector.extract_strided_slice %633 {offsets = [0, 128], sizes = [8, 128], strides = [1, 1]} : vector<8x384xf32> to vector<8x128xf32>
    %644 = arith.addf %642, %643 : vector<8x128xf32>
    %645 = arith.negf %644 : vector<8x128xf32>
    %646 = math.exp %645 : vector<8x128xf32>
    %cst_115 = arith.constant 1.000000e+00 : f32
    %647 = vector.broadcast %cst_115 : f32 to vector<8x128xf32>
    %648 = arith.addf %647, %646 : vector<8x128xf32>
    %649 = arith.divf %647, %648 : vector<8x128xf32>
    %650 = vector.extract_strided_slice %632 {offsets = [0, 256], sizes = [8, 128], strides = [1, 1]} : vector<8x384xf32> to vector<8x128xf32>
    %651 = vector.extract_strided_slice %633 {offsets = [0, 256], sizes = [8, 128], strides = [1, 1]} : vector<8x384xf32> to vector<8x128xf32>
    %652 = vector.broadcast %8 : vector<1x128xf32> to vector<8x128xf32>
    %653 = arith.addf %651, %652 : vector<8x128xf32>
    %654 = arith.mulf %641, %653 : vector<8x128xf32>
    %655 = arith.addf %650, %654 : vector<8x128xf32>
    %656 = math.tanh %655 : vector<8x128xf32>
    %cst_116 = arith.constant 1.000000e+00 : f32
    %657 = vector.broadcast %cst_116 : f32 to vector<8x128xf32>
    %658 = arith.subf %657, %649 : vector<8x128xf32>
    %659 = arith.mulf %658, %656 : vector<8x128xf32>
    %660 = arith.mulf %649, %592 : vector<8x128xf32>
    %661 = arith.addf %659, %660 : vector<8x128xf32>
    %cst_117 = arith.constant 0.000000e+00 : f32
    %662 = vector.shape_cast %595 : vector<8x1xi1> to vector<8x1xi1>
    %663 = vector.broadcast %662 : vector<8x1xi1> to vector<8x128xi1>
    %664 = vector.broadcast %cst_117 : f32 to vector<8x128xf32>
    %665 = arith.select %663, %661, %664 : vector<8x128xi1>, vector<8x128xf32>
    %666 = arith.index_cast %c7_i32 : i32 to index
    %c0_118 = arith.constant 0 : index
    %c0_119 = arith.constant 0 : index
    %667 = vector.load %arg9[%666, %c0_118, %c0_119] : memref<8x8x128xf32, #tpu.memory_space<vmem>>, vector<1x8x128xf32>
    %668 = vector.shape_cast %667 : vector<1x8x128xf32> to vector<8x128xf32>
    %669 = vector.shape_cast %665 : vector<8x128xf32> to vector<1x8x128xf32>
    tpu.vector_store %arg9[%666, %c0_118, %c0_119], %669 {strides = array<i32>} : memref<8x8x128xf32, #tpu.memory_space<vmem>>, vector<1x8x128xf32>,
    %670 = vector.shape_cast %595 : vector<8x1xi1> to vector<8x1xi1>
    %671 = vector.broadcast %670 : vector<8x1xi1> to vector<8x128xi1>
    %672 = arith.select %671, %629, %589 : vector<8x128xi1>, vector<8x128xf32>
    %673 = vector.shape_cast %595 : vector<8x1xi1> to vector<8x1xi1>
    %674 = vector.broadcast %673 : vector<8x1xi1> to vector<8x128xi1>
    %675 = arith.select %674, %661, %592 : vector<8x128xi1>, vector<8x128xf32>
    %c8_i32_120 = arith.constant 8 : i32
    %c0_121 = arith.constant 0 : index
    %c0_122 = arith.constant 0 : index
    %676 = vector.load %arg10[%c0_121, %c0_122] : memref<8x128xf32, #tpu.memory_space<vmem>>, vector<8x128xf32>
    tpu.vector_store %arg10[%c0_121, %c0_122], %672 {strides = array<i32>} : memref<8x128xf32, #tpu.memory_space<vmem>>, vector<8x128xf32>,
    %c0_123 = arith.constant 0 : index
    %c0_124 = arith.constant 0 : index
    %677 = vector.load %arg11[%c0_123, %c0_124] : memref<8x128xf32, #tpu.memory_space<vmem>>, vector<8x128xf32>
    tpu.vector_store %arg11[%c0_123, %c0_124], %675 {strides = array<i32>} : memref<8x128xf32, #tpu.memory_space<vmem>>, vector<8x128xf32>,
    return
  }
  func.func @transform_0(%arg0: i32, %arg1: i32) -> (i32, i32) {
    %c0_i32 = arith.constant 0 : i32
    %c0_i32_0 = arith.constant 0 : i32
    return %arg0, %c0_i32 : i32, i32
  }
  func.func @transform_1(%arg0: i32, %arg1: i32) -> (i32, i32, i32) {
    %c0_i32 = arith.constant 0 : i32
    %c0_i32_0 = arith.constant 0 : i32
    return %arg1, %arg0, %c0_i32 : i32, i32, i32
  }
  func.func @transform_2(%arg0: i32, %arg1: i32) -> (i32, i32) {
    %c0_i32 = arith.constant 0 : i32
    %c0_i32_0 = arith.constant 0 : i32
    %c0_i32_1 = arith.constant 0 : i32
    return %c0_i32, %c0_i32_0 : i32, i32
  }
  func.func @transform_3(%arg0: i32, %arg1: i32) -> (i32, i32) {
    %c0_i32 = arith.constant 0 : i32
    %c0_i32_0 = arith.constant 0 : i32
    %c0_i32_1 = arith.constant 0 : i32
    return %c0_i32, %c0_i32_0 : i32, i32
  }
  func.func @transform_4(%arg0: i32, %arg1: i32) -> (i32, i32) {
    %c0_i32 = arith.constant 0 : i32
    %c0_i32_0 = arith.constant 0 : i32
    %c0_i32_1 = arith.constant 0 : i32
    return %c0_i32, %c0_i32_0 : i32, i32
  }
  func.func @transform_5(%arg0: i32, %arg1: i32) -> (i32, i32) {
    %c0_i32 = arith.constant 0 : i32
    %c0_i32_0 = arith.constant 0 : i32
    %c0_i32_1 = arith.constant 0 : i32
    return %c0_i32, %c0_i32_0 : i32, i32
  }
  func.func @transform_6(%arg0: i32, %arg1: i32) -> (i32, i32) {
    %c0_i32 = arith.constant 0 : i32
    %c0_i32_0 = arith.constant 0 : i32
    %c0_i32_1 = arith.constant 0 : i32
    return %c0_i32, %c0_i32_0 : i32, i32
  }
  func.func @transform_7(%arg0: i32, %arg1: i32) -> (i32, i32, i32) {
    %c0_i32 = arith.constant 0 : i32
    %c0_i32_0 = arith.constant 0 : i32
    return %arg1, %arg0, %c0_i32 : i32, i32, i32
  }
}

</mosaic_0001>

<llo_original>
// kernel: tpu_custom_call.1
$region0: #{tpu_custom_call.1}
  #allocation0 [shape = 'u32[]', space=smem, size = 0x4, offset = 0x4, fixed_abs, tag = 'smem constant byte address 0x4 - core index']
  #allocation1 [shape = 'u32[144,128]{1,0:T(1,128)}', space=vmem, size = 0x12000, scoped, tag = 'internal scratch']
  #allocation2 [shape = 'f32[8,128]{1,0:T(8,128)}', space=vmem, size = 0x1000, scoped, tag = 'scratch operand']
  #allocation3 [shape = 'f32[8,128]{1,0:T(8,128)}', space=vmem, size = 0x1000, scoped, tag = 'scratch operand']
  %s0 = inlined_call_operand.vmem [shape: s32[8,1], index: 0, kind: input, shape index: {}]
  %s1 = inlined_call_operand.hbm [shape: f32[8,8,384], index: 1, kind: input, shape index: {}]
  %s2 = inlined_call_operand.hbm [shape: f32[256,768], index: 2, kind: input, shape index: {}]
  %s3 = inlined_call_operand.hbm [shape: f32[128,384], index: 3, kind: input, shape index: {}]
  %s4 = inlined_call_operand.vmem [shape: f32[1,384], index: 4, kind: input, shape index: {}]
  %s5 = inlined_call_operand.vmem [shape: f32[1,128], index: 5, kind: input, shape index: {}]
  %s6 = inlined_call_operand.vmem [shape: f32[1,128], index: 6, kind: input, shape index: {}]
  %s7 = inlined_call_operand.hbm [shape: f32[8,8,128], index: 7, kind: output, shape index: {}]
  %s8 = sld [smem:[#allocation0]]
  $region54: #{tpu_custom_call.1} parent=0
    _
  %s10 = ssub.s32 1, %s8
  %s11 = scalar_select 0, %s10, %s8
  $region1: #{tpu_custom_call.1} parent=0
    #allocation4 [shape = 'u8[98304]{0}', space=vmem, size = 0x18000, scoped, tag = 'input window, operand 1, single buffered']
    #allocation5 [shape = 's32[1]{0}', space=sflag, size = 0x4, scoped, tag = 'scoped memory for tpu_custom_call.1']
    #allocation6 [shape = 's32[1]{0}', space=sflag, size = 0x4, scoped, tag = 'scoped memory for tpu_custom_call.1']
    #allocation7 [shape = 'u8[786432]{0}', space=vmem, size = 0xc0000, scoped, tag = 'input window, operand 2, single buffered']
    #allocation8 [shape = 's32[1]{0}', space=sflag, size = 0x4, scoped, tag = 'scoped memory for tpu_custom_call.1']
    #allocation9 [shape = 'u8[196608]{0}', space=vmem, size = 0x30000, scoped, tag = 'input window, operand 3, single buffered']
    #allocation10 [shape = 'u8[32768]{0}', space=vmem, size = 0x8000, scoped, tag = 'output window, operand 0, single buffered']
    %12 = vsyncpa [#allocation5], 0
    %13 = vsyncpa [#allocation8], 0
    %14 = vsyncpa [#allocation6], 0
    // Predicated region
    $region2: #{tpu_custom_call.1} parent=1 // pred_check
      _
    $region3: #{tpu_custom_call.1} parent=1 // pred_check_branch
      %16 = sbr.rel (0) target = $region5
    $region4: #{tpu_custom_call.1} parent=1 // pred_region
      _
    $region5: #{tpu_custom_call.1} parent=1 // pred_fallthru
      _
    // Predicated region
    $region6: #{tpu_custom_call.1} parent=1 // pred_check
      _
    $region7: #{tpu_custom_call.1} parent=1 // pred_check_branch
      %18 = sbr.rel (0) target = $region9
    $region8: #{tpu_custom_call.1} parent=1 // pred_region
      %s20 = ssub.s32 3072, 3072
      %21 = vsyncadd [#allocation5], %s20
      %s22 = sshll.u32 [#allocation4], 4
      %s23 = int_to_ptr.vmem [resolvable:$true] %s22
      %28 = dma.hbm_to_vmem [thread:$0]  %s1, 3072, %s23, [#allocation5], 384, 384, 24
    $region9: #{tpu_custom_call.1} parent=1 // pred_fallthru
      _
    // Predicated region
    $region10: #{tpu_custom_call.1} parent=1 // pred_check
      _
    $region11: #{tpu_custom_call.1} parent=1 // pred_check_branch
      %30 = sbr.rel (0) target = $region13
    $region12: #{tpu_custom_call.1} parent=1 // pred_region
      %s32 = ssub.s32 24576, 24576
      %33 = vsyncadd [#allocation8], %s32
      %s34 = sshll.u32 [#allocation7], 4
      %s35 = int_to_ptr.vmem [resolvable:$true] %s34
      %40 = dma.hbm_to_vmem [thread:$0]  %s2, 24576, %s35, [#allocation8], 768, 768, 48
    $region13: #{tpu_custom_call.1} parent=1 // pred_fallthru
      _
    // Predicated region
    $region14: #{tpu_custom_call.1} parent=1 // pred_check
      _
    $region15: #{tpu_custom_call.1} parent=1 // pred_check_branch
      %42 = sbr.rel (0) target = $region17
    $region16: #{tpu_custom_call.1} parent=1 // pred_region
      %s44 = ssub.s32 6144, 6144
      %45 = vsyncadd [#allocation8], %s44
      %s46 = sshll.u32 [#allocation9], 4
      %s47 = int_to_ptr.vmem [resolvable:$true] %s46
      %52 = dma.hbm_to_vmem [thread:$0]  %s3, 6144, %s47, [#allocation8], 384, 384, 24
    $region17: #{tpu_custom_call.1} parent=1 // pred_fallthru
      _
    // Predicated region
    $region18: #{tpu_custom_call.1} parent=1 // pred_check
      _
    $region19: #{tpu_custom_call.1} parent=1 // pred_check_branch
      %54 = sbr.rel (0) target = $region21
    $region20: #{tpu_custom_call.1} parent=1 // pred_region
      _
    $region21: #{tpu_custom_call.1} parent=1 // pred_fallthru
      _
    // Predicated region
    $region22: #{tpu_custom_call.1} parent=1 // pred_check
      _
    $region23: #{tpu_custom_call.1} parent=1 // pred_check_branch
      %56 = sbr.rel (0) target = $region25
    $region24: #{tpu_custom_call.1} parent=1 // pred_region
      _
    $region25: #{tpu_custom_call.1} parent=1 // pred_fallthru
      _
    // Predicated region
    $region26: #{tpu_custom_call.1} parent=1 // pred_check
      _
    $region27: #{tpu_custom_call.1} parent=1 // pred_check_branch
      %58 = sbr.rel (0) target = $region29
    $region28: #{tpu_custom_call.1} parent=1 // pred_region
      _
    $region29: #{tpu_custom_call.1} parent=1 // pred_fallthru
      _
    // Predicated region
    $region30: #{tpu_custom_call.1} parent=1 // pred_check
      _
    $region31: #{tpu_custom_call.1} parent=1 // pred_check_branch
      %60 = sbr.rel (0) target = $region33
    $region32: #{tpu_custom_call.1} parent=1 // pred_region
      %61 = dma.done [#allocation5], 3072
    $region33: #{tpu_custom_call.1} parent=1 // pred_fallthru
      _
    // Predicated region
    $region34: #{tpu_custom_call.1} parent=1 // pred_check
      _
    $region35: #{tpu_custom_call.1} parent=1 // pred_check_branch
      %63 = sbr.rel (0) target = $region37
    $region36: #{tpu_custom_call.1} parent=1 // pred_region
      %64 = dma.done [#allocation8], 24576
    $region37: #{tpu_custom_call.1} parent=1 // pred_fallthru
      _
    // Predicated region
    $region38: #{tpu_custom_call.1} parent=1 // pred_check
      _
    $region39: #{tpu_custom_call.1} parent=1 // pred_check_branch
      %66 = sbr.rel (0) target = $region41
    $region40: #{tpu_custom_call.1} parent=1 // pred_region
      %67 = dma.done [#allocation8], 6144
    $region41: #{tpu_custom_call.1} parent=1 // pred_fallthru
      _
    %p68 = scmp.eq.s32.totalorder 0, 0
    // Predicated region
    $region42: #{tpu_custom_call.1} parent=1 // pred_check
      %p69 = pneg %p68
    $region43: #{tpu_custom_call.1} parent=1 // pred_check_branch
      %71 = sbr.rel (%p69) target = $region45
    $region44: #{tpu_custom_call.1} parent=1 // pred_region
      %72 = vst [vmem:[#allocation2] sm:$0xff] 0.0
      %73 = vst [vmem:[#allocation3] sm:$0xff] 0.0
    $region45: #{tpu_custom_call.1} parent=1 // pred_fallthru
      _
    %v74 = vld [vmem:[%s0] sm:$0xff]
    %v75 = vld [vmem:[#allocation7] sm:$0xff]
    %v76 = vld [vmem:[#allocation7 + $0x8] sm:$0xff]
    %v77 = vld [vmem:[#allocation7 + $0x10] sm:$0xff]
    %v78 = vld [vmem:[#allocation7 + $0x18] sm:$0xff]
    %v79 = vld [vmem:[#allocation7 + $0x20] sm:$0xff]
    %v80 = vld [vmem:[#allocation7 + $0x28] sm:$0xff]
    %v81 = vld [vmem:[#allocation7 + $0x30] sm:$0xff]
    %v82 = vld [vmem:[#allocation7 + $0x38] sm:$0xff]
    %v83 = vld [vmem:[#allocation7 + $0x40] sm:$0xff]
    %v84 = vld [vmem:[#allocation7 + $0x48] sm:$0xff]
    %v85 = vld [vmem:[#allocation7 + $0x50] sm:$0xff]
    %v86 = vld [vmem:[#allocation7 + $0x58] sm:$0xff]
    %v87 = vld [vmem:[#allocation7 + $0x60] sm:$0xff]
    %v88 = vld [vmem:[#allocation7 + $0x68] sm:$0xff]
    %v89 = vld [vmem:[#allocation7 + $0x70] sm:$0xff]
    %v90 = vld [vmem:[#allocation7 + $0x78] sm:$0xff]
    %v91 = vld [vmem:[#allocation7 + $0x80] sm:$0xff]
    %v92 = vld [vmem:[#allocation7 + $0x88] sm:$0xff]
    %v93 = vld [vmem:[#allocation7 + $0x90] sm:$0xff]
    %v94 = vld [vmem:[#allocation7 + $0x98] sm:$0xff]
    %v95 = vld [vmem:[#allocation7 + $0xa0] sm:$0xff]
    %v96 = vld [vmem:[#allocation7 + $0xa8] sm:$0xff]
    %v97 = vld [vmem:[#allocation7 + $0xb0] sm:$0xff]
    %v98 = vld [vmem:[#allocation7 + $0xb8] sm:$0xff]
    %v99 = vld [vmem:[#allocation7 + $0xc0] sm:$0xff]
    %v100 = vld [vmem:[#allocation7 + $0xc8] sm:$0xff]
    %v101 = vld [vmem:[#allocation7 + $0xd0] sm:$0xff]
    %v102 = vld [vmem:[#allocation7 + $0xd8] sm:$0xff]
    %v103 = vld [vmem:[#allocation7 + $0xe0] sm:$0xff]
    %v104 = vld [vmem:[#allocation7 + $0xe8] sm:$0xff]
    %v105 = vld [vmem:[#allocation7 + $0xf0] sm:$0xff]
    %v106 = vld [vmem:[#allocation7 + $0xf8] sm:$0xff]
    %v107 = vld [vmem:[#allocation7 + $0x100] sm:$0xff]
    %v108 = vld [vmem:[#allocation7 + $0x108] sm:$0xff]
    %v109 = vld [vmem:[#allocation7 + $0x110] sm:$0xff]
    %v110 = vld [vmem:[#allocation7 + $0x118] sm:$0xff]
    %v111 = vld [vmem:[#allocation7 + $0x120] sm:$0xff]
    %v112 = vld [vmem:[#allocation7 + $0x128] sm:$0xff]
    %v113 = vld [vmem:[#allocation7 + $0x130] sm:$0xff]
    %v114 = vld [vmem:[#allocation7 + $0x138] sm:$0xff]
    %v115 = vld [vmem:[#allocation7 + $0x140] sm:$0xff]
    %v116 = vld [vmem:[#allocation7 + $0x148] sm:$0xff]
    %v117 = vld [vmem:[#allocation7 + $0x150] sm:$0xff]
    %v118 = vld [vmem:[#allocation7 + $0x158] sm:$0xff]
    %v119 = vld [vmem:[#allocation7 + $0x160] sm:$0xff]
    %v120 = vld [vmem:[#allocation7 + $0x168] sm:$0xff]
    %v121 = vld [vmem:[#allocation7 + $0x170] sm:$0xff]
    %v122 = vld [vmem:[#allocation7 + $0x178] sm:$0xff]
    %v123 = vld [vmem:[#allocation7 + $0x180] sm:$0xff]
    %v124 = vld [vmem:[#allocation7 + $0x188] sm:$0xff]
    %v125 = vld [vmem:[#allocation7 + $0x190] sm:$0xff]
    %v126 = vld [vmem:[#allocation7 + $0x198] sm:$0xff]
    %v127 = vld [vmem:[#allocation7 + $0x1a0] sm:$0xff]
    %v128 = vld [vmem:[#allocation7 + $0x1a8] sm:$0xff]
    %v129 = vld [vmem:[#allocation7 + $0x1b0] sm:$0xff]
    %v130 = vld [vmem:[#allocation7 + $0x1b8] sm:$0xff]
    %v131 = vld [vmem:[#allocation7 + $0x1c0] sm:$0xff]
    %v132 = vld [vmem:[#allocation7 + $0x1c8] sm:$0xff]
    %v133 = vld [vmem:[#allocation7 + $0x1d0] sm:$0xff]
    %v134 = vld [vmem:[#allocation7 + $0x1d8] sm:$0xff]
    %v135 = vld [vmem:[#allocation7 + $0x1e0] sm:$0xff]
    %v136 = vld [vmem:[#allocation7 + $0x1e8] sm:$0xff]
    %v137 = vld [vmem:[#allocation7 + $0x1f0] sm:$0xff]
    %v138 = vld [vmem:[#allocation7 + $0x1f8] sm:$0xff]
    %v139 = vld [vmem:[#allocation7 + $0x200] sm:$0xff]
    %v140 = vld [vmem:[#allocation7 + $0x208] sm:$0xff]
    %v141 = vld [vmem:[#allocation7 + $0x210] sm:$0xff]
    %v142 = vld [vmem:[#allocation7 + $0x218] sm:$0xff]
    %v143 = vld [vmem:[#allocation7 + $0x220] sm:$0xff]
    %v144 = vld [vmem:[#allocation7 + $0x228] sm:$0xff]
    %v145 = vld [vmem:[#allocation7 + $0x230] sm:$0xff]
    %v146 = vld [vmem:[#allocation7 + $0x238] sm:$0xff]
    %v147 = vld [vmem:[#allocation7 + $0x240] sm:$0xff]
    %v148 = vld [vmem:[#allocation7 + $0x248] sm:$0xff]
    %v149 = vld [vmem:[#allocation7 + $0x250] sm:$0xff]
    %v150 = vld [vmem:[#allocation7 + $0x258] sm:$0xff]
    %v151 = vld [vmem:[#allocation7 + $0x260] sm:$0xff]
    %v152 = vld [vmem:[#allocation7 + $0x268] sm:$0xff]
    %v153 = vld [vmem:[#allocation7 + $0x270] sm:$0xff]
    %v154 = vld [vmem:[#allocation7 + $0x278] sm:$0xff]
    %v155 = vld [vmem:[#allocation7 + $0x280] sm:$0xff]
    %v156 = vld [vmem:[#allocation7 + $0x288] sm:$0xff]
    %v157 = vld [vmem:[#allocation7 + $0x290] sm:$0xff]
    %v158 = vld [vmem:[#allocation7 + $0x298] sm:$0xff]
    %v159 = vld [vmem:[#allocation7 + $0x2a0] sm:$0xff]
    %v160 = vld [vmem:[#allocation7 + $0x2a8] sm:$0xff]
    %v161 = vld [vmem:[#allocation7 + $0x2b0] sm:$0xff]
    %v162 = vld [vmem:[#allocation7 + $0x2b8] sm:$0xff]
    %v163 = vld [vmem:[#allocation7 + $0x2c0] sm:$0xff]
    %v164 = vld [vmem:[#allocation7 + $0x2c8] sm:$0xff]
    %v165 = vld [vmem:[#allocation7 + $0x2d0] sm:$0xff]
    %v166 = vld [vmem:[#allocation7 + $0x2d8] sm:$0xff]
    %v167 = vld [vmem:[#allocation7 + $0x2e0] sm:$0xff]
    %v168 = vld [vmem:[#allocation7 + $0x2e8] sm:$0xff]
    %v169 = vld [vmem:[#allocation7 + $0x2f0] sm:$0xff]
    %v170 = vld [vmem:[#allocation7 + $0x2f8] sm:$0xff]
    %v171 = vld [vmem:[#allocation7 + $0x300] sm:$0xff]
    %v172 = vld [vmem:[#allocation7 + $0x308] sm:$0xff]
    %v173 = vld [vmem:[#allocation7 + $0x310] sm:$0xff]
    %v174 = vld [vmem:[#allocation7 + $0x318] sm:$0xff]
    %v175 = vld [vmem:[#allocation7 + $0x320] sm:$0xff]
    %v176 = vld [vmem:[#allocation7 + $0x328] sm:$0xff]
    %v177 = vld [vmem:[#allocation7 + $0x330] sm:$0xff]
    %v178 = vld [vmem:[#allocation7 + $0x338] sm:$0xff]
    %v179 = vld [vmem:[#allocation7 + $0x340] sm:$0xff]
    %v180 = vld [vmem:[#allocation7 + $0x348] sm:$0xff]
    %v181 = vld [vmem:[#allocation7 + $0x350] sm:$0xff]
    %v182 = vld [vmem:[#allocation7 + $0x358] sm:$0xff]
    %v183 = vld [vmem:[#allocation7 + $0x360] sm:$0xff]
    %v184 = vld [vmem:[#allocation7 + $0x368] sm:$0xff]
    %v185 = vld [vmem:[#allocation7 + $0x370] sm:$0xff]
    %v186 = vld [vmem:[#allocation7 + $0x378] sm:$0xff]
    %v187 = vld [vmem:[#allocation7 + $0x380] sm:$0xff]
    %v188 = vld [vmem:[#allocation7 + $0x388] sm:$0xff]
    %v189 = vld [vmem:[#allocation7 + $0x390] sm:$0xff]
    %v190 = vld [vmem:[#allocation7 + $0x398] sm:$0xff]
    %v191 = vld [vmem:[#allocation7 + $0x3a0] sm:$0xff]
    %v192 = vld [vmem:[#allocation7 + $0x3a8] sm:$0xff]
    %v193 = vld [vmem:[#allocation7 + $0x3b0] sm:$0xff]
    %v194 = vld [vmem:[#allocation7 + $0x3b8] sm:$0xff]
    %v195 = vld [vmem:[#allocation7 + $0x3c0] sm:$0xff]
    %v196 = vld [vmem:[#allocation7 + $0x3c8] sm:$0xff]
    %v197 = vld [vmem:[#allocation7 + $0x3d0] sm:$0xff]
    %v198 = vld [vmem:[#allocation7 + $0x3d8] sm:$0xff]
    %v199 = vld [vmem:[#allocation7 + $0x3e0] sm:$0xff]
    %v200 = vld [vmem:[#allocation7 + $0x3e8] sm:$0xff]
    %v201 = vld [vmem:[#allocation7 + $0x3f0] sm:$0xff]
    %v202 = vld [vmem:[#allocation7 + $0x3f8] sm:$0xff]
    %v203 = vld [vmem:[#allocation7 + $0x400] sm:$0xff]
    %v204 = vld [vmem:[#allocation7 + $0x408] sm:$0xff]
    %v205 = vld [vmem:[#allocation7 + $0x410] sm:$0xff]
    %v206 = vld [vmem:[#allocation7 + $0x418] sm:$0xff]
    %v207 = vld [vmem:[#allocation7 + $0x420] sm:$0xff]
    %v208 = vld [vmem:[#allocation7 + $0x428] sm:$0xff]
    %v209 = vld [vmem:[#allocation7 + $0x430] sm:$0xff]
    %v210 = vld [vmem:[#allocation7 + $0x438] sm:$0xff]
    %v211 = vld [vmem:[#allocation7 + $0x440] sm:$0xff]
    %v212 = vld [vmem:[#allocation7 + $0x448] sm:$0xff]
    %v213 = vld [vmem:[#allocation7 + $0x450] sm:$0xff]
    %v214 = vld [vmem:[#allocation7 + $0x458] sm:$0xff]
    %v215 = vld [vmem:[#allocation7 + $0x460] sm:$0xff]
    %v216 = vld [vmem:[#allocation7 + $0x468] sm:$0xff]
    %v217 = vld [vmem:[#allocation7 + $0x470] sm:$0xff]
    %v218 = vld [vmem:[#allocation7 + $0x478] sm:$0xff]
    %v219 = vld [vmem:[#allocation7 + $0x480] sm:$0xff]
    %v220 = vld [vmem:[#allocation7 + $0x488] sm:$0xff]
    %v221 = vld [vmem:[#allocation7 + $0x490] sm:$0xff]
    %v222 = vld [vmem:[#allocation7 + $0x498] sm:$0xff]
    %v223 = vld [vmem:[#allocation7 + $0x4a0] sm:$0xff]
    %v224 = vld [vmem:[#allocation7 + $0x4a8] sm:$0xff]
    %v225 = vld [vmem:[#allocation7 + $0x4b0] sm:$0xff]
    %v226 = vld [vmem:[#allocation7 + $0x4b8] sm:$0xff]
    %v227 = vld [vmem:[#allocation7 + $0x4c0] sm:$0xff]
    %v228 = vld [vmem:[#allocation7 + $0x4c8] sm:$0xff]
    %v229 = vld [vmem:[#allocation7 + $0x4d0] sm:$0xff]
    %v230 = vld [vmem:[#allocation7 + $0x4d8] sm:$0xff]
    %v231 = vld [vmem:[#allocation7 + $0x4e0] sm:$0xff]
    %v232 = vld [vmem:[#allocation7 + $0x4e8] sm:$0xff]
    %v233 = vld [vmem:[#allocation7 + $0x4f0] sm:$0xff]
    %v234 = vld [vmem:[#allocation7 + $0x4f8] sm:$0xff]
    %v235 = vld [vmem:[#allocation7 + $0x500] sm:$0xff]
    %v236 = vld [vmem:[#allocation7 + $0x508] sm:$0xff]
    %v237 = vld [vmem:[#allocation7 + $0x510] sm:$0xff]
    %v238 = vld [vmem:[#allocation7 + $0x518] sm:$0xff]
    %v239 = vld [vmem:[#allocation7 + $0x520] sm:$0xff]
    %v240 = vld [vmem:[#allocation7 + $0x528] sm:$0xff]
    %v241 = vld [vmem:[#allocation7 + $0x530] sm:$0xff]
    %v242 = vld [vmem:[#allocation7 + $0x538] sm:$0xff]
    %v243 = vld [vmem:[#allocation7 + $0x540] sm:$0xff]
    %v244 = vld [vmem:[#allocation7 + $0x548] sm:$0xff]
    %v245 = vld [vmem:[#allocation7 + $0x550] sm:$0xff]
    %v246 = vld [vmem:[#allocation7 + $0x558] sm:$0xff]
    %v247 = vld [vmem:[#allocation7 + $0x560] sm:$0xff]
    %v248 = vld [vmem:[#allocation7 + $0x568] sm:$0xff]
    %v249 = vld [vmem:[#allocation7 + $0x570] sm:$0xff]
    %v250 = vld [vmem:[#allocation7 + $0x578] sm:$0xff]
    %v251 = vld [vmem:[#allocation7 + $0x580] sm:$0xff]
    %v252 = vld [vmem:[#allocation7 + $0x588] sm:$0xff]
    %v253 = vld [vmem:[#allocation7 + $0x590] sm:$0xff]
    %v254 = vld [vmem:[#allocation7 + $0x598] sm:$0xff]
    %v255 = vld [vmem:[#allocation7 + $0x5a0] sm:$0xff]
    %v256 = vld [vmem:[#allocation7 + $0x5a8] sm:$0xff]
    %v257 = vld [vmem:[#allocation7 + $0x5b0] sm:$0xff]
    %v258 = vld [vmem:[#allocation7 + $0x5b8] sm:$0xff]
    %v259 = vld [vmem:[#allocation7 + $0x5c0] sm:$0xff]
    %v260 = vld [vmem:[#allocation7 + $0x5c8] sm:$0xff]
    %v261 = vld [vmem:[#allocation7 + $0x5d0] sm:$0xff]
    %v262 = vld [vmem:[#allocation7 + $0x5d8] sm:$0xff]
    %v263 = vld [vmem:[#allocation7 + $0x5e0] sm:$0xff]
    %v264 = vld [vmem:[#allocation7 + $0x5e8] sm:$0xff]
    %v265 = vld [vmem:[#allocation7 + $0x5f0] sm:$0xff]
    %v266 = vld [vmem:[#allocation7 + $0x5f8] sm:$0xff]
    %v267 = vld [vmem:[#allocation9] sm:$0xff]
    %v268 = vld [vmem:[#allocation9 + $0x8] sm:$0xff]
    %v269 = vld [vmem:[#allocation9 + $0x10] sm:$0xff]
    %v270 = vld [vmem:[#allocation9 + $0x18] sm:$0xff]
    %v271 = vld [vmem:[#allocation9 + $0x20] sm:$0xff]
    %v272 = vld [vmem:[#allocation9 + $0x28] sm:$0xff]
    %v273 = vld [vmem:[#allocation9 + $0x30] sm:$0xff]
    %v274 = vld [vmem:[#allocation9 + $0x38] sm:$0xff]
    %v275 = vld [vmem:[#allocation9 + $0x40] sm:$0xff]
    %v276 = vld [vmem:[#allocation9 + $0x48] sm:$0xff]
    %v277 = vld [vmem:[#allocation9 + $0x50] sm:$0xff]
    %v278 = vld [vmem:[#allocation9 + $0x58] sm:$0xff]
    %v279 = vld [vmem:[#allocation9 + $0x60] sm:$0xff]
    %v280 = vld [vmem:[#allocation9 + $0x68] sm:$0xff]
    %v281 = vld [vmem:[#allocation9 + $0x70] sm:$0xff]
    %v282 = vld [vmem:[#allocation9 + $0x78] sm:$0xff]
    %v283 = vld [vmem:[#allocation9 + $0x80] sm:$0xff]
    %v284 = vld [vmem:[#allocation9 + $0x88] sm:$0xff]
    %v285 = vld [vmem:[#allocation9 + $0x90] sm:$0xff]
    %v286 = vld [vmem:[#allocation9 + $0x98] sm:$0xff]
    %v287 = vld [vmem:[#allocation9 + $0xa0] sm:$0xff]
    %v288 = vld [vmem:[#allocation9 + $0xa8] sm:$0xff]
    %v289 = vld [vmem:[#allocation9 + $0xb0] sm:$0xff]
    %v290 = vld [vmem:[#allocation9 + $0xb8] sm:$0xff]
    %v291 = vld [vmem:[#allocation9 + $0xc0] sm:$0xff]
    %v292 = vld [vmem:[#allocation9 + $0xc8] sm:$0xff]
    %v293 = vld [vmem:[#allocation9 + $0xd0] sm:$0xff]
    %v294 = vld [vmem:[#allocation9 + $0xd8] sm:$0xff]
    %v295 = vld [vmem:[#allocation9 + $0xe0] sm:$0xff]
    %v296 = vld [vmem:[#allocation9 + $0xe8] sm:$0xff]
    %v297 = vld [vmem:[#allocation9 + $0xf0] sm:$0xff]
    %v298 = vld [vmem:[#allocation9 + $0xf8] sm:$0xff]
    %v299 = vld [vmem:[#allocation9 + $0x100] sm:$0xff]
    %v300 = vld [vmem:[#allocation9 + $0x108] sm:$0xff]
    %v301 = vld [vmem:[#allocation9 + $0x110] sm:$0xff]
    %v302 = vld [vmem:[#allocation9 + $0x118] sm:$0xff]
    %v303 = vld [vmem:[#allocation9 + $0x120] sm:$0xff]
    %v304 = vld [vmem:[#allocation9 + $0x128] sm:$0xff]
    %v305 = vld [vmem:[#allocation9 + $0x130] sm:$0xff]
    %v306 = vld [vmem:[#allocation9 + $0x138] sm:$0xff]
    %v307 = vld [vmem:[#allocation9 + $0x140] sm:$0xff]
    %v308 = vld [vmem:[#allocation9 + $0x148] sm:$0xff]
    %v309 = vld [vmem:[#allocation9 + $0x150] sm:$0xff]
    %v310 = vld [vmem:[#allocation9 + $0x158] sm:$0xff]
    %v311 = vld [vmem:[#allocation9 + $0x160] sm:$0xff]
    %v312 = vld [vmem:[#allocation9 + $0x168] sm:$0xff]
    %v313 = vld [vmem:[#allocation9 + $0x170] sm:$0xff]
    %v314 = vld [vmem:[#allocation9 + $0x178] sm:$0xff]
    %v315 = vld [vmem:[%s4] sm:$0x7]
    %v316 = vld [vmem:[%s5] sm:$0x1]
    %v317 = vld [vmem:[%s6] sm:$0x1]
    %s318 = smul.u32 0, 8
    %v319 = vld [vmem:[#allocation2] sm:$0xff]
    %v320 = vld [vmem:[#allocation3] sm:$0xff]
    %v321 = vstv %s318
    %vm322 = vcmp.lt.s32.totalorder %v321, %v74
    %v323 = vld [vmem:[#allocation4] sm:$0xff]
    %v324 = vld [vmem:[#allocation4 + $0x8] sm:$0xff]
    %v325 = vld [vmem:[#allocation4 + $0x10] sm:$0xff]
    %326 = vmatprep.subr.mxu0 %v76
    %327 = vmatpush1.msra.mxu0 %v75
    %328 = vmatprep.subr.mxu0 %v82
    %329 = vmatpush1.msra.mxu0 %v81
    %330 = vmatprep.subr.mxu0 %v88
    %331 = vmatpush1.msra.mxu0 %v87
    %332 = vmatprep.subr.mxu0 %v94
    %333 = vmatpush1.msra.mxu0 %v93
    %334 = vmatprep.subr.mxu0 %v100
    %335 = vmatpush1.msra.mxu0 %v99
    %336 = vmatprep.subr.mxu0 %v106
    %337 = vmatpush1.msra.mxu0 %v105
    %338 = vmatprep.subr.mxu0 %v112
    %339 = vmatpush1.msra.mxu0 %v111
    %340 = vmatprep.subr.mxu0 %v118
    %341 = vmatpush1.msra.mxu0 %v117
    %342 = vmatprep.subr.mxu0 %v124
    %343 = vmatpush1.msra.mxu0 %v123
    %344 = vmatprep.subr.mxu0 %v130
    %345 = vmatpush1.msra.mxu0 %v129
    %346 = vmatprep.subr.mxu0 %v136
    %347 = vmatpush1.msra.mxu0 %v135
    %348 = vmatprep.subr.mxu0 %v142
    %349 = vmatpush1.msra.mxu0 %v141
    %350 = vmatprep.subr.mxu0 %v148
    %351 = vmatpush1.msra.mxu0 %v147
    %352 = vmatprep.subr.mxu0 %v154
    %353 = vmatpush1.msra.mxu0 %v153
    %354 = vmatprep.subr.mxu0 %v160
    %355 = vmatpush1.msra.mxu0 %v159
    %356 = vmatprep.subr.mxu0 %v166
    %357 = vmatpush1.msra.mxu0 %v165
    %358 = vmatprep.subr.mxu0 %v172
    %359 = vmatpush1.msra.mxu0 %v171
    %360 = vmatprep.subr.mxu0 %v178
    %361 = vmatpush1.msra.mxu0 %v177
    %362 = vmatprep.subr.mxu0 %v184
    %363 = vmatpush1.msra.mxu0 %v183
    %364 = vmatprep.subr.mxu0 %v190
    %365 = vmatpush1.msra.mxu0 %v189
    %366 = vmatprep.subr.mxu0 %v196
    %367 = vmatpush1.msra.mxu0 %v195
    %368 = vmatprep.subr.mxu0 %v202
    %369 = vmatpush1.msra.mxu0 %v201
    %370 = vmatprep.subr.mxu0 %v208
    %371 = vmatpush1.msra.mxu0 %v207
    %372 = vmatprep.subr.mxu0 %v214
    %373 = vmatpush1.msra.mxu0 %v213
    %374 = vmatprep.subr.mxu0 %v220
    %375 = vmatpush1.msra.mxu0 %v219
    %376 = vmatprep.subr.mxu0 %v226
    %377 = vmatpush1.msra.mxu0 %v225
    %378 = vmatprep.subr.mxu0 %v232
    %379 = vmatpush1.msra.mxu0 %v231
    %380 = vmatprep.subr.mxu0 %v238
    %381 = vmatpush1.msra.mxu0 %v237
    %382 = vmatprep.subr.mxu0 %v244
    %383 = vmatpush1.msra.mxu0 %v243
    %384 = vmatprep.subr.mxu0 %v250
    %385 = vmatpush1.msra.mxu0 %v249
    %386 = vmatprep.subr.mxu0 %v256
    %387 = vmatpush1.msra.mxu0 %v255
    %388 = vmatprep.subr.mxu0 %v262
    %389 = vmatpush1.msra.mxu0 %v261
    %390 = vmatprep.mubr.f32.mxu0 %v320
    %391 = vmatmul.mubr.f32.gmra.mrb[0].mxu0 %v319
    %v392 = vpop.f32.mrb[0].mxu0
    %v393 = vadd.f32 0.0, %v392
    %v394 = vpop.f32.mrb[0].mxu0
    %v395 = vadd.f32 0.0, %v394
    %396 = vdwg.mxu0
    %397 = vmatprep.subr.mxu0 %v78
    %398 = vmatpush1.msra.mxu0 %v77
    %399 = vmatprep.subr.mxu0 %v84
    %400 = vmatpush1.msra.mxu0 %v83
    %401 = vmatprep.subr.mxu0 %v90
    %402 = vmatpush1.msra.mxu0 %v89
    %403 = vmatprep.subr.mxu0 %v96
    %404 = vmatpush1.msra.mxu0 %v95
    %405 = vmatprep.subr.mxu0 %v102
    %406 = vmatpush1.msra.mxu0 %v101
    %407 = vmatprep.subr.mxu0 %v108
    %408 = vmatpush1.msra.mxu0 %v107
    %409 = vmatprep.subr.mxu0 %v114
    %410 = vmatpush1.msra.mxu0 %v113
    %411 = vmatprep.subr.mxu0 %v120
    %412 = vmatpush1.msra.mxu0 %v119
    %413 = vmatprep.subr.mxu0 %v126
    %414 = vmatpush1.msra.mxu0 %v125
    %415 = vmatprep.subr.mxu0 %v132
    %416 = vmatpush1.msra.mxu0 %v131
    %417 = vmatprep.subr.mxu0 %v138
    %418 = vmatpush1.msra.mxu0 %v137
    %419 = vmatprep.subr.mxu0 %v144
    %420 = vmatpush1.msra.mxu0 %v143
    %421 = vmatprep.subr.mxu0 %v150
    %422 = vmatpush1.msra.mxu0 %v149
    %423 = vmatprep.subr.mxu0 %v156
    %424 = vmatpush1.msra.mxu0 %v155
    %425 = vmatprep.subr.mxu0 %v162
    %426 = vmatpush1.msra.mxu0 %v161
    %427 = vmatprep.subr.mxu0 %v168
    %428 = vmatpush1.msra.mxu0 %v167
    %429 = vmatprep.subr.mxu0 %v174
    %430 = vmatpush1.msra.mxu0 %v173
    %431 = vmatprep.subr.mxu0 %v180
    %432 = vmatpush1.msra.mxu0 %v179
    %433 = vmatprep.subr.mxu0 %v186
    %434 = vmatpush1.msra.mxu0 %v185
    %435 = vmatprep.subr.mxu0 %v192
    %436 = vmatpush1.msra.mxu0 %v191
    %437 = vmatprep.subr.mxu0 %v198
    %438 = vmatpush1.msra.mxu0 %v197
    %439 = vmatprep.subr.mxu0 %v204
    %440 = vmatpush1.msra.mxu0 %v203
    %441 = vmatprep.subr.mxu0 %v210
    %442 = vmatpush1.msra.mxu0 %v209
    %443 = vmatprep.subr.mxu0 %v216
    %444 = vmatpush1.msra.mxu0 %v215
    %445 = vmatprep.subr.mxu0 %v222
    %446 = vmatpush1.msra.mxu0 %v221
    %447 = vmatprep.subr.mxu0 %v228
    %448 = vmatpush1.msra.mxu0 %v227
    %449 = vmatprep.subr.mxu0 %v234
    %450 = vmatpush1.msra.mxu0 %v233
    %451 = vmatprep.subr.mxu0 %v240
    %452 = vmatpush1.msra.mxu0 %v239
    %453 = vmatprep.subr.mxu0 %v246
    %454 = vmatpush1.msra.mxu0 %v245
    %455 = vmatprep.subr.mxu0 %v252
    %456 = vmatpush1.msra.mxu0 %v251
    %457 = vmatprep.subr.mxu0 %v258
    %458 = vmatpush1.msra.mxu0 %v257
    %459 = vmatprep.subr.mxu0 %v264
    %460 = vmatpush1.msra.mxu0 %v263
    %461 = vmatprep.mubr.f32.mxu0 %v320
    %462 = vmatmul.mubr.f32.gmra.mrb[0].mxu0 %v319
    %v463 = vpop.f32.mrb[0].mxu0
    %v464 = vadd.f32 0.0, %v463
    %v465 = vpop.f32.mrb[0].mxu0
    %v466 = vadd.f32 0.0, %v465
    %467 = vdwg.mxu0
    %468 = vmatprep.subr.mxu0 %v80
    %469 = vmatpush1.msra.mxu0 %v79
    %470 = vmatprep.subr.mxu0 %v86
    %471 = vmatpush1.msra.mxu0 %v85
    %472 = vmatprep.subr.mxu0 %v92
    %473 = vmatpush1.msra.mxu0 %v91
    %474 = vmatprep.subr.mxu0 %v98
    %475 = vmatpush1.msra.mxu0 %v97
    %476 = vmatprep.subr.mxu0 %v104
    %477 = vmatpush1.msra.mxu0 %v103
    %478 = vmatprep.subr.mxu0 %v110
    %479 = vmatpush1.msra.mxu0 %v109
    %480 = vmatprep.subr.mxu0 %v116
    %481 = vmatpush1.msra.mxu0 %v115
    %482 = vmatprep.subr.mxu0 %v122
    %483 = vmatpush1.msra.mxu0 %v121
    %484 = vmatprep.subr.mxu0 %v128
    %485 = vmatpush1.msra.mxu0 %v127
    %486 = vmatprep.subr.mxu0 %v134
    %487 = vmatpush1.msra.mxu0 %v133
    %488 = vmatprep.subr.mxu0 %v140
    %489 = vmatpush1.msra.mxu0 %v139
    %490 = vmatprep.subr.mxu0 %v146
    %491 = vmatpush1.msra.mxu0 %v145
    %492 = vmatprep.subr.mxu0 %v152
    %493 = vmatpush1.msra.mxu0 %v151
    %494 = vmatprep.subr.mxu0 %v158
    %495 = vmatpush1.msra.mxu0 %v157
    %496 = vmatprep.subr.mxu0 %v164
    %497 = vmatpush1.msra.mxu0 %v163
    %498 = vmatprep.subr.mxu0 %v170
    %499 = vmatpush1.msra.mxu0 %v169
    %500 = vmatprep.subr.mxu0 %v176
    %501 = vmatpush1.msra.mxu0 %v175
    %502 = vmatprep.subr.mxu0 %v182
    %503 = vmatpush1.msra.mxu0 %v181
    %504 = vmatprep.subr.mxu0 %v188
    %505 = vmatpush1.msra.mxu0 %v187
    %506 = vmatprep.subr.mxu0 %v194
    %507 = vmatpush1.msra.mxu0 %v193
    %508 = vmatprep.subr.mxu0 %v200
    %509 = vmatpush1.msra.mxu0 %v199
    %510 = vmatprep.subr.mxu0 %v206
    %511 = vmatpush1.msra.mxu0 %v205
    %512 = vmatprep.subr.mxu0 %v212
    %513 = vmatpush1.msra.mxu0 %v211
    %514 = vmatprep.subr.mxu0 %v218
    %515 = vmatpush1.msra.mxu0 %v217
    %516 = vmatprep.subr.mxu0 %v224
    %517 = vmatpush1.msra.mxu0 %v223
    %518 = vmatprep.subr.mxu0 %v230
    %519 = vmatpush1.msra.mxu0 %v229
    %520 = vmatprep.subr.mxu0 %v236
    %521 = vmatpush1.msra.mxu0 %v235
    %522 = vmatprep.subr.mxu0 %v242
    %523 = vmatpush1.msra.mxu0 %v241
    %524 = vmatprep.subr.mxu0 %v248
    %525 = vmatpush1.msra.mxu0 %v247
    %526 = vmatprep.subr.mxu0 %v254
    %527 = vmatpush1.msra.mxu0 %v253
    %528 = vmatprep.subr.mxu0 %v260
    %529 = vmatpush1.msra.mxu0 %v259
    %530 = vmatprep.subr.mxu0 %v266
    %531 = vmatpush1.msra.mxu0 %v265
    %532 = vmatprep.mubr.f32.mxu0 %v320
    %533 = vmatmul.mubr.f32.gmra.mrb[0].mxu0 %v319
    %v534 = vpop.f32.mrb[0].mxu0
    %v535 = vadd.f32 0.0, %v534
    %v536 = vpop.f32.mrb[0].mxu0
    %v537 = vadd.f32 0.0, %v536
    %538 = vdwg.mxu0
    %v539 = vadd.f32 %v323, %v393
    %v540 = vxor.u32 %v539, 2147483648
    %v541 = vmul.f32 %v540, 1.442695
    %v542 = vpow.pop %v541
    %v543 = vadd.f32 %v542, 1.0
    %v544 = vrcp.pop %v543
    %v545 = vmul.f32 1.0, %v544
    %v546 = vadd.f32 %v324, %v395
    %v547 = vxor.u32 %v546, 2147483648
    %v548 = vmul.f32 %v547, 1.442695
    %v549 = vpow.pop %v548
    %v550 = vadd.f32 %v549, 1.0
    %v551 = vrcp.pop %v550
    %v552 = vmul.f32 1.0, %v551
    %v554 = vlaneseq
    %v555 = vshrl.u32 %v554, 7
    %v556 = vsub.s32 0, %v555
    %v557 = vrot.slane %v316, %v556
    %v559 = vadd.f32 %v464, %v557
    %v560 = vmul.f32 %v545, %v559
    %v561 = vadd.f32 %v325, %v560
    %v562 = vtanh.pop %v561
    %v563 = vsub.f32 1.0, %v552
    %v564 = vmul.f32 %v563, %v562
    %v565 = vmul.f32 %v552, %v319
    %v566 = vadd.f32 %v564, %v565
    %v568 = vlaneseq
    %v569 = vshrl.u32 %v568, 7
    %v570 = vsub.s32 0, %v569
    %v571 = vrot.slane %v315, %v570
    %v572 = vlaneseq
    %v573 = vshrl.u32 %v572, 7
    %v574 = vsub.s32 1, %v573
    %v575 = vrot.slane %v315, %v574
    %v576 = vlaneseq
    %v577 = vshrl.u32 %v576, 7
    %v578 = vsub.s32 2, %v577
    %v579 = vrot.slane %v315, %v578
    %583 = vmatprep.subr.mxu0 %v268
    %584 = vmatpush1.msra.mxu0 %v267
    %585 = vmatprep.subr.mxu0 %v271
    %586 = vmatpush1.msra.mxu0 %v270
    %587 = vmatprep.subr.mxu0 %v274
    %588 = vmatpush1.msra.mxu0 %v273
    %589 = vmatprep.subr.mxu0 %v277
    %590 = vmatpush1.msra.mxu0 %v276
    %591 = vmatprep.subr.mxu0 %v280
    %592 = vmatpush1.msra.mxu0 %v279
    %593 = vmatprep.subr.mxu0 %v283
    %594 = vmatpush1.msra.mxu0 %v282
    %595 = vmatprep.subr.mxu0 %v286
    %596 = vmatpush1.msra.mxu0 %v285
    %597 = vmatprep.subr.mxu0 %v289
    %598 = vmatpush1.msra.mxu0 %v288
    %599 = vmatprep.subr.mxu0 %v292
    %600 = vmatpush1.msra.mxu0 %v291
    %601 = vmatprep.subr.mxu0 %v295
    %602 = vmatpush1.msra.mxu0 %v294
    %603 = vmatprep.subr.mxu0 %v298
    %604 = vmatpush1.msra.mxu0 %v297
    %605 = vmatprep.subr.mxu0 %v301
    %606 = vmatpush1.msra.mxu0 %v300
    %607 = vmatprep.subr.mxu0 %v304
    %608 = vmatpush1.msra.mxu0 %v303
    %609 = vmatprep.subr.mxu0 %v307
    %610 = vmatpush1.msra.mxu0 %v306
    %611 = vmatprep.subr.mxu0 %v310
    %612 = vmatpush1.msra.mxu0 %v309
    %613 = vmatprep.subr.mxu0 %v313
    %614 = vmatpush1.msra.mxu0 %v312
    %615 = vmatprep.subr.mxu0 0.0
    %616 = vmatpush1.msra.mxu0 0.0
    %617 = vmatprep.subr.mxu0 0.0
    %618 = vmatpush1.msra.mxu0 0.0
    %619 = vmatprep.subr.mxu0 0.0
    %620 = vmatpush1.msra.mxu0 0.0
    %621 = vmatprep.subr.mxu0 0.0
    %622 = vmatpush1.msra.mxu0 0.0
    %623 = vmatprep.subr.mxu0 0.0
    %624 = vmatpush1.msra.mxu0 0.0
    %625 = vmatprep.subr.mxu0 0.0
    %626 = vmatpush1.msra.mxu0 0.0
    %627 = vmatprep.subr.mxu0 0.0
    %628 = vmatpush1.msra.mxu0 0.0
    %629 = vmatprep.subr.mxu0 0.0
    %630 = vmatpush1.msra.mxu0 0.0
    %631 = vmatprep.subr.mxu0 0.0
    %632 = vmatpush1.msra.mxu0 0.0
    %633 = vmatprep.subr.mxu0 0.0
    %634 = vmatpush1.msra.mxu0 0.0
    %635 = vmatprep.subr.mxu0 0.0
    %636 = vmatpush1.msra.mxu0 0.0
    %637 = vmatprep.subr.mxu0 0.0
    %638 = vmatpush1.msra.mxu0 0.0
    %639 = vmatprep.subr.mxu0 0.0
    %640 = vmatpush1.msra.mxu0 0.0
    %641 = vmatprep.subr.mxu0 0.0
    %642 = vmatpush1.msra.mxu0 0.0
    %643 = vmatprep.subr.mxu0 0.0
    %644 = vmatpush1.msra.mxu0 0.0
    %645 = vmatprep.subr.mxu0 0.0
    %646 = vmatpush1.msra.mxu0 0.0
    %647 = vmatprep.mubr.f32.mxu0 0.0
    %648 = vmatmul.mubr.f32.gmra.mrb[0].mxu0 %v566
    %v649 = vpop.f32.mrb[0].mxu0
    %v650 = vadd.f32 %v571, %v649
    %v651 = vpop.f32.mrb[0].mxu0
    %v652 = vadd.f32 %v575, %v651
    %653 = vdwg.mxu0
    %654 = vmatprep.subr.mxu0 0.0
    %655 = vmatpush1.msra.mxu0 %v269
    %656 = vmatprep.subr.mxu0 0.0
    %657 = vmatpush1.msra.mxu0 %v272
    %658 = vmatprep.subr.mxu0 0.0
    %659 = vmatpush1.msra.mxu0 %v275
    %660 = vmatprep.subr.mxu0 0.0
    %661 = vmatpush1.msra.mxu0 %v278
    %662 = vmatprep.subr.mxu0 0.0
    %663 = vmatpush1.msra.mxu0 %v281
    %664 = vmatprep.subr.mxu0 0.0
    %665 = vmatpush1.msra.mxu0 %v284
    %666 = vmatprep.subr.mxu0 0.0
    %667 = vmatpush1.msra.mxu0 %v287
    %668 = vmatprep.subr.mxu0 0.0
    %669 = vmatpush1.msra.mxu0 %v290
    %670 = vmatprep.subr.mxu0 0.0
    %671 = vmatpush1.msra.mxu0 %v293
    %672 = vmatprep.subr.mxu0 0.0
    %673 = vmatpush1.msra.mxu0 %v296
    %674 = vmatprep.subr.mxu0 0.0
    %675 = vmatpush1.msra.mxu0 %v299
    %676 = vmatprep.subr.mxu0 0.0
    %677 = vmatpush1.msra.mxu0 %v302
    %678 = vmatprep.subr.mxu0 0.0
    %679 = vmatpush1.msra.mxu0 %v305
    %680 = vmatprep.subr.mxu0 0.0
    %681 = vmatpush1.msra.mxu0 %v308
    %682 = vmatprep.subr.mxu0 0.0
    %683 = vmatpush1.msra.mxu0 %v311
    %684 = vmatprep.subr.mxu0 0.0
    %685 = vmatpush1.msra.mxu0 %v314
    %686 = vmatprep.subr.mxu0 0.0
    %687 = vmatpush1.msra.mxu0 0.0
    %688 = vmatprep.subr.mxu0 0.0
    %689 = vmatpush1.msra.mxu0 0.0
    %690 = vmatprep.subr.mxu0 0.0
    %691 = vmatpush1.msra.mxu0 0.0
    %692 = vmatprep.subr.mxu0 0.0
    %693 = vmatpush1.msra.mxu0 0.0
    %694 = vmatprep.subr.mxu0 0.0
    %695 = vmatpush1.msra.mxu0 0.0
    %696 = vmatprep.subr.mxu0 0.0
    %697 = vmatpush1.msra.mxu0 0.0
    %698 = vmatprep.subr.mxu0 0.0
    %699 = vmatpush1.msra.mxu0 0.0
    %700 = vmatprep.subr.mxu0 0.0
    %701 = vmatpush1.msra.mxu0 0.0
    %702 = vmatprep.subr.mxu0 0.0
    %703 = vmatpush1.msra.mxu0 0.0
    %704 = vmatprep.subr.mxu0 0.0
    %705 = vmatpush1.msra.mxu0 0.0
    %706 = vmatprep.subr.mxu0 0.0
    %707 = vmatpush1.msra.mxu0 0.0
    %708 = vmatprep.subr.mxu0 0.0
    %709 = vmatpush1.msra.mxu0 0.0
    %710 = vmatprep.subr.mxu0 0.0
    %711 = vmatpush1.msra.mxu0 0.0
    %712 = vmatprep.subr.mxu0 0.0
    %713 = vmatpush1.msra.mxu0 0.0
    %714 = vmatprep.subr.mxu0 0.0
    %715 = vmatpush1.msra.mxu0 0.0
    %716 = vmatprep.subr.mxu0 0.0
    %717 = vmatpush1.msra.mxu0 0.0
    %718 = vmatprep.mubr.f32.mxu0 0.0
    %719 = vmatmul.mubr.f32.gmra.mrb[0].mxu0 %v566
    %v720 = vpop.f32.mrb[0].mxu0
    %v721 = vadd.f32 %v579, %v720
    %v722 = vpop.f32.mrb[0].mxu0
    %723 = vdwg.mxu0
    %v724 = vadd.f32 %v650, %v466
    %v725 = vxor.u32 %v724, 2147483648
    %v726 = vmul.f32 %v725, 1.442695
    %v727 = vpow.pop %v726
    %v728 = vadd.f32 %v727, 1.0
    %v729 = vrcp.pop %v728
    %v730 = vmul.f32 1.0, %v729
    %v731 = vadd.f32 %v652, %v535
    %v732 = vxor.u32 %v731, 2147483648
    %v733 = vmul.f32 %v732, 1.442695
    %v734 = vpow.pop %v733
    %v735 = vadd.f32 %v734, 1.0
    %v736 = vrcp.pop %v735
    %v737 = vmul.f32 1.0, %v736
    %v739 = vlaneseq
    %v740 = vshrl.u32 %v739, 7
    %v741 = vsub.s32 0, %v740
    %v742 = vrot.slane %v317, %v741
    %v744 = vadd.f32 %v537, %v742
    %v745 = vmul.f32 %v730, %v744
    %v746 = vadd.f32 %v721, %v745
    %v747 = vtanh.pop %v746
    %v748 = vsub.f32 1.0, %v737
    %v749 = vmul.f32 %v748, %v747
    %v750 = vmul.f32 %v737, %v320
    %v751 = vadd.f32 %v749, %v750
    %v752 = vsel %vm322, 1, 0
    %753 = vset.pattern.permute.xlu0 0
    %754 = vperm.xlu0 %753, %v752
    %v755 = vpop.permute.xlu0 %754
    %vm756 = vcmp.eq.s32.totalorder %v755, 1
    %v757 = vsel %vm756, %v751, 0.0
    %758 = vst [vmem:[#allocation10] sm:$0xff] %v757
    %v759 = vsel %vm756, %v566, %v319
    %v760 = vsel %vm756, %v751, %v320
    %s761 = sadd.s32 %s318, 1
    %v762 = vstv %s761
    %vm763 = vcmp.lt.s32.totalorder %v762, %v74
    %s764 = scalar_lea.vmem [#allocation4], 24
    %v765 = vld [vmem:[%s764] sm:$0xff]
    %v766 = vld [vmem:[%s764 + $0x8] sm:$0xff]
    %v767 = vld [vmem:[%s764 + $0x10] sm:$0xff]
    %768 = vmatprep.subr.mxu0 %v76
    %769 = vmatpush1.msra.mxu0 %v75
    %770 = vmatprep.subr.mxu0 %v82
    %771 = vmatpush1.msra.mxu0 %v81
    %772 = vmatprep.subr.mxu0 %v88
    %773 = vmatpush1.msra.mxu0 %v87
    %774 = vmatprep.subr.mxu0 %v94
    %775 = vmatpush1.msra.mxu0 %v93
    %776 = vmatprep.subr.mxu0 %v100
    %777 = vmatpush1.msra.mxu0 %v99
    %778 = vmatprep.subr.mxu0 %v106
    %779 = vmatpush1.msra.mxu0 %v105
    %780 = vmatprep.subr.mxu0 %v112
    %781 = vmatpush1.msra.mxu0 %v111
    %782 = vmatprep.subr.mxu0 %v118
    %783 = vmatpush1.msra.mxu0 %v117
    %784 = vmatprep.subr.mxu0 %v124
    %785 = vmatpush1.msra.mxu0 %v123
    %786 = vmatprep.subr.mxu0 %v130
    %787 = vmatpush1.msra.mxu0 %v129
    %788 = vmatprep.subr.mxu0 %v136
    %789 = vmatpush1.msra.mxu0 %v135
    %790 = vmatprep.subr.mxu0 %v142
    %791 = vmatpush1.msra.mxu0 %v141
    %792 = vmatprep.subr.mxu0 %v148
    %793 = vmatpush1.msra.mxu0 %v147
    %794 = vmatprep.subr.mxu0 %v154
    %795 = vmatpush1.msra.mxu0 %v153
    %796 = vmatprep.subr.mxu0 %v160
    %797 = vmatpush1.msra.mxu0 %v159
    %798 = vmatprep.subr.mxu0 %v166
    %799 = vmatpush1.msra.mxu0 %v165
    %800 = vmatprep.subr.mxu0 %v172
    %801 = vmatpush1.msra.mxu0 %v171
    %802 = vmatprep.subr.mxu0 %v178
    %803 = vmatpush1.msra.mxu0 %v177
    %804 = vmatprep.subr.mxu0 %v184
    %805 = vmatpush1.msra.mxu0 %v183
    %806 = vmatprep.subr.mxu0 %v190
    %807 = vmatpush1.msra.mxu0 %v189
    %808 = vmatprep.subr.mxu0 %v196
    %809 = vmatpush1.msra.mxu0 %v195
    %810 = vmatprep.subr.mxu0 %v202
    %811 = vmatpush1.msra.mxu0 %v201
    %812 = vmatprep.subr.mxu0 %v208
    %813 = vmatpush1.msra.mxu0 %v207
    %814 = vmatprep.subr.mxu0 %v214
    %815 = vmatpush1.msra.mxu0 %v213
    %816 = vmatprep.subr.mxu0 %v220
    %817 = vmatpush1.msra.mxu0 %v219
    %818 = vmatprep.subr.mxu0 %v226
    %819 = vmatpush1.msra.mxu0 %v225
    %820 = vmatprep.subr.mxu0 %v232
    %821 = vmatpush1.msra.mxu0 %v231
    %822 = vmatprep.subr.mxu0 %v238
    %823 = vmatpush1.msra.mxu0 %v237
    %824 = vmatprep.subr.mxu0 %v244
    %825 = vmatpush1.msra.mxu0 %v243
    %826 = vmatprep.subr.mxu0 %v250
    %827 = vmatpush1.msra.mxu0 %v249
    %828 = vmatprep.subr.mxu0 %v256
    %829 = vmatpush1.msra.mxu0 %v255
    %830 = vmatprep.subr.mxu0 %v262
    %831 = vmatpush1.msra.mxu0 %v261
    %832 = vmatprep.mubr.f32.mxu0 %v760
    %833 = vmatmul.mubr.f32.gmra.mrb[0].mxu0 %v759
    %v834 = vpop.f32.mrb[0].mxu0
    %v835 = vadd.f32 0.0, %v834
    %v836 = vpop.f32.mrb[0].mxu0
    %v837 = vadd.f32 0.0, %v836
    %838 = vdwg.mxu0
    %839 = vmatprep.subr.mxu0 %v78
    %840 = vmatpush1.msra.mxu0 %v77
    %841 = vmatprep.subr.mxu0 %v84
    %842 = vmatpush1.msra.mxu0 %v83
    %843 = vmatprep.subr.mxu0 %v90
    %844 = vmatpush1.msra.mxu0 %v89
    %845 = vmatprep.subr.mxu0 %v96
    %846 = vmatpush1.msra.mxu0 %v95
    %847 = vmatprep.subr.mxu0 %v102
    %848 = vmatpush1.msra.mxu0 %v101
    %849 = vmatprep.subr.mxu0 %v108
    %850 = vmatpush1.msra.mxu0 %v107
    %851 = vmatprep.subr.mxu0 %v114
    %852 = vmatpush1.msra.mxu0 %v113
    %853 = vmatprep.subr.mxu0 %v120
    %854 = vmatpush1.msra.mxu0 %v119
    %855 = vmatprep.subr.mxu0 %v126
    %856 = vmatpush1.msra.mxu0 %v125
    %857 = vmatprep.subr.mxu0 %v132
    %858 = vmatpush1.msra.mxu0 %v131
    %859 = vmatprep.subr.mxu0 %v138
    %860 = vmatpush1.msra.mxu0 %v137
    %861 = vmatprep.subr.mxu0 %v144
    %862 = vmatpush1.msra.mxu0 %v143
    %863 = vmatprep.subr.mxu0 %v150
    %864 = vmatpush1.msra.mxu0 %v149
    %865 = vmatprep.subr.mxu0 %v156
    %866 = vmatpush1.msra.mxu0 %v155
    %867 = vmatprep.subr.mxu0 %v162
    %868 = vmatpush1.msra.mxu0 %v161
    %869 = vmatprep.subr.mxu0 %v168
    %870 = vmatpush1.msra.mxu0 %v167
    %871 = vmatprep.subr.mxu0 %v174
    %872 = vmatpush1.msra.mxu0 %v173
    %873 = vmatprep.subr.mxu0 %v180
    %874 = vmatpush1.msra.mxu0 %v179
    %875 = vmatprep.subr.mxu0 %v186
    %876 = vmatpush1.msra.mxu0 %v185
    %877 = vmatprep.subr.mxu0 %v192
    %878 = vmatpush1.msra.mxu0 %v191
    %879 = vmatprep.subr.mxu0 %v198
    %880 = vmatpush1.msra.mxu0 %v197
    %881 = vmatprep.subr.mxu0 %v204
    %882 = vmatpush1.msra.mxu0 %v203
    %883 = vmatprep.subr.mxu0 %v210
    %884 = vmatpush1.msra.mxu0 %v209
    %885 = vmatprep.subr.mxu0 %v216
    %886 = vmatpush1.msra.mxu0 %v215
    %887 = vmatprep.subr.mxu0 %v222
    %888 = vmatpush1.msra.mxu0 %v221
    %889 = vmatprep.subr.mxu0 %v228
    %890 = vmatpush1.msra.mxu0 %v227
    %891 = vmatprep.subr.mxu0 %v234
    %892 = vmatpush1.msra.mxu0 %v233
    %893 = vmatprep.subr.mxu0 %v240
    %894 = vmatpush1.msra.mxu0 %v239
    %895 = vmatprep.subr.mxu0 %v246
    %896 = vmatpush1.msra.mxu0 %v245
    %897 = vmatprep.subr.mxu0 %v252
    %898 = vmatpush1.msra.mxu0 %v251
    %899 = vmatprep.subr.mxu0 %v258
    %900 = vmatpush1.msra.mxu0 %v257
    %901 = vmatprep.subr.mxu0 %v264
    %902 = vmatpush1.msra.mxu0 %v263
    %903 = vmatprep.mubr.f32.mxu0 %v760
    %904 = vmatmul.mubr.f32.gmra.mrb[0].mxu0 %v759
    %v905 = vpop.f32.mrb[0].mxu0
    %v906 = vadd.f32 0.0, %v905
    %v907 = vpop.f32.mrb[0].mxu0
    %v908 = vadd.f32 0.0, %v907
    %909 = vdwg.mxu0
    %910 = vmatprep.subr.mxu0 %v80
    %911 = vmatpush1.msra.mxu0 %v79
    %912 = vmatprep.subr.mxu0 %v86
    %913 = vmatpush1.msra.mxu0 %v85
    %914 = vmatprep.subr.mxu0 %v92
    %915 = vmatpush1.msra.mxu0 %v91
    %916 = vmatprep.subr.mxu0 %v98
    %917 = vmatpush1.msra.mxu0 %v97
    %918 = vmatprep.subr.mxu0 %v104
    %919 = vmatpush1.msra.mxu0 %v103
    %920 = vmatprep.subr.mxu0 %v110
    %921 = vmatpush1.msra.mxu0 %v109
    %922 = vmatprep.subr.mxu0 %v116
    %923 = vmatpush1.msra.mxu0 %v115
    %924 = vmatprep.subr.mxu0 %v122
    %925 = vmatpush1.msra.mxu0 %v121
    %926 = vmatprep.subr.mxu0 %v128
    %927 = vmatpush1.msra.mxu0 %v127
    %928 = vmatprep.subr.mxu0 %v134
    %929 = vmatpush1.msra.mxu0 %v133
    %930 = vmatprep.subr.mxu0 %v140
    %931 = vmatpush1.msra.mxu0 %v139
    %932 = vmatprep.subr.mxu0 %v146
    %933 = vmatpush1.msra.mxu0 %v145
    %934 = vmatprep.subr.mxu0 %v152
    %935 = vmatpush1.msra.mxu0 %v151
    %936 = vmatprep.subr.mxu0 %v158
    %937 = vmatpush1.msra.mxu0 %v157
    %938 = vmatprep.subr.mxu0 %v164
    %939 = vmatpush1.msra.mxu0 %v163
    %940 = vmatprep.subr.mxu0 %v170
    %941 = vmatpush1.msra.mxu0 %v169
    %942 = vmatprep.subr.mxu0 %v176
    %943 = vmatpush1.msra.mxu0 %v175
    %944 = vmatprep.subr.mxu0 %v182
    %945 = vmatpush1.msra.mxu0 %v181
    %946 = vmatprep.subr.mxu0 %v188
    %947 = vmatpush1.msra.mxu0 %v187
    %948 = vmatprep.subr.mxu0 %v194
    %949 = vmatpush1.msra.mxu0 %v193
    %950 = vmatprep.subr.mxu0 %v200
    %951 = vmatpush1.msra.mxu0 %v199
    %952 = vmatprep.subr.mxu0 %v206
    %953 = vmatpush1.msra.mxu0 %v205
    %954 = vmatprep.subr.mxu0 %v212
    %955 = vmatpush1.msra.mxu0 %v211
    %956 = vmatprep.subr.mxu0 %v218
    %957 = vmatpush1.msra.mxu0 %v217
    %958 = vmatprep.subr.mxu0 %v224
    %959 = vmatpush1.msra.mxu0 %v223
    %960 = vmatprep.subr.mxu0 %v230
    %961 = vmatpush1.msra.mxu0 %v229
    %962 = vmatprep.subr.mxu0 %v236
    %963 = vmatpush1.msra.mxu0 %v235
    %964 = vmatprep.subr.mxu0 %v242
    %965 = vmatpush1.msra.mxu0 %v241
    %966 = vmatprep.subr.mxu0 %v248
    %967 = vmatpush1.msra.mxu0 %v247
    %968 = vmatprep.subr.mxu0 %v254
    %969 = vmatpush1.msra.mxu0 %v253
    %970 = vmatprep.subr.mxu0 %v260
    %971 = vmatpush1.msra.mxu0 %v259
    %972 = vmatprep.subr.mxu0 %v266
    %973 = vmatpush1.msra.mxu0 %v265
    %974 = vmatprep.mubr.f32.mxu0 %v760
    %975 = vmatmul.mubr.f32.gmra.mrb[0].mxu0 %v759
    %v976 = vpop.f32.mrb[0].mxu0
    %v977 = vadd.f32 0.0, %v976
    %v978 = vpop.f32.mrb[0].mxu0
    %v979 = vadd.f32 0.0, %v978
    %980 = vdwg.mxu0
    %v981 = vadd.f32 %v765, %v835
    %v982 = vxor.u32 %v981, 2147483648
    %v983 = vmul.f32 %v982, 1.442695
    %v984 = vpow.pop %v983
    %v985 = vadd.f32 %v984, 1.0
    %v986 = vrcp.pop %v985
    %v987 = vmul.f32 1.0, %v986
    %v988 = vadd.f32 %v766, %v837
    %v989 = vxor.u32 %v988, 2147483648
    %v990 = vmul.f32 %v989, 1.442695
    %v991 = vpow.pop %v990
    %v992 = vadd.f32 %v991, 1.0
    %v993 = vrcp.pop %v992
    %v994 = vmul.f32 1.0, %v993
    %v995 = vadd.f32 %v906, %v557
    %v996 = vmul.f32 %v987, %v995
    %v997 = vadd.f32 %v767, %v996
    %v998 = vtanh.pop %v997
    %v999 = vsub.f32 1.0, %v994
    %v1000 = vmul.f32 %v999, %v998
    %v1001 = vmul.f32 %v994, %v759
    %v1002 = vadd.f32 %v1000, %v1001
    %1003 = vmatprep.subr.mxu0 %v268
    %1004 = vmatpush1.msra.mxu0 %v267
    %1005 = vmatprep.subr.mxu0 %v271
    %1006 = vmatpush1.msra.mxu0 %v270
    %1007 = vmatprep.subr.mxu0 %v274
    %1008 = vmatpush1.msra.mxu0 %v273
    %1009 = vmatprep.subr.mxu0 %v277
    %1010 = vmatpush1.msra.mxu0 %v276
    %1011 = vmatprep.subr.mxu0 %v280
    %1012 = vmatpush1.msra.mxu0 %v279
    %1013 = vmatprep.subr.mxu0 %v283
    %1014 = vmatpush1.msra.mxu0 %v282
    %1015 = vmatprep.subr.mxu0 %v286
    %1016 = vmatpush1.msra.mxu0 %v285
    %1017 = vmatprep.subr.mxu0 %v289
    %1018 = vmatpush1.msra.mxu0 %v288
    %1019 = vmatprep.subr.mxu0 %v292
    %1020 = vmatpush1.msra.mxu0 %v291
    %1021 = vmatprep.subr.mxu0 %v295
    %1022 = vmatpush1.msra.mxu0 %v294
    %1023 = vmatprep.subr.mxu0 %v298
    %1024 = vmatpush1.msra.mxu0 %v297
    %1025 = vmatprep.subr.mxu0 %v301
    %1026 = vmatpush1.msra.mxu0 %v300
    %1027 = vmatprep.subr.mxu0 %v304
    %1028 = vmatpush1.msra.mxu0 %v303
    %1029 = vmatprep.subr.mxu0 %v307
    %1030 = vmatpush1.msra.mxu0 %v306
    %1031 = vmatprep.subr.mxu0 %v310
    %1032 = vmatpush1.msra.mxu0 %v309
    %1033 = vmatprep.subr.mxu0 %v313
    %1034 = vmatpush1.msra.mxu0 %v312
    %1035 = vmatprep.subr.mxu0 0.0
    %1036 = vmatpush1.msra.mxu0 0.0
    %1037 = vmatprep.subr.mxu0 0.0
    %1038 = vmatpush1.msra.mxu0 0.0
    %1039 = vmatprep.subr.mxu0 0.0
    %1040 = vmatpush1.msra.mxu0 0.0
    %1041 = vmatprep.subr.mxu0 0.0
    %1042 = vmatpush1.msra.mxu0 0.0
    %1043 = vmatprep.subr.mxu0 0.0
    %1044 = vmatpush1.msra.mxu0 0.0
    %1045 = vmatprep.subr.mxu0 0.0
    %1046 = vmatpush1.msra.mxu0 0.0
    %1047 = vmatprep.subr.mxu0 0.0
    %1048 = vmatpush1.msra.mxu0 0.0
    %1049 = vmatprep.subr.mxu0 0.0
    %1050 = vmatpush1.msra.mxu0 0.0
    %1051 = vmatprep.subr.mxu0 0.0
    %1052 = vmatpush1.msra.mxu0 0.0
    %1053 = vmatprep.subr.mxu0 0.0
    %1054 = vmatpush1.msra.mxu0 0.0
    %1055 = vmatprep.subr.mxu0 0.0
    %1056 = vmatpush1.msra.mxu0 0.0
    %1057 = vmatprep.subr.mxu0 0.0
    %1058 = vmatpush1.msra.mxu0 0.0
    %1059 = vmatprep.subr.mxu0 0.0
    %1060 = vmatpush1.msra.mxu0 0.0
    %1061 = vmatprep.subr.mxu0 0.0
    %1062 = vmatpush1.msra.mxu0 0.0
    %1063 = vmatprep.subr.mxu0 0.0
    %1064 = vmatpush1.msra.mxu0 0.0
    %1065 = vmatprep.subr.mxu0 0.0
    %1066 = vmatpush1.msra.mxu0 0.0
    %1067 = vmatprep.mubr.f32.mxu0 0.0
    %1068 = vmatmul.mubr.f32.gmra.mrb[0].mxu0 %v1002
    %v1069 = vpop.f32.mrb[0].mxu0
    %v1070 = vadd.f32 %v571, %v1069
    %v1071 = vpop.f32.mrb[0].mxu0
    %v1072 = vadd.f32 %v575, %v1071
    %1073 = vdwg.mxu0
    %1074 = vmatprep.subr.mxu0 0.0
    %1075 = vmatpush1.msra.mxu0 %v269
    %1076 = vmatprep.subr.mxu0 0.0
    %1077 = vmatpush1.msra.mxu0 %v272
    %1078 = vmatprep.subr.mxu0 0.0
    %1079 = vmatpush1.msra.mxu0 %v275
    %1080 = vmatprep.subr.mxu0 0.0
    %1081 = vmatpush1.msra.mxu0 %v278
    %1082 = vmatprep.subr.mxu0 0.0
    %1083 = vmatpush1.msra.mxu0 %v281
    %1084 = vmatprep.subr.mxu0 0.0
    %1085 = vmatpush1.msra.mxu0 %v284
    %1086 = vmatprep.subr.mxu0 0.0
    %1087 = vmatpush1.msra.mxu0 %v287
    %1088 = vmatprep.subr.mxu0 0.0
    %1089 = vmatpush1.msra.mxu0 %v290
    %1090 = vmatprep.subr.mxu0 0.0
    %1091 = vmatpush1.msra.mxu0 %v293
    %1092 = vmatprep.subr.mxu0 0.0
    %1093 = vmatpush1.msra.mxu0 %v296
    %1094 = vmatprep.subr.mxu0 0.0
    %1095 = vmatpush1.msra.mxu0 %v299
    %1096 = vmatprep.subr.mxu0 0.0
    %1097 = vmatpush1.msra.mxu0 %v302
    %1098 = vmatprep.subr.mxu0 0.0
    %1099 = vmatpush1.msra.mxu0 %v305
    %1100 = vmatprep.subr.mxu0 0.0
    %1101 = vmatpush1.msra.mxu0 %v308
    %1102 = vmatprep.subr.mxu0 0.0
    %1103 = vmatpush1.msra.mxu0 %v311
    %1104 = vmatprep.subr.mxu0 0.0
    %1105 = vmatpush1.msra.mxu0 %v314
    %1106 = vmatprep.subr.mxu0 0.0
    %1107 = vmatpush1.msra.mxu0 0.0
    %1108 = vmatprep.subr.mxu0 0.0
    %1109 = vmatpush1.msra.mxu0 0.0
    %1110 = vmatprep.subr.mxu0 0.0
    %1111 = vmatpush1.msra.mxu0 0.0
    %1112 = vmatprep.subr.mxu0 0.0
    %1113 = vmatpush1.msra.mxu0 0.0
    %1114 = vmatprep.subr.mxu0 0.0
    %1115 = vmatpush1.msra.mxu0 0.0
    %1116 = vmatprep.subr.mxu0 0.0
    %1117 = vmatpush1.msra.mxu0 0.0
    %1118 = vmatprep.subr.mxu0 0.0
    %1119 = vmatpush1.msra.mxu0 0.0
    %1120 = vmatprep.subr.mxu0 0.0
    %1121 = vmatpush1.msra.mxu0 0.0
    %1122 = vmatprep.subr.mxu0 0.0
    %1123 = vmatpush1.msra.mxu0 0.0
    %1124 = vmatprep.subr.mxu0 0.0
    %1125 = vmatpush1.msra.mxu0 0.0
    %1126 = vmatprep.subr.mxu0 0.0
    %1127 = vmatpush1.msra.mxu0 0.0
    %1128 = vmatprep.subr.mxu0 0.0
    %1129 = vmatpush1.msra.mxu0 0.0
    %1130 = vmatprep.subr.mxu0 0.0
    %1131 = vmatpush1.msra.mxu0 0.0
    %1132 = vmatprep.subr.mxu0 0.0
    %1133 = vmatpush1.msra.mxu0 0.0
    %1134 = vmatprep.subr.mxu0 0.0
    %1135 = vmatpush1.msra.mxu0 0.0
    %1136 = vmatprep.subr.mxu0 0.0
    %1137 = vmatpush1.msra.mxu0 0.0
    %1138 = vmatprep.mubr.f32.mxu0 0.0
    %1139 = vmatmul.mubr.f32.gmra.mrb[0].mxu0 %v1002
    %v1140 = vpop.f32.mrb[0].mxu0
    %v1141 = vadd.f32 %v579, %v1140
    %v1142 = vpop.f32.mrb[0].mxu0
    %1143 = vdwg.mxu0
    %v1144 = vadd.f32 %v1070, %v908
    %v1145 = vxor.u32 %v1144, 2147483648
    %v1146 = vmul.f32 %v1145, 1.442695
    %v1147 = vpow.pop %v1146
    %v1148 = vadd.f32 %v1147, 1.0
    %v1149 = vrcp.pop %v1148
    %v1150 = vmul.f32 1.0, %v1149
    %v1151 = vadd.f32 %v1072, %v977
    %v1152 = vxor.u32 %v1151, 2147483648
    %v1153 = vmul.f32 %v1152, 1.442695
    %v1154 = vpow.pop %v1153
    %v1155 = vadd.f32 %v1154, 1.0
    %v1156 = vrcp.pop %v1155
    %v1157 = vmul.f32 1.0, %v1156
    %v1158 = vadd.f32 %v979, %v742
    %v1159 = vmul.f32 %v1150, %v1158
    %v1160 = vadd.f32 %v1141, %v1159
    %v1161 = vtanh.pop %v1160
    %v1162 = vsub.f32 1.0, %v1157
    %v1163 = vmul.f32 %v1162, %v1161
    %v1164 = vmul.f32 %v1157, %v760
    %v1165 = vadd.f32 %v1163, %v1164
    %v1166 = vsel %vm763, 1, 0
    %1167 = vset.pattern.permute.xlu0 0
    %1168 = vperm.xlu0 %1167, %v1166
    %v1169 = vpop.permute.xlu0 %1168
    %vm1170 = vcmp.eq.s32.totalorder %v1169, 1
    %v1171 = vsel %vm1170, %v1165, 0.0
    %s1172 = scalar_lea.vmem [#allocation10], 8
    %1173 = vst [vmem:[%s1172] sm:$0xff] %v1171
    %v1174 = vsel %vm1170, %v1002, %v759
    %v1175 = vsel %vm1170, %v1165, %v760
    %s1176 = sadd.s32 %s318, 2
    %v1177 = vstv %s1176
    %vm1178 = vcmp.lt.s32.totalorder %v1177, %v74
    %s1179 = scalar_lea.vmem [#allocation4], 48
    %v1180 = vld [vmem:[%s1179] sm:$0xff]
    %v1181 = vld [vmem:[%s1179 + $0x8] sm:$0xff]
    %v1182 = vld [vmem:[%s1179 + $0x10] sm:$0xff]
    %1183 = vmatprep.subr.mxu0 %v76
    %1184 = vmatpush1.msra.mxu0 %v75
    %1185 = vmatprep.subr.mxu0 %v82
    %1186 = vmatpush1.msra.mxu0 %v81
    %1187 = vmatprep.subr.mxu0 %v88
    %1188 = vmatpush1.msra.mxu0 %v87
    %1189 = vmatprep.subr.mxu0 %v94
    %1190 = vmatpush1.msra.mxu0 %v93
    %1191 = vmatprep.subr.mxu0 %v100
    %1192 = vmatpush1.msra.mxu0 %v99
    %1193 = vmatprep.subr.mxu0 %v106
    %1194 = vmatpush1.msra.mxu0 %v105
    %1195 = vmatprep.subr.mxu0 %v112
    %1196 = vmatpush1.msra.mxu0 %v111
    %1197 = vmatprep.subr.mxu0 %v118
    %1198 = vmatpush1.msra.mxu0 %v117
    %1199 = vmatprep.subr.mxu0 %v124
    %1200 = vmatpush1.msra.mxu0 %v123
    %1201 = vmatprep.subr.mxu0 %v130
    %1202 = vmatpush1.msra.mxu0 %v129
    %1203 = vmatprep.subr.mxu0 %v136
    %1204 = vmatpush1.msra.mxu0 %v135
    %1205 = vmatprep.subr.mxu0 %v142
    %1206 = vmatpush1.msra.mxu0 %v141
    %1207 = vmatprep.subr.mxu0 %v148
    %1208 = vmatpush1.msra.mxu0 %v147
    %1209 = vmatprep.subr.mxu0 %v154
    %1210 = vmatpush1.msra.mxu0 %v153
    %1211 = vmatprep.subr.mxu0 %v160
    %1212 = vmatpush1.msra.mxu0 %v159
    %1213 = vmatprep.subr.mxu0 %v166
    %1214 = vmatpush1.msra.mxu0 %v165
    %1215 = vmatprep.subr.mxu0 %v172
    %1216 = vmatpush1.msra.mxu0 %v171
    %1217 = vmatprep.subr.mxu0 %v178
    %1218 = vmatpush1.msra.mxu0 %v177
    %1219 = vmatprep.subr.mxu0 %v184
    %1220 = vmatpush1.msra.mxu0 %v183
    %1221 = vmatprep.subr.mxu0 %v190
    %1222 = vmatpush1.msra.mxu0 %v189
    %1223 = vmatprep.subr.mxu0 %v196
    %1224 = vmatpush1.msra.mxu0 %v195
    %1225 = vmatprep.subr.mxu0 %v202
    %1226 = vmatpush1.msra.mxu0 %v201
    %1227 = vmatprep.subr.mxu0 %v208
    %1228 = vmatpush1.msra.mxu0 %v207
    %1229 = vmatprep.subr.mxu0 %v214
    %1230 = vmatpush1.msra.mxu0 %v213
    %1231 = vmatprep.subr.mxu0 %v220
    %1232 = vmatpush1.msra.mxu0 %v219
    %1233 = vmatprep.subr.mxu0 %v226
    %1234 = vmatpush1.msra.mxu0 %v225
    %1235 = vmatprep.subr.mxu0 %v232
    %1236 = vmatpush1.msra.mxu0 %v231
    %1237 = vmatprep.subr.mxu0 %v238
    %1238 = vmatpush1.msra.mxu0 %v237
    %1239 = vmatprep.subr.mxu0 %v244
    %1240 = vmatpush1.msra.mxu0 %v243
    %1241 = vmatprep.subr.mxu0 %v250
    %1242 = vmatpush1.msra.mxu0 %v249
    %1243 = vmatprep.subr.mxu0 %v256
    %1244 = vmatpush1.msra.mxu0 %v255
    %1245 = vmatprep.subr.mxu0 %v262
    %1246 = vmatpush1.msra.mxu0 %v261
    %1247 = vmatprep.mubr.f32.mxu0 %v1175
    %1248 = vmatmul.mubr.f32.gmra.mrb[0].mxu0 %v1174
    %v1249 = vpop.f32.mrb[0].mxu0
    %v1250 = vadd.f32 0.0, %v1249
    %v1251 = vpop.f32.mrb[0].mxu0
    %v1252 = vadd.f32 0.0, %v1251
    %1253 = vdwg.mxu0
    %1254 = vmatprep.subr.mxu0 %v78
    %1255 = vmatpush1.msra.mxu0 %v77
    %1256 = vmatprep.subr.mxu0 %v84
    %1257 = vmatpush1.msra.mxu0 %v83
    %1258 = vmatprep.subr.mxu0 %v90
    %1259 = vmatpush1.msra.mxu0 %v89
    %1260 = vmatprep.subr.mxu0 %v96
    %1261 = vmatpush1.msra.mxu0 %v95
    %1262 = vmatprep.subr.mxu0 %v102
    %1263 = vmatpush1.msra.mxu0 %v101
    %1264 = vmatprep.subr.mxu0 %v108
    %1265 = vmatpush1.msra.mxu0 %v107
    %1266 = vmatprep.subr.mxu0 %v114
    %1267 = vmatpush1.msra.mxu0 %v113
    %1268 = vmatprep.subr.mxu0 %v120
    %1269 = vmatpush1.msra.mxu0 %v119
    %1270 = vmatprep.subr.mxu0 %v126
    %1271 = vmatpush1.msra.mxu0 %v125
    %1272 = vmatprep.subr.mxu0 %v132
    %1273 = vmatpush1.msra.mxu0 %v131
    %1274 = vmatprep.subr.mxu0 %v138
    %1275 = vmatpush1.msra.mxu0 %v137
    %1276 = vmatprep.subr.mxu0 %v144
    %1277 = vmatpush1.msra.mxu0 %v143
    %1278 = vmatprep.subr.mxu0 %v150
    %1279 = vmatpush1.msra.mxu0 %v149
    %1280 = vmatprep.subr.mxu0 %v156
    %1281 = vmatpush1.msra.mxu0 %v155
    %1282 = vmatprep.subr.mxu0 %v162
    %1283 = vmatpush1.msra.mxu0 %v161
    %1284 = vmatprep.subr.mxu0 %v168
    %1285 = vmatpush1.msra.mxu0 %v167
    %1286 = vmatprep.subr.mxu0 %v174
    %1287 = vmatpush1.msra.mxu0 %v173
    %1288 = vmatprep.subr.mxu0 %v180
    %1289 = vmatpush1.msra.mxu0 %v179
    %1290 = vmatprep.subr.mxu0 %v186
    %1291 = vmatpush1.msra.mxu0 %v185
    %1292 = vmatprep.subr.mxu0 %v192
    %1293 = vmatpush1.msra.mxu0 %v191
    %1294 = vmatprep.subr.mxu0 %v198
    %1295 = vmatpush1.msra.mxu0 %v197
    %1296 = vmatprep.subr.mxu0 %v204
    %1297 = vmatpush1.msra.mxu0 %v203
    %1298 = vmatprep.subr.mxu0 %v210
    %1299 = vmatpush1.msra.mxu0 %v209
    %1300 = vmatprep.subr.mxu0 %v216
    %1301 = vmatpush1.msra.mxu0 %v215
    %1302 = vmatprep.subr.mxu0 %v222
    %1303 = vmatpush1.msra.mxu0 %v221
    %1304 = vmatprep.subr.mxu0 %v228
    %1305 = vmatpush1.msra.mxu0 %v227
    %1306 = vmatprep.subr.mxu0 %v234
    %1307 = vmatpush1.msra.mxu0 %v233
    %1308 = vmatprep.subr.mxu0 %v240
    %1309 = vmatpush1.msra.mxu0 %v239
    %1310 = vmatprep.subr.mxu0 %v246
    %1311 = vmatpush1.msra.mxu0 %v245
    %1312 = vmatprep.subr.mxu0 %v252
    %1313 = vmatpush1.msra.mxu0 %v251
    %1314 = vmatprep.subr.mxu0 %v258
    %1315 = vmatpush1.msra.mxu0 %v257
    %1316 = vmatprep.subr.mxu0 %v264
    %1317 = vmatpush1.msra.mxu0 %v263
    %1318 = vmatprep.mubr.f32.mxu0 %v1175
    %1319 = vmatmul.mubr.f32.gmra.mrb[0].mxu0 %v1174
    %v1320 = vpop.f32.mrb[0].mxu0
    %v1321 = vadd.f32 0.0, %v1320
    %v1322 = vpop.f32.mrb[0].mxu0
    %v1323 = vadd.f32 0.0, %v1322
    %1324 = vdwg.mxu0
    %1325 = vmatprep.subr.mxu0 %v80
    %1326 = vmatpush1.msra.mxu0 %v79
    %1327 = vmatprep.subr.mxu0 %v86
    %1328 = vmatpush1.msra.mxu0 %v85
    %1329 = vmatprep.subr.mxu0 %v92
    %1330 = vmatpush1.msra.mxu0 %v91
    %1331 = vmatprep.subr.mxu0 %v98
    %1332 = vmatpush1.msra.mxu0 %v97
    %1333 = vmatprep.subr.mxu0 %v104
    %1334 = vmatpush1.msra.mxu0 %v103
    %1335 = vmatprep.subr.mxu0 %v110
    %1336 = vmatpush1.msra.mxu0 %v109
    %1337 = vmatprep.subr.mxu0 %v116
    %1338 = vmatpush1.msra.mxu0 %v115
    %1339 = vmatprep.subr.mxu0 %v122
    %1340 = vmatpush1.msra.mxu0 %v121
    %1341 = vmatprep.subr.mxu0 %v128
    %1342 = vmatpush1.msra.mxu0 %v127
    %1343 = vmatprep.subr.mxu0 %v134
    %1344 = vmatpush1.msra.mxu0 %v133
    %1345 = vmatprep.subr.mxu0 %v140
    %1346 = vmatpush1.msra.mxu0 %v139
    %1347 = vmatprep.subr.mxu0 %v146
    %1348 = vmatpush1.msra.mxu0 %v145
    %1349 = vmatprep.subr.mxu0 %v152
    %1350 = vmatpush1.msra.mxu0 %v151
    %1351 = vmatprep.subr.mxu0 %v158
    %1352 = vmatpush1.msra.mxu0 %v157
    %1353 = vmatprep.subr.mxu0 %v164
    %1354 = vmatpush1.msra.mxu0 %v163
    %1355 = vmatprep.subr.mxu0 %v170
    %1356 = vmatpush1.msra.mxu0 %v169
    %1357 = vmatprep.subr.mxu0 %v176
    %1358 = vmatpush1.msra.mxu0 %v175
    %1359 = vmatprep.subr.mxu0 %v182
    %1360 = vmatpush1.msra.mxu0 %v181
    %1361 = vmatprep.subr.mxu0 %v188
    %1362 = vmatpush1.msra.mxu0 %v187
    %1363 = vmatprep.subr.mxu0 %v194
    %1364 = vmatpush1.msra.mxu0 %v193
    %1365 = vmatprep.subr.mxu0 %v200
    %1366 = vmatpush1.msra.mxu0 %v199
    %1367 = vmatprep.subr.mxu0 %v206
    %1368 = vmatpush1.msra.mxu0 %v205
    %1369 = vmatprep.subr.mxu0 %v212
    %1370 = vmatpush1.msra.mxu0 %v211
    %1371 = vmatprep.subr.mxu0 %v218
    %1372 = vmatpush1.msra.mxu0 %v217
    %1373 = vmatprep.subr.mxu0 %v224
    %1374 = vmatpush1.msra.mxu0 %v223
    %1375 = vmatprep.subr.mxu0 %v230
    %1376 = vmatpush1.msra.mxu0 %v229
    %1377 = vmatprep.subr.mxu0 %v236
    %1378 = vmatpush1.msra.mxu0 %v235
    %1379 = vmatprep.subr.mxu0 %v242
    %1380 = vmatpush1.msra.mxu0 %v241
    %1381 = vmatprep.subr.mxu0 %v248
    %1382 = vmatpush1.msra.mxu0 %v247
    %1383 = vmatprep.subr.mxu0 %v254
    %1384 = vmatpush1.msra.mxu0 %v253
    %1385 = vmatprep.subr.mxu0 %v260
    %1386 = vmatpush1.msra.mxu0 %v259
    %1387 = vmatprep.subr.mxu0 %v266
    %1388 = vmatpush1.msra.mxu0 %v265
    %1389 = vmatprep.mubr.f32.mxu0 %v1175
    %1390 = vmatmul.mubr.f32.gmra.mrb[0].mxu0 %v1174
    %v1391 = vpop.f32.mrb[0].mxu0
    %v1392 = vadd.f32 0.0, %v1391
    %v1393 = vpop.f32.mrb[0].mxu0
    %v1394 = vadd.f32 0.0, %v1393
    %1395 = vdwg.mxu0
    %v1396 = vadd.f32 %v1180, %v1250
    %v1397 = vxor.u32 %v1396, 2147483648
    %v1398 = vmul.f32 %v1397, 1.442695
    %v1399 = vpow.pop %v1398
    %v1400 = vadd.f32 %v1399, 1.0
    %v1401 = vrcp.pop %v1400
    %v1402 = vmul.f32 1.0, %v1401
    %v1403 = vadd.f32 %v1181, %v1252
    %v1404 = vxor.u32 %v1403, 2147483648
    %v1405 = vmul.f32 %v1404, 1.442695
    %v1406 = vpow.pop %v1405
    %v1407 = vadd.f32 %v1406, 1.0
    %v1408 = vrcp.pop %v1407
    %v1409 = vmul.f32 1.0, %v1408
    %v1410 = vadd.f32 %v1321, %v557
    %v1411 = vmul.f32 %v1402, %v1410
    %v1412 = vadd.f32 %v1182, %v1411
    %v1413 = vtanh.pop %v1412
    %v1414 = vsub.f32 1.0, %v1409
    %v1415 = vmul.f32 %v1414, %v1413
    %v1416 = vmul.f32 %v1409, %v1174
    %v1417 = vadd.f32 %v1415, %v1416
    %1418 = vmatprep.subr.mxu0 %v268
    %1419 = vmatpush1.msra.mxu0 %v267
    %1420 = vmatprep.subr.mxu0 %v271
    %1421 = vmatpush1.msra.mxu0 %v270
    %1422 = vmatprep.subr.mxu0 %v274
    %1423 = vmatpush1.msra.mxu0 %v273
    %1424 = vmatprep.subr.mxu0 %v277
    %1425 = vmatpush1.msra.mxu0 %v276
    %1426 = vmatprep.subr.mxu0 %v280
    %1427 = vmatpush1.msra.mxu0 %v279
    %1428 = vmatprep.subr.mxu0 %v283
    %1429 = vmatpush1.msra.mxu0 %v282
    %1430 = vmatprep.subr.mxu0 %v286
    %1431 = vmatpush1.msra.mxu0 %v285
    %1432 = vmatprep.subr.mxu0 %v289
    %1433 = vmatpush1.msra.mxu0 %v288
    %1434 = vmatprep.subr.mxu0 %v292
    %1435 = vmatpush1.msra.mxu0 %v291
    %1436 = vmatprep.subr.mxu0 %v295
    %1437 = vmatpush1.msra.mxu0 %v294
    %1438 = vmatprep.subr.mxu0 %v298
    %1439 = vmatpush1.msra.mxu0 %v297
    %1440 = vmatprep.subr.mxu0 %v301
    %1441 = vmatpush1.msra.mxu0 %v300
    %1442 = vmatprep.subr.mxu0 %v304
    %1443 = vmatpush1.msra.mxu0 %v303
    %1444 = vmatprep.subr.mxu0 %v307
    %1445 = vmatpush1.msra.mxu0 %v306
    %1446 = vmatprep.subr.mxu0 %v310
    %1447 = vmatpush1.msra.mxu0 %v309
    %1448 = vmatprep.subr.mxu0 %v313
    %1449 = vmatpush1.msra.mxu0 %v312
    %1450 = vmatprep.subr.mxu0 0.0
    %1451 = vmatpush1.msra.mxu0 0.0
    %1452 = vmatprep.subr.mxu0 0.0
    %1453 = vmatpush1.msra.mxu0 0.0
    %1454 = vmatprep.subr.mxu0 0.0
    %1455 = vmatpush1.msra.mxu0 0.0
    %1456 = vmatprep.subr.mxu0 0.0
    %1457 = vmatpush1.msra.mxu0 0.0
    %1458 = vmatprep.subr.mxu0 0.0
    %1459 = vmatpush1.msra.mxu0 0.0
    %1460 = vmatprep.subr.mxu0 0.0
    %1461 = vmatpush1.msra.mxu0 0.0
    %1462 = vmatprep.subr.mxu0 0.0
    %1463 = vmatpush1.msra.mxu0 0.0
    %1464 = vmatprep.subr.mxu0 0.0
    %1465 = vmatpush1.msra.mxu0 0.0
    %1466 = vmatprep.subr.mxu0 0.0
    %1467 = vmatpush1.msra.mxu0 0.0
    %1468 = vmatprep.subr.mxu0 0.0
    %1469 = vmatpush1.msra.mxu0 0.0
    %1470 = vmatprep.subr.mxu0 0.0
    %1471 = vmatpush1.msra.mxu0 0.0
    %1472 = vmatprep.subr.mxu0 0.0
    %1473 = vmatpush1.msra.mxu0 0.0
    %1474 = vmatprep.subr.mxu0 0.0
    %1475 = vmatpush1.msra.mxu0 0.0
    %1476 = vmatprep.subr.mxu0 0.0
    %1477 = vmatpush1.msra.mxu0 0.0
    %1478 = vmatprep.subr.mxu0 0.0
    %1479 = vmatpush1.msra.mxu0 0.0
    %1480 = vmatprep.subr.mxu0 0.0
    %1481 = vmatpush1.msra.mxu0 0.0
    %1482 = vmatprep.mubr.f32.mxu0 0.0
    %1483 = vmatmul.mubr.f32.gmra.mrb[0].mxu0 %v1417
    %v1484 = vpop.f32.mrb[0].mxu0
    %v1485 = vadd.f32 %v571, %v1484
    %v1486 = vpop.f32.mrb[0].mxu0
    %v1487 = vadd.f32 %v575, %v1486
    %1488 = vdwg.mxu0
    %1489 = vmatprep.subr.mxu0 0.0
    %1490 = vmatpush1.msra.mxu0 %v269
    %1491 = vmatprep.subr.mxu0 0.0
    %1492 = vmatpush1.msra.mxu0 %v272
    %1493 = vmatprep.subr.mxu0 0.0
    %1494 = vmatpush1.msra.mxu0 %v275
    %1495 = vmatprep.subr.mxu0 0.0
    %1496 = vmatpush1.msra.mxu0 %v278
    %1497 = vmatprep.subr.mxu0 0.0
    %1498 = vmatpush1.msra.mxu0 %v281
    %1499 = vmatprep.subr.mxu0 0.0
    %1500 = vmatpush1.msra.mxu0 %v284
    %1501 = vmatprep.subr.mxu0 0.0
    %1502 = vmatpush1.msra.mxu0 %v287
    %1503 = vmatprep.subr.mxu0 0.0
    %1504 = vmatpush1.msra.mxu0 %v290
    %1505 = vmatprep.subr.mxu0 0.0
    %1506 = vmatpush1.msra.mxu0 %v293
    %1507 = vmatprep.subr.mxu0 0.0
    %1508 = vmatpush1.msra.mxu0 %v296
    %1509 = vmatprep.subr.mxu0 0.0
    %1510 = vmatpush1.msra.mxu0 %v299
    %1511 = vmatprep.subr.mxu0 0.0
    %1512 = vmatpush1.msra.mxu0 %v302
    %1513 = vmatprep.subr.mxu0 0.0
    %1514 = vmatpush1.msra.mxu0 %v305
    %1515 = vmatprep.subr.mxu0 0.0
    %1516 = vmatpush1.msra.mxu0 %v308
    %1517 = vmatprep.subr.mxu0 0.0
    %1518 = vmatpush1.msra.mxu0 %v311
    %1519 = vmatprep.subr.mxu0 0.0
    %1520 = vmatpush1.msra.mxu0 %v314
    %1521 = vmatprep.subr.mxu0 0.0
    %1522 = vmatpush1.msra.mxu0 0.0
    %1523 = vmatprep.subr.mxu0 0.0
    %1524 = vmatpush1.msra.mxu0 0.0
    %1525 = vmatprep.subr.mxu0 0.0
    %1526 = vmatpush1.msra.mxu0 0.0
    %1527 = vmatprep.subr.mxu0 0.0
    %1528 = vmatpush1.msra.mxu0 0.0
    %1529 = vmatprep.subr.mxu0 0.0
    %1530 = vmatpush1.msra.mxu0 0.0
    %1531 = vmatprep.subr.mxu0 0.0
    %1532 = vmatpush1.msra.mxu0 0.0
    %1533 = vmatprep.subr.mxu0 0.0
    %1534 = vmatpush1.msra.mxu0 0.0
    %1535 = vmatprep.subr.mxu0 0.0
    %1536 = vmatpush1.msra.mxu0 0.0
    %1537 = vmatprep.subr.mxu0 0.0
    %1538 = vmatpush1.msra.mxu0 0.0
    %1539 = vmatprep.subr.mxu0 0.0
    %1540 = vmatpush1.msra.mxu0 0.0
    %1541 = vmatprep.subr.mxu0 0.0
    %1542 = vmatpush1.msra.mxu0 0.0
    %1543 = vmatprep.subr.mxu0 0.0
    %1544 = vmatpush1.msra.mxu0 0.0
    %1545 = vmatprep.subr.mxu0 0.0
    %1546 = vmatpush1.msra.mxu0 0.0
    %1547 = vmatprep.subr.mxu0 0.0
    %1548 = vmatpush1.msra.mxu0 0.0
    %1549 = vmatprep.subr.mxu0 0.0
    %1550 = vmatpush1.msra.mxu0 0.0
    %1551 = vmatprep.subr.mxu0 0.0
    %1552 = vmatpush1.msra.mxu0 0.0
    %1553 = vmatprep.mubr.f32.mxu0 0.0
    %1554 = vmatmul.mubr.f32.gmra.mrb[0].mxu0 %v1417
    %v1555 = vpop.f32.mrb[0].mxu0
    %v1556 = vadd.f32 %v579, %v1555
    %v1557 = vpop.f32.mrb[0].mxu0
    %1558 = vdwg.mxu0
    %v1559 = vadd.f32 %v1485, %v1323
    %v1560 = vxor.u32 %v1559, 2147483648
    %v1561 = vmul.f32 %v1560, 1.442695
    %v1562 = vpow.pop %v1561
    %v1563 = vadd.f32 %v1562, 1.0
    %v1564 = vrcp.pop %v1563
    %v1565 = vmul.f32 1.0, %v1564
    %v1566 = vadd.f32 %v1487, %v1392
    %v1567 = vxor.u32 %v1566, 2147483648
    %v1568 = vmul.f32 %v1567, 1.442695
    %v1569 = vpow.pop %v1568
    %v1570 = vadd.f32 %v1569, 1.0
    %v1571 = vrcp.pop %v1570
    %v1572 = vmul.f32 1.0, %v1571
    %v1573 = vadd.f32 %v1394, %v742
    %v1574 = vmul.f32 %v1565, %v1573
    %v1575 = vadd.f32 %v1556, %v1574
    %v1576 = vtanh.pop %v1575
    %v1577 = vsub.f32 1.0, %v1572
    %v1578 = vmul.f32 %v1577, %v1576
    %v1579 = vmul.f32 %v1572, %v1175
    %v1580 = vadd.f32 %v1578, %v1579
    %v1581 = vsel %vm1178, 1, 0
    %1582 = vset.pattern.permute.xlu0 0
    %1583 = vperm.xlu0 %1582, %v1581
    %v1584 = vpop.permute.xlu0 %1583
    %vm1585 = vcmp.eq.s32.totalorder %v1584, 1
    %v1586 = vsel %vm1585, %v1580, 0.0
    %s1587 = scalar_lea.vmem [#allocation10], 16
    %1588 = vst [vmem:[%s1587] sm:$0xff] %v1586
    %v1589 = vsel %vm1585, %v1417, %v1174
    %v1590 = vsel %vm1585, %v1580, %v1175
    %s1591 = sadd.s32 %s318, 3
    %v1592 = vstv %s1591
    %vm1593 = vcmp.lt.s32.totalorder %v1592, %v74
    %s1594 = scalar_lea.vmem [#allocation4], 72
    %v1595 = vld [vmem:[%s1594] sm:$0xff]
    %v1596 = vld [vmem:[%s1594 + $0x8] sm:$0xff]
    %v1597 = vld [vmem:[%s1594 + $0x10] sm:$0xff]
    %1598 = vmatprep.subr.mxu0 %v76
    %1599 = vmatpush1.msra.mxu0 %v75
    %1600 = vmatprep.subr.mxu0 %v82
    %1601 = vmatpush1.msra.mxu0 %v81
    %1602 = vmatprep.subr.mxu0 %v88
    %1603 = vmatpush1.msra.mxu0 %v87
    %1604 = vmatprep.subr.mxu0 %v94
    %1605 = vmatpush1.msra.mxu0 %v93
    %1606 = vmatprep.subr.mxu0 %v100
    %1607 = vmatpush1.msra.mxu0 %v99
    %1608 = vmatprep.subr.mxu0 %v106
    %1609 = vmatpush1.msra.mxu0 %v105
    %1610 = vmatprep.subr.mxu0 %v112
    %1611 = vmatpush1.msra.mxu0 %v111
    %1612 = vmatprep.subr.mxu0 %v118
    %1613 = vmatpush1.msra.mxu0 %v117
    %1614 = vmatprep.subr.mxu0 %v124
    %1615 = vmatpush1.msra.mxu0 %v123
    %1616 = vmatprep.subr.mxu0 %v130
    %1617 = vmatpush1.msra.mxu0 %v129
    %1618 = vmatprep.subr.mxu0 %v136
    %1619 = vmatpush1.msra.mxu0 %v135
    %1620 = vmatprep.subr.mxu0 %v142
    %1621 = vmatpush1.msra.mxu0 %v141
    %1622 = vmatprep.subr.mxu0 %v148
    %1623 = vmatpush1.msra.mxu0 %v147
    %1624 = vmatprep.subr.mxu0 %v154
    %1625 = vmatpush1.msra.mxu0 %v153
    %1626 = vmatprep.subr.mxu0 %v160
    %1627 = vmatpush1.msra.mxu0 %v159
    %1628 = vmatprep.subr.mxu0 %v166
    %1629 = vmatpush1.msra.mxu0 %v165
    %1630 = vmatprep.subr.mxu0 %v172
    %1631 = vmatpush1.msra.mxu0 %v171
    %1632 = vmatprep.subr.mxu0 %v178
    %1633 = vmatpush1.msra.mxu0 %v177
    %1634 = vmatprep.subr.mxu0 %v184
    %1635 = vmatpush1.msra.mxu0 %v183
    %1636 = vmatprep.subr.mxu0 %v190
    %1637 = vmatpush1.msra.mxu0 %v189
    %1638 = vmatprep.subr.mxu0 %v196
    %1639 = vmatpush1.msra.mxu0 %v195
    %1640 = vmatprep.subr.mxu0 %v202
    %1641 = vmatpush1.msra.mxu0 %v201
    %1642 = vmatprep.subr.mxu0 %v208
    %1643 = vmatpush1.msra.mxu0 %v207
    %1644 = vmatprep.subr.mxu0 %v214
    %1645 = vmatpush1.msra.mxu0 %v213
    %1646 = vmatprep.subr.mxu0 %v220
    %1647 = vmatpush1.msra.mxu0 %v219
    %1648 = vmatprep.subr.mxu0 %v226
    %1649 = vmatpush1.msra.mxu0 %v225
    %1650 = vmatprep.subr.mxu0 %v232
    %1651 = vmatpush1.msra.mxu0 %v231
    %1652 = vmatprep.subr.mxu0 %v238
    %1653 = vmatpush1.msra.mxu0 %v237
    %1654 = vmatprep.subr.mxu0 %v244
    %1655 = vmatpush1.msra.mxu0 %v243
    %1656 = vmatprep.subr.mxu0 %v250
    %1657 = vmatpush1.msra.mxu0 %v249
    %1658 = vmatprep.subr.mxu0 %v256
    %1659 = vmatpush1.msra.mxu0 %v255
    %1660 = vmatprep.subr.mxu0 %v262
    %1661 = vmatpush1.msra.mxu0 %v261
    %1662 = vmatprep.mubr.f32.mxu0 %v1590
    %1663 = vmatmul.mubr.f32.gmra.mrb[0].mxu0 %v1589
    %v1664 = vpop.f32.mrb[0].mxu0
    %v1665 = vadd.f32 0.0, %v1664
    %v1666 = vpop.f32.mrb[0].mxu0
    %v1667 = vadd.f32 0.0, %v1666
    %1668 = vdwg.mxu0
    %1669 = vmatprep.subr.mxu0 %v78
    %1670 = vmatpush1.msra.mxu0 %v77
    %1671 = vmatprep.subr.mxu0 %v84
    %1672 = vmatpush1.msra.mxu0 %v83
    %1673 = vmatprep.subr.mxu0 %v90
    %1674 = vmatpush1.msra.mxu0 %v89
    %1675 = vmatprep.subr.mxu0 %v96
    %1676 = vmatpush1.msra.mxu0 %v95
    %1677 = vmatprep.subr.mxu0 %v102
    %1678 = vmatpush1.msra.mxu0 %v101
    %1679 = vmatprep.subr.mxu0 %v108
    %1680 = vmatpush1.msra.mxu0 %v107
    %1681 = vmatprep.subr.mxu0 %v114
    %1682 = vmatpush1.msra.mxu0 %v113
    %1683 = vmatprep.subr.mxu0 %v120
    %1684 = vmatpush1.msra.mxu0 %v119
    %1685 = vmatprep.subr.mxu0 %v126
    %1686 = vmatpush1.msra.mxu0 %v125
    %1687 = vmatprep.subr.mxu0 %v132
    %1688 = vmatpush1.msra.mxu0 %v131
    %1689 = vmatprep.subr.mxu0 %v138
    %1690 = vmatpush1.msra.mxu0 %v137
    %1691 = vmatprep.subr.mxu0 %v144
    %1692 = vmatpush1.msra.mxu0 %v143
    %1693 = vmatprep.subr.mxu0 %v150
    %1694 = vmatpush1.msra.mxu0 %v149
    %1695 = vmatprep.subr.mxu0 %v156
    %1696 = vmatpush1.msra.mxu0 %v155
    %1697 = vmatprep.subr.mxu0 %v162
    %1698 = vmatpush1.msra.mxu0 %v161
    %1699 = vmatprep.subr.mxu0 %v168
    %1700 = vmatpush1.msra.mxu0 %v167
    %1701 = vmatprep.subr.mxu0 %v174
    %1702 = vmatpush1.msra.mxu0 %v173
    %1703 = vmatprep.subr.mxu0 %v180
    %1704 = vmatpush1.msra.mxu0 %v179
    %1705 = vmatprep.subr.mxu0 %v186
    %1706 = vmatpush1.msra.mxu0 %v185
    %1707 = vmatprep.subr.mxu0 %v192
    %1708 = vmatpush1.msra.mxu0 %v191
    %1709 = vmatprep.subr.mxu0 %v198
    %1710 = vmatpush1.msra.mxu0 %v197
    %1711 = vmatprep.subr.mxu0 %v204
    %1712 = vmatpush1.msra.mxu0 %v203
    %1713 = vmatprep.subr.mxu0 %v210
    %1714 = vmatpush1.msra.mxu0 %v209
    %1715 = vmatprep.subr.mxu0 %v216
    %1716 = vmatpush1.msra.mxu0 %v215
    %1717 = vmatprep.subr.mxu0 %v222
    %1718 = vmatpush1.msra.mxu0 %v221
    %1719 = vmatprep.subr.mxu0 %v228
    %1720 = vmatpush1.msra.mxu0 %v227
    %1721 = vmatprep.subr.mxu0 %v234
    %1722 = vmatpush1.msra.mxu0 %v233
    %1723 = vmatprep.subr.mxu0 %v240
    %1724 = vmatpush1.msra.mxu0 %v239
    %1725 = vmatprep.subr.mxu0 %v246
    %1726 = vmatpush1.msra.mxu0 %v245
    %1727 = vmatprep.subr.mxu0 %v252
    %1728 = vmatpush1.msra.mxu0 %v251
    %1729 = vmatprep.subr.mxu0 %v258
    %1730 = vmatpush1.msra.mxu0 %v257
    %1731 = vmatprep.subr.mxu0 %v264
    %1732 = vmatpush1.msra.mxu0 %v263
    %1733 = vmatprep.mubr.f32.mxu0 %v1590
    %1734 = vmatmul.mubr.f32.gmra.mrb[0].mxu0 %v1589
    %v1735 = vpop.f32.mrb[0].mxu0
    %v1736 = vadd.f32 0.0, %v1735
    %v1737 = vpop.f32.mrb[0].mxu0
    %v1738 = vadd.f32 0.0, %v1737
    %1739 = vdwg.mxu0
    %1740 = vmatprep.subr.mxu0 %v80
    %1741 = vmatpush1.msra.mxu0 %v79
    %1742 = vmatprep.subr.mxu0 %v86
    %1743 = vmatpush1.msra.mxu0 %v85
    %1744 = vmatprep.subr.mxu0 %v92
    %1745 = vmatpush1.msra.mxu0 %v91
    %1746 = vmatprep.subr.mxu0 %v98
    %1747 = vmatpush1.msra.mxu0 %v97
    %1748 = vmatprep.subr.mxu0 %v104
    %1749 = vmatpush1.msra.mxu0 %v103
    %1750 = vmatprep.subr.mxu0 %v110
    %1751 = vmatpush1.msra.mxu0 %v109
    %1752 = vmatprep.subr.mxu0 %v116
    %1753 = vmatpush1.msra.mxu0 %v115
    %1754 = vmatprep.subr.mxu0 %v122
    %1755 = vmatpush1.msra.mxu0 %v121
    %1756 = vmatprep.subr.mxu0 %v128
    %1757 = vmatpush1.msra.mxu0 %v127
    %1758 = vmatprep.subr.mxu0 %v134
    %1759 = vmatpush1.msra.mxu0 %v133
    %1760 = vmatprep.subr.mxu0 %v140
    %1761 = vmatpush1.msra.mxu0 %v139
    %1762 = vmatprep.subr.mxu0 %v146
    %1763 = vmatpush1.msra.mxu0 %v145
    %1764 = vmatprep.subr.mxu0 %v152
    %1765 = vmatpush1.msra.mxu0 %v151
    %1766 = vmatprep.subr.mxu0 %v158
    %1767 = vmatpush1.msra.mxu0 %v157
    %1768 = vmatprep.subr.mxu0 %v164
    %1769 = vmatpush1.msra.mxu0 %v163
    %1770 = vmatprep.subr.mxu0 %v170
    %1771 = vmatpush1.msra.mxu0 %v169
    %1772 = vmatprep.subr.mxu0 %v176
    %1773 = vmatpush1.msra.mxu0 %v175
    %1774 = vmatprep.subr.mxu0 %v182
    %1775 = vmatpush1.msra.mxu0 %v181
    %1776 = vmatprep.subr.mxu0 %v188
    %1777 = vmatpush1.msra.mxu0 %v187
    %1778 = vmatprep.subr.mxu0 %v194
    %1779 = vmatpush1.msra.mxu0 %v193
    %1780 = vmatprep.subr.mxu0 %v200
    %1781 = vmatpush1.msra.mxu0 %v199
    %1782 = vmatprep.subr.mxu0 %v206
    %1783 = vmatpush1.msra.mxu0 %v205
    %1784 = vmatprep.subr.mxu0 %v212
    %1785 = vmatpush1.msra.mxu0 %v211
    %1786 = vmatprep.subr.mxu0 %v218
    %1787 = vmatpush1.msra.mxu0 %v217
    %1788 = vmatprep.subr.mxu0 %v224
    %1789 = vmatpush1.msra.mxu0 %v223
    %1790 = vmatprep.subr.mxu0 %v230
    %1791 = vmatpush1.msra.mxu0 %v229
    %1792 = vmatprep.subr.mxu0 %v236
    %1793 = vmatpush1.msra.mxu0 %v235
    %1794 = vmatprep.subr.mxu0 %v242
    %1795 = vmatpush1.msra.mxu0 %v241
    %1796 = vmatprep.subr.mxu0 %v248
    %1797 = vmatpush1.msra.mxu0 %v247
    %1798 = vmatprep.subr.mxu0 %v254
    %1799 = vmatpush1.msra.mxu0 %v253
    %1800 = vmatprep.subr.mxu0 %v260
    %1801 = vmatpush1.msra.mxu0 %v259
    %1802 = vmatprep.subr.mxu0 %v266
    %1803 = vmatpush1.msra.mxu0 %v265
    %1804 = vmatprep.mubr.f32.mxu0 %v1590
    %1805 = vmatmul.mubr.f32.gmra.mrb[0].mxu0 %v1589
    %v1806 = vpop.f32.mrb[0].mxu0
    %v1807 = vadd.f32 0.0, %v1806
    %v1808 = vpop.f32.mrb[0].mxu0
    %v1809 = vadd.f32 0.0, %v1808
    %1810 = vdwg.mxu0
    %v1811 = vadd.f32 %v1595, %v1665
    %v1812 = vxor.u32 %v1811, 2147483648
    %v1813 = vmul.f32 %v1812, 1.442695
    %v1814 = vpow.pop %v1813
    %v1815 = vadd.f32 %v1814, 1.0
    %v1816 = vrcp.pop %v1815
    %v1817 = vmul.f32 1.0, %v1816
    %v1818 = vadd.f32 %v1596, %v1667
    %v1819 = vxor.u32 %v1818, 2147483648
    %v1820 = vmul.f32 %v1819, 1.442695
    %v1821 = vpow.pop %v1820
    %v1822 = vadd.f32 %v1821, 1.0
    %v1823 = vrcp.pop %v1822
    %v1824 = vmul.f32 1.0, %v1823
    %v1825 = vadd.f32 %v1736, %v557
    %v1826 = vmul.f32 %v1817, %v1825
    %v1827 = vadd.f32 %v1597, %v1826
    %v1828 = vtanh.pop %v1827
    %v1829 = vsub.f32 1.0, %v1824
    %v1830 = vmul.f32 %v1829, %v1828
    %v1831 = vmul.f32 %v1824, %v1589
    %v1832 = vadd.f32 %v1830, %v1831
    %1833 = vmatprep.subr.mxu0 %v268
    %1834 = vmatpush1.msra.mxu0 %v267
    %1835 = vmatprep.subr.mxu0 %v271
    %1836 = vmatpush1.msra.mxu0 %v270
    %1837 = vmatprep.subr.mxu0 %v274
    %1838 = vmatpush1.msra.mxu0 %v273
    %1839 = vmatprep.subr.mxu0 %v277
    %1840 = vmatpush1.msra.mxu0 %v276
    %1841 = vmatprep.subr.mxu0 %v280
    %1842 = vmatpush1.msra.mxu0 %v279
    %1843 = vmatprep.subr.mxu0 %v283
    %1844 = vmatpush1.msra.mxu0 %v282
    %1845 = vmatprep.subr.mxu0 %v286
    %1846 = vmatpush1.msra.mxu0 %v285
    %1847 = vmatprep.subr.mxu0 %v289
    %1848 = vmatpush1.msra.mxu0 %v288
    %1849 = vmatprep.subr.mxu0 %v292
    %1850 = vmatpush1.msra.mxu0 %v291
    %1851 = vmatprep.subr.mxu0 %v295
    %1852 = vmatpush1.msra.mxu0 %v294
    %1853 = vmatprep.subr.mxu0 %v298
    %1854 = vmatpush1.msra.mxu0 %v297
    %1855 = vmatprep.subr.mxu0 %v301
    %1856 = vmatpush1.msra.mxu0 %v300
    %1857 = vmatprep.subr.mxu0 %v304
    %1858 = vmatpush1.msra.mxu0 %v303
    %1859 = vmatprep.subr.mxu0 %v307
    %1860 = vmatpush1.msra.mxu0 %v306
    %1861 = vmatprep.subr.mxu0 %v310
    %1862 = vmatpush1.msra.mxu0 %v309
    %1863 = vmatprep.subr.mxu0 %v313
    %1864 = vmatpush1.msra.mxu0 %v312
    %1865 = vmatprep.subr.mxu0 0.0
    %1866 = vmatpush1.msra.mxu0 0.0
    %1867 = vmatprep.subr.mxu0 0.0
    %1868 = vmatpush1.msra.mxu0 0.0
    %1869 = vmatprep.subr.mxu0 0.0
    %1870 = vmatpush1.msra.mxu0 0.0
    %1871 = vmatprep.subr.mxu0 0.0
    %1872 = vmatpush1.msra.mxu0 0.0
    %1873 = vmatprep.subr.mxu0 0.0
    %1874 = vmatpush1.msra.mxu0 0.0
    %1875 = vmatprep.subr.mxu0 0.0
    %1876 = vmatpush1.msra.mxu0 0.0
    %1877 = vmatprep.subr.mxu0 0.0
    %1878 = vmatpush1.msra.mxu0 0.0
    %1879 = vmatprep.subr.mxu0 0.0
    %1880 = vmatpush1.msra.mxu0 0.0
    %1881 = vmatprep.subr.mxu0 0.0
    %1882 = vmatpush1.msra.mxu0 0.0
    %1883 = vmatprep.subr.mxu0 0.0
    %1884 = vmatpush1.msra.mxu0 0.0
    %1885 = vmatprep.subr.mxu0 0.0
    %1886 = vmatpush1.msra.mxu0 0.0
    %1887 = vmatprep.subr.mxu0 0.0
    %1888 = vmatpush1.msra.mxu0 0.0
    %1889 = vmatprep.subr.mxu0 0.0
    %1890 = vmatpush1.msra.mxu0 0.0
    %1891 = vmatprep.subr.mxu0 0.0
    %1892 = vmatpush1.msra.mxu0 0.0
    %1893 = vmatprep.subr.mxu0 0.0
    %1894 = vmatpush1.msra.mxu0 0.0
    %1895 = vmatprep.subr.mxu0 0.0
    %1896 = vmatpush1.msra.mxu0 0.0
    %1897 = vmatprep.mubr.f32.mxu0 0.0
    %1898 = vmatmul.mubr.f32.gmra.mrb[0].mxu0 %v1832
    %v1899 = vpop.f32.mrb[0].mxu0
    %v1900 = vadd.f32 %v571, %v1899
    %v1901 = vpop.f32.mrb[0].mxu0
    %v1902 = vadd.f32 %v575, %v1901
    %1903 = vdwg.mxu0
    %1904 = vmatprep.subr.mxu0 0.0
    %1905 = vmatpush1.msra.mxu0 %v269
    %1906 = vmatprep.subr.mxu0 0.0
    %1907 = vmatpush1.msra.mxu0 %v272
    %1908 = vmatprep.subr.mxu0 0.0
    %1909 = vmatpush1.msra.mxu0 %v275
    %1910 = vmatprep.subr.mxu0 0.0
    %1911 = vmatpush1.msra.mxu0 %v278
    %1912 = vmatprep.subr.mxu0 0.0
    %1913 = vmatpush1.msra.mxu0 %v281
    %1914 = vmatprep.subr.mxu0 0.0
    %1915 = vmatpush1.msra.mxu0 %v284
    %1916 = vmatprep.subr.mxu0 0.0
    %1917 = vmatpush1.msra.mxu0 %v287
    %1918 = vmatprep.subr.mxu0 0.0
    %1919 = vmatpush1.msra.mxu0 %v290
    %1920 = vmatprep.subr.mxu0 0.0
    %1921 = vmatpush1.msra.mxu0 %v293
    %1922 = vmatprep.subr.mxu0 0.0
    %1923 = vmatpush1.msra.mxu0 %v296
    %1924 = vmatprep.subr.mxu0 0.0
    %1925 = vmatpush1.msra.mxu0 %v299
    %1926 = vmatprep.subr.mxu0 0.0
    %1927 = vmatpush1.msra.mxu0 %v302
    %1928 = vmatprep.subr.mxu0 0.0
    %1929 = vmatpush1.msra.mxu0 %v305
    %1930 = vmatprep.subr.mxu0 0.0
    %1931 = vmatpush1.msra.mxu0 %v308
    %1932 = vmatprep.subr.mxu0 0.0
    %1933 = vmatpush1.msra.mxu0 %v311
    %1934 = vmatprep.subr.mxu0 0.0
    %1935 = vmatpush1.msra.mxu0 %v314
    %1936 = vmatprep.subr.mxu0 0.0
    %1937 = vmatpush1.msra.mxu0 0.0
    %1938 = vmatprep.subr.mxu0 0.0
    %1939 = vmatpush1.msra.mxu0 0.0
    %1940 = vmatprep.subr.mxu0 0.0
    %1941 = vmatpush1.msra.mxu0 0.0
    %1942 = vmatprep.subr.mxu0 0.0
    %1943 = vmatpush1.msra.mxu0 0.0
    %1944 = vmatprep.subr.mxu0 0.0
    %1945 = vmatpush1.msra.mxu0 0.0
    %1946 = vmatprep.subr.mxu0 0.0
    %1947 = vmatpush1.msra.mxu0 0.0
    %1948 = vmatprep.subr.mxu0 0.0
    %1949 = vmatpush1.msra.mxu0 0.0
    %1950 = vmatprep.subr.mxu0 0.0
    %1951 = vmatpush1.msra.mxu0 0.0
    %1952 = vmatprep.subr.mxu0 0.0
    %1953 = vmatpush1.msra.mxu0 0.0
    %1954 = vmatprep.subr.mxu0 0.0
    %1955 = vmatpush1.msra.mxu0 0.0
    %1956 = vmatprep.subr.mxu0 0.0
    %1957 = vmatpush1.msra.mxu0 0.0
    %1958 = vmatprep.subr.mxu0 0.0
    %1959 = vmatpush1.msra.mxu0 0.0
    %1960 = vmatprep.subr.mxu0 0.0
    %1961 = vmatpush1.msra.mxu0 0.0
    %1962 = vmatprep.subr.mxu0 0.0
    %1963 = vmatpush1.msra.mxu0 0.0
    %1964 = vmatprep.subr.mxu0 0.0
    %1965 = vmatpush1.msra.mxu0 0.0
    %1966 = vmatprep.subr.mxu0 0.0
    %1967 = vmatpush1.msra.mxu0 0.0
    %1968 = vmatprep.mubr.f32.mxu0 0.0
    %1969 = vmatmul.mubr.f32.gmra.mrb[0].mxu0 %v1832
    %v1970 = vpop.f32.mrb[0].mxu0
    %v1971 = vadd.f32 %v579, %v1970
    %v1972 = vpop.f32.mrb[0].mxu0
    %1973 = vdwg.mxu0
    %v1974 = vadd.f32 %v1900, %v1738
    %v1975 = vxor.u32 %v1974, 2147483648
    %v1976 = vmul.f32 %v1975, 1.442695
    %v1977 = vpow.pop %v1976
    %v1978 = vadd.f32 %v1977, 1.0
    %v1979 = vrcp.pop %v1978
    %v1980 = vmul.f32 1.0, %v1979
    %v1981 = vadd.f32 %v1902, %v1807
    %v1982 = vxor.u32 %v1981, 2147483648
    %v1983 = vmul.f32 %v1982, 1.442695
    %v1984 = vpow.pop %v1983
    %v1985 = vadd.f32 %v1984, 1.0
    %v1986 = vrcp.pop %v1985
    %v1987 = vmul.f32 1.0, %v1986
    %v1988 = vadd.f32 %v1809, %v742
    %v1989 = vmul.f32 %v1980, %v1988
    %v1990 = vadd.f32 %v1971, %v1989
    %v1991 = vtanh.pop %v1990
    %v1992 = vsub.f32 1.0, %v1987
    %v1993 = vmul.f32 %v1992, %v1991
    %v1994 = vmul.f32 %v1987, %v1590
    %v1995 = vadd.f32 %v1993, %v1994
    %v1996 = vsel %vm1593, 1, 0
    %1997 = vset.pattern.permute.xlu0 0
    %1998 = vperm.xlu0 %1997, %v1996
    %v1999 = vpop.permute.xlu0 %1998
    %vm2000 = vcmp.eq.s32.totalorder %v1999, 1
    %v2001 = vsel %vm2000, %v1995, 0.0
    %s2002 = scalar_lea.vmem [#allocation10], 24
    %2003 = vst [vmem:[%s2002] sm:$0xff] %v2001
    %v2004 = vsel %vm2000, %v1832, %v1589
    %v2005 = vsel %vm2000, %v1995, %v1590
    %s2006 = sadd.s32 %s318, 4
    %v2007 = vstv %s2006
    %vm2008 = vcmp.lt.s32.totalorder %v2007, %v74
    %s2009 = scalar_lea.vmem [#allocation4], 96
    %v2010 = vld [vmem:[%s2009] sm:$0xff]
    %v2011 = vld [vmem:[%s2009 + $0x8] sm:$0xff]
    %v2012 = vld [vmem:[%s2009 + $0x10] sm:$0xff]
    %2013 = vmatprep.subr.mxu0 %v76
    %2014 = vmatpush1.msra.mxu0 %v75
    %2015 = vmatprep.subr.mxu0 %v82
    %2016 = vmatpush1.msra.mxu0 %v81
    %2017 = vmatprep.subr.mxu0 %v88
    %2018 = vmatpush1.msra.mxu0 %v87
    %2019 = vmatprep.subr.mxu0 %v94
    %2020 = vmatpush1.msra.mxu0 %v93
    %2021 = vmatprep.subr.mxu0 %v100
    %2022 = vmatpush1.msra.mxu0 %v99
    %2023 = vmatprep.subr.mxu0 %v106
    %2024 = vmatpush1.msra.mxu0 %v105
    %2025 = vmatprep.subr.mxu0 %v112
    %2026 = vmatpush1.msra.mxu0 %v111
    %2027 = vmatprep.subr.mxu0 %v118
    %2028 = vmatpush1.msra.mxu0 %v117
    %2029 = vmatprep.subr.mxu0 %v124
    %2030 = vmatpush1.msra.mxu0 %v123
    %2031 = vmatprep.subr.mxu0 %v130
    %2032 = vmatpush1.msra.mxu0 %v129
    %2033 = vmatprep.subr.mxu0 %v136
    %2034 = vmatpush1.msra.mxu0 %v135
    %2035 = vmatprep.subr.mxu0 %v142
    %2036 = vmatpush1.msra.mxu0 %v141
    %2037 = vmatprep.subr.mxu0 %v148
    %2038 = vmatpush1.msra.mxu0 %v147
    %2039 = vmatprep.subr.mxu0 %v154
    %2040 = vmatpush1.msra.mxu0 %v153
    %2041 = vmatprep.subr.mxu0 %v160
    %2042 = vmatpush1.msra.mxu0 %v159
    %2043 = vmatprep.subr.mxu0 %v166
    %2044 = vmatpush1.msra.mxu0 %v165
    %2045 = vmatprep.subr.mxu0 %v172
    %2046 = vmatpush1.msra.mxu0 %v171
    %2047 = vmatprep.subr.mxu0 %v178
    %2048 = vmatpush1.msra.mxu0 %v177
    %2049 = vmatprep.subr.mxu0 %v184
    %2050 = vmatpush1.msra.mxu0 %v183
    %2051 = vmatprep.subr.mxu0 %v190
    %2052 = vmatpush1.msra.mxu0 %v189
    %2053 = vmatprep.subr.mxu0 %v196
    %2054 = vmatpush1.msra.mxu0 %v195
    %2055 = vmatprep.subr.mxu0 %v202
    %2056 = vmatpush1.msra.mxu0 %v201
    %2057 = vmatprep.subr.mxu0 %v208
    %2058 = vmatpush1.msra.mxu0 %v207
    %2059 = vmatprep.subr.mxu0 %v214
    %2060 = vmatpush1.msra.mxu0 %v213
    %2061 = vmatprep.subr.mxu0 %v220
    %2062 = vmatpush1.msra.mxu0 %v219
    %2063 = vmatprep.subr.mxu0 %v226
    %2064 = vmatpush1.msra.mxu0 %v225
    %2065 = vmatprep.subr.mxu0 %v232
    %2066 = vmatpush1.msra.mxu0 %v231
    %2067 = vmatprep.subr.mxu0 %v238
    %2068 = vmatpush1.msra.mxu0 %v237
    %2069 = vmatprep.subr.mxu0 %v244
    %2070 = vmatpush1.msra.mxu0 %v243
    %2071 = vmatprep.subr.mxu0 %v250
    %2072 = vmatpush1.msra.mxu0 %v249
    %2073 = vmatprep.subr.mxu0 %v256
    %2074 = vmatpush1.msra.mxu0 %v255
    %2075 = vmatprep.subr.mxu0 %v262
    %2076 = vmatpush1.msra.mxu0 %v261
    %2077 = vmatprep.mubr.f32.mxu0 %v2005
    %2078 = vmatmul.mubr.f32.gmra.mrb[0].mxu0 %v2004
    %v2079 = vpop.f32.mrb[0].mxu0
    %v2080 = vadd.f32 0.0, %v2079
    %v2081 = vpop.f32.mrb[0].mxu0
    %v2082 = vadd.f32 0.0, %v2081
    %2083 = vdwg.mxu0
    %2084 = vmatprep.subr.mxu0 %v78
    %2085 = vmatpush1.msra.mxu0 %v77
    %2086 = vmatprep.subr.mxu0 %v84
    %2087 = vmatpush1.msra.mxu0 %v83
    %2088 = vmatprep.subr.mxu0 %v90
    %2089 = vmatpush1.msra.mxu0 %v89
    %2090 = vmatprep.subr.mxu0 %v96
    %2091 = vmatpush1.msra.mxu0 %v95
    %2092 = vmatprep.subr.mxu0 %v102
    %2093 = vmatpush1.msra.mxu0 %v101
    %2094 = vmatprep.subr.mxu0 %v108
    %2095 = vmatpush1.msra.mxu0 %v107
    %2096 = vmatprep.subr.mxu0 %v114
    %2097 = vmatpush1.msra.mxu0 %v113
    %2098 = vmatprep.subr.mxu0 %v120
    %2099 = vmatpush1.msra.mxu0 %v119
    %2100 = vmatprep.subr.mxu0 %v126
    %2101 = vmatpush1.msra.mxu0 %v125
    %2102 = vmatprep.subr.mxu0 %v132
    %2103 = vmatpush1.msra.mxu0 %v131
    %2104 = vmatprep.subr.mxu0 %v138
    %2105 = vmatpush1.msra.mxu0 %v137
    %2106 = vmatprep.subr.mxu0 %v144
    %2107 = vmatpush1.msra.mxu0 %v143
    %2108 = vmatprep.subr.mxu0 %v150
    %2109 = vmatpush1.msra.mxu0 %v149
    %2110 = vmatprep.subr.mxu0 %v156
    %2111 = vmatpush1.msra.mxu0 %v155
    %2112 = vmatprep.subr.mxu0 %v162
    %2113 = vmatpush1.msra.mxu0 %v161
    %2114 = vmatprep.subr.mxu0 %v168
    %2115 = vmatpush1.msra.mxu0 %v167
    %2116 = vmatprep.subr.mxu0 %v174
    %2117 = vmatpush1.msra.mxu0 %v173
    %2118 = vmatprep.subr.mxu0 %v180
    %2119 = vmatpush1.msra.mxu0 %v179
    %2120 = vmatprep.subr.mxu0 %v186
    %2121 = vmatpush1.msra.mxu0 %v185
    %2122 = vmatprep.subr.mxu0 %v192
    %2123 = vmatpush1.msra.mxu0 %v191
    %2124 = vmatprep.subr.mxu0 %v198
    %2125 = vmatpush1.msra.mxu0 %v197
    %2126 = vmatprep.subr.mxu0 %v204
    %2127 = vmatpush1.msra.mxu0 %v203
    %2128 = vmatprep.subr.mxu0 %v210
    %2129 = vmatpush1.msra.mxu0 %v209
    %2130 = vmatprep.subr.mxu0 %v216
    %2131 = vmatpush1.msra.mxu0 %v215
    %2132 = vmatprep.subr.mxu0 %v222
    %2133 = vmatpush1.msra.mxu0 %v221
    %2134 = vmatprep.subr.mxu0 %v228
    %2135 = vmatpush1.msra.mxu0 %v227
    %2136 = vmatprep.subr.mxu0 %v234
    %2137 = vmatpush1.msra.mxu0 %v233
    %2138 = vmatprep.subr.mxu0 %v240
    %2139 = vmatpush1.msra.mxu0 %v239
    %2140 = vmatprep.subr.mxu0 %v246
    %2141 = vmatpush1.msra.mxu0 %v245
    %2142 = vmatprep.subr.mxu0 %v252
    %2143 = vmatpush1.msra.mxu0 %v251
    %2144 = vmatprep.subr.mxu0 %v258
    %2145 = vmatpush1.msra.mxu0 %v257
    %2146 = vmatprep.subr.mxu0 %v264
    %2147 = vmatpush1.msra.mxu0 %v263
    %2148 = vmatprep.mubr.f32.mxu0 %v2005
    %2149 = vmatmul.mubr.f32.gmra.mrb[0].mxu0 %v2004
    %v2150 = vpop.f32.mrb[0].mxu0
    %v2151 = vadd.f32 0.0, %v2150
    %v2152 = vpop.f32.mrb[0].mxu0
    %v2153 = vadd.f32 0.0, %v2152
    %2154 = vdwg.mxu0
    %2155 = vmatprep.subr.mxu0 %v80
    %2156 = vmatpush1.msra.mxu0 %v79
    %2157 = vmatprep.subr.mxu0 %v86
    %2158 = vmatpush1.msra.mxu0 %v85
    %2159 = vmatprep.subr.mxu0 %v92
    %2160 = vmatpush1.msra.mxu0 %v91
    %2161 = vmatprep.subr.mxu0 %v98
    %2162 = vmatpush1.msra.mxu0 %v97
    %2163 = vmatprep.subr.mxu0 %v104
    %2164 = vmatpush1.msra.mxu0 %v103
    %2165 = vmatprep.subr.mxu0 %v110
    %2166 = vmatpush1.msra.mxu0 %v109
    %2167 = vmatprep.subr.mxu0 %v116
    %2168 = vmatpush1.msra.mxu0 %v115
    %2169 = vmatprep.subr.mxu0 %v122
    %2170 = vmatpush1.msra.mxu0 %v121
    %2171 = vmatprep.subr.mxu0 %v128
    %2172 = vmatpush1.msra.mxu0 %v127
    %2173 = vmatprep.subr.mxu0 %v134
    %2174 = vmatpush1.msra.mxu0 %v133
    %2175 = vmatprep.subr.mxu0 %v140
    %2176 = vmatpush1.msra.mxu0 %v139
    %2177 = vmatprep.subr.mxu0 %v146
    %2178 = vmatpush1.msra.mxu0 %v145
    %2179 = vmatprep.subr.mxu0 %v152
    %2180 = vmatpush1.msra.mxu0 %v151
    %2181 = vmatprep.subr.mxu0 %v158
    %2182 = vmatpush1.msra.mxu0 %v157
    %2183 = vmatprep.subr.mxu0 %v164
    %2184 = vmatpush1.msra.mxu0 %v163
    %2185 = vmatprep.subr.mxu0 %v170
    %2186 = vmatpush1.msra.mxu0 %v169
    %2187 = vmatprep.subr.mxu0 %v176
    %2188 = vmatpush1.msra.mxu0 %v175
    %2189 = vmatprep.subr.mxu0 %v182
    %2190 = vmatpush1.msra.mxu0 %v181
    %2191 = vmatprep.subr.mxu0 %v188
    %2192 = vmatpush1.msra.mxu0 %v187
    %2193 = vmatprep.subr.mxu0 %v194
    %2194 = vmatpush1.msra.mxu0 %v193
    %2195 = vmatprep.subr.mxu0 %v200
    %2196 = vmatpush1.msra.mxu0 %v199
    %2197 = vmatprep.subr.mxu0 %v206
    %2198 = vmatpush1.msra.mxu0 %v205
    %2199 = vmatprep.subr.mxu0 %v212
    %2200 = vmatpush1.msra.mxu0 %v211
    %2201 = vmatprep.subr.mxu0 %v218
    %2202 = vmatpush1.msra.mxu0 %v217
    %2203 = vmatprep.subr.mxu0 %v224
    %2204 = vmatpush1.msra.mxu0 %v223
    %2205 = vmatprep.subr.mxu0 %v230
    %2206 = vmatpush1.msra.mxu0 %v229
    %2207 = vmatprep.subr.mxu0 %v236
    %2208 = vmatpush1.msra.mxu0 %v235
    %2209 = vmatprep.subr.mxu0 %v242
    %2210 = vmatpush1.msra.mxu0 %v241
    %2211 = vmatprep.subr.mxu0 %v248
    %2212 = vmatpush1.msra.mxu0 %v247
    %2213 = vmatprep.subr.mxu0 %v254
    %2214 = vmatpush1.msra.mxu0 %v253
    %2215 = vmatprep.subr.mxu0 %v260
    %2216 = vmatpush1.msra.mxu0 %v259
    %2217 = vmatprep.subr.mxu0 %v266
    %2218 = vmatpush1.msra.mxu0 %v265
    %2219 = vmatprep.mubr.f32.mxu0 %v2005
    %2220 = vmatmul.mubr.f32.gmra.mrb[0].mxu0 %v2004
    %v2221 = vpop.f32.mrb[0].mxu0
    %v2222 = vadd.f32 0.0, %v2221
    %v2223 = vpop.f32.mrb[0].mxu0
    %v2224 = vadd.f32 0.0, %v2223
    %2225 = vdwg.mxu0
    %v2226 = vadd.f32 %v2010, %v2080
    %v2227 = vxor.u32 %v2226, 2147483648
    %v2228 = vmul.f32 %v2227, 1.442695
    %v2229 = vpow.pop %v2228
    %v2230 = vadd.f32 %v2229, 1.0
    %v2231 = vrcp.pop %v2230
    %v2232 = vmul.f32 1.0, %v2231
    %v2233 = vadd.f32 %v2011, %v2082
    %v2234 = vxor.u32 %v2233, 2147483648
    %v2235 = vmul.f32 %v2234, 1.442695
    %v2236 = vpow.pop %v2235
    %v2237 = vadd.f32 %v2236, 1.0
    %v2238 = vrcp.pop %v2237
    %v2239 = vmul.f32 1.0, %v2238
    %v2240 = vadd.f32 %v2151, %v557
    %v2241 = vmul.f32 %v2232, %v2240
    %v2242 = vadd.f32 %v2012, %v2241
    %v2243 = vtanh.pop %v2242
    %v2244 = vsub.f32 1.0, %v2239
    %v2245 = vmul.f32 %v2244, %v2243
    %v2246 = vmul.f32 %v2239, %v2004
    %v2247 = vadd.f32 %v2245, %v2246
    %2248 = vmatprep.subr.mxu0 %v268
    %2249 = vmatpush1.msra.mxu0 %v267
    %2250 = vmatprep.subr.mxu0 %v271
    %2251 = vmatpush1.msra.mxu0 %v270
    %2252 = vmatprep.subr.mxu0 %v274
    %2253 = vmatpush1.msra.mxu0 %v273
    %2254 = vmatprep.subr.mxu0 %v277
    %2255 = vmatpush1.msra.mxu0 %v276
    %2256 = vmatprep.subr.mxu0 %v280
    %2257 = vmatpush1.msra.mxu0 %v279
    %2258 = vmatprep.subr.mxu0 %v283
    %2259 = vmatpush1.msra.mxu0 %v282
    %2260 = vmatprep.subr.mxu0 %v286
    %2261 = vmatpush1.msra.mxu0 %v285
    %2262 = vmatprep.subr.mxu0 %v289
    %2263 = vmatpush1.msra.mxu0 %v288
    %2264 = vmatprep.subr.mxu0 %v292
    %2265 = vmatpush1.msra.mxu0 %v291
    %2266 = vmatprep.subr.mxu0 %v295
    %2267 = vmatpush1.msra.mxu0 %v294
    %2268 = vmatprep.subr.mxu0 %v298
    %2269 = vmatpush1.msra.mxu0 %v297
    %2270 = vmatprep.subr.mxu0 %v301
    %2271 = vmatpush1.msra.mxu0 %v300
    %2272 = vmatprep.subr.mxu0 %v304
    %2273 = vmatpush1.msra.mxu0 %v303
    %2274 = vmatprep.subr.mxu0 %v307
    %2275 = vmatpush1.msra.mxu0 %v306
    %2276 = vmatprep.subr.mxu0 %v310
    %2277 = vmatpush1.msra.mxu0 %v309
    %2278 = vmatprep.subr.mxu0 %v313
    %2279 = vmatpush1.msra.mxu0 %v312
    %2280 = vmatprep.subr.mxu0 0.0
    %2281 = vmatpush1.msra.mxu0 0.0
    %2282 = vmatprep.subr.mxu0 0.0
    %2283 = vmatpush1.msra.mxu0 0.0
    %2284 = vmatprep.subr.mxu0 0.0
    %2285 = vmatpush1.msra.mxu0 0.0
    %2286 = vmatprep.subr.mxu0 0.0
    %2287 = vmatpush1.msra.mxu0 0.0
    %2288 = vmatprep.subr.mxu0 0.0
    %2289 = vmatpush1.msra.mxu0 0.0
    %2290 = vmatprep.subr.mxu0 0.0
    %2291 = vmatpush1.msra.mxu0 0.0
    %2292 = vmatprep.subr.mxu0 0.0
    %2293 = vmatpush1.msra.mxu0 0.0
    %2294 = vmatprep.subr.mxu0 0.0
    %2295 = vmatpush1.msra.mxu0 0.0
    %2296 = vmatprep.subr.mxu0 0.0
    %2297 = vmatpush1.msra.mxu0 0.0
    %2298 = vmatprep.subr.mxu0 0.0
    %2299 = vmatpush1.msra.mxu0 0.0
    %2300 = vmatprep.subr.mxu0 0.0
    %2301 = vmatpush1.msra.mxu0 0.0
    %2302 = vmatprep.subr.mxu0 0.0
    %2303 = vmatpush1.msra.mxu0 0.0
    %2304 = vmatprep.subr.mxu0 0.0
    %2305 = vmatpush1.msra.mxu0 0.0
    %2306 = vmatprep.subr.mxu0 0.0
    %2307 = vmatpush1.msra.mxu0 0.0
    %2308 = vmatprep.subr.mxu0 0.0
    %2309 = vmatpush1.msra.mxu0 0.0
    %2310 = vmatprep.subr.mxu0 0.0
    %2311 = vmatpush1.msra.mxu0 0.0
    %2312 = vmatprep.mubr.f32.mxu0 0.0
    %2313 = vmatmul.mubr.f32.gmra.mrb[0].mxu0 %v2247
    %v2314 = vpop.f32.mrb[0].mxu0
    %v2315 = vadd.f32 %v571, %v2314
    %v2316 = vpop.f32.mrb[0].mxu0
    %v2317 = vadd.f32 %v575, %v2316
    %2318 = vdwg.mxu0
    %2319 = vmatprep.subr.mxu0 0.0
    %2320 = vmatpush1.msra.mxu0 %v269
    %2321 = vmatprep.subr.mxu0 0.0
    %2322 = vmatpush1.msra.mxu0 %v272
    %2323 = vmatprep.subr.mxu0 0.0
    %2324 = vmatpush1.msra.mxu0 %v275
    %2325 = vmatprep.subr.mxu0 0.0
    %2326 = vmatpush1.msra.mxu0 %v278
    %2327 = vmatprep.subr.mxu0 0.0
    %2328 = vmatpush1.msra.mxu0 %v281
    %2329 = vmatprep.subr.mxu0 0.0
    %2330 = vmatpush1.msra.mxu0 %v284
    %2331 = vmatprep.subr.mxu0 0.0
    %2332 = vmatpush1.msra.mxu0 %v287
    %2333 = vmatprep.subr.mxu0 0.0
    %2334 = vmatpush1.msra.mxu0 %v290
    %2335 = vmatprep.subr.mxu0 0.0
    %2336 = vmatpush1.msra.mxu0 %v293
    %2337 = vmatprep.subr.mxu0 0.0
    %2338 = vmatpush1.msra.mxu0 %v296
    %2339 = vmatprep.subr.mxu0 0.0
    %2340 = vmatpush1.msra.mxu0 %v299
    %2341 = vmatprep.subr.mxu0 0.0
    %2342 = vmatpush1.msra.mxu0 %v302
    %2343 = vmatprep.subr.mxu0 0.0
    %2344 = vmatpush1.msra.mxu0 %v305
    %2345 = vmatprep.subr.mxu0 0.0
    %2346 = vmatpush1.msra.mxu0 %v308
    %2347 = vmatprep.subr.mxu0 0.0
    %2348 = vmatpush1.msra.mxu0 %v311
    %2349 = vmatprep.subr.mxu0 0.0
    %2350 = vmatpush1.msra.mxu0 %v314
    %2351 = vmatprep.subr.mxu0 0.0
    %2352 = vmatpush1.msra.mxu0 0.0
    %2353 = vmatprep.subr.mxu0 0.0
    %2354 = vmatpush1.msra.mxu0 0.0
    %2355 = vmatprep.subr.mxu0 0.0
    %2356 = vmatpush1.msra.mxu0 0.0
    %2357 = vmatprep.subr.mxu0 0.0
    %2358 = vmatpush1.msra.mxu0 0.0
    %2359 = vmatprep.subr.mxu0 0.0
    %2360 = vmatpush1.msra.mxu0 0.0
    %2361 = vmatprep.subr.mxu0 0.0
    %2362 = vmatpush1.msra.mxu0 0.0
    %2363 = vmatprep.subr.mxu0 0.0
    %2364 = vmatpush1.msra.mxu0 0.0
    %2365 = vmatprep.subr.mxu0 0.0
    %2366 = vmatpush1.msra.mxu0 0.0
    %2367 = vmatprep.subr.mxu0 0.0
    %2368 = vmatpush1.msra.mxu0 0.0
    %2369 = vmatprep.subr.mxu0 0.0
    %2370 = vmatpush1.msra.mxu0 0.0
    %2371 = vmatprep.subr.mxu0 0.0
    %2372 = vmatpush1.msra.mxu0 0.0
    %2373 = vmatprep.subr.mxu0 0.0
    %2374 = vmatpush1.msra.mxu0 0.0
    %2375 = vmatprep.subr.mxu0 0.0
    %2376 = vmatpush1.msra.mxu0 0.0
    %2377 = vmatprep.subr.mxu0 0.0
    %2378 = vmatpush1.msra.mxu0 0.0
    %2379 = vmatprep.subr.mxu0 0.0
    %2380 = vmatpush1.msra.mxu0 0.0
    %2381 = vmatprep.subr.mxu0 0.0
    %2382 = vmatpush1.msra.mxu0 0.0
    %2383 = vmatprep.mubr.f32.mxu0 0.0
    %2384 = vmatmul.mubr.f32.gmra.mrb[0].mxu0 %v2247
    %v2385 = vpop.f32.mrb[0].mxu0
    %v2386 = vadd.f32 %v579, %v2385
    %v2387 = vpop.f32.mrb[0].mxu0
    %2388 = vdwg.mxu0
    %v2389 = vadd.f32 %v2315, %v2153
    %v2390 = vxor.u32 %v2389, 2147483648
    %v2391 = vmul.f32 %v2390, 1.442695
    %v2392 = vpow.pop %v2391
    %v2393 = vadd.f32 %v2392, 1.0
    %v2394 = vrcp.pop %v2393
    %v2395 = vmul.f32 1.0, %v2394
    %v2396 = vadd.f32 %v2317, %v2222
    %v2397 = vxor.u32 %v2396, 2147483648
    %v2398 = vmul.f32 %v2397, 1.442695
    %v2399 = vpow.pop %v2398
    %v2400 = vadd.f32 %v2399, 1.0
    %v2401 = vrcp.pop %v2400
    %v2402 = vmul.f32 1.0, %v2401
    %v2403 = vadd.f32 %v2224, %v742
    %v2404 = vmul.f32 %v2395, %v2403
    %v2405 = vadd.f32 %v2386, %v2404
    %v2406 = vtanh.pop %v2405
    %v2407 = vsub.f32 1.0, %v2402
    %v2408 = vmul.f32 %v2407, %v2406
    %v2409 = vmul.f32 %v2402, %v2005
    %v2410 = vadd.f32 %v2408, %v2409
    %v2411 = vsel %vm2008, 1, 0
    %2412 = vset.pattern.permute.xlu0 0
    %2413 = vperm.xlu0 %2412, %v2411
    %v2414 = vpop.permute.xlu0 %2413
    %vm2415 = vcmp.eq.s32.totalorder %v2414, 1
    %v2416 = vsel %vm2415, %v2410, 0.0
    %s2417 = scalar_lea.vmem [#allocation10], 32
    %2418 = vst [vmem:[%s2417] sm:$0xff] %v2416
    %v2419 = vsel %vm2415, %v2247, %v2004
    %v2420 = vsel %vm2415, %v2410, %v2005
    %s2421 = sadd.s32 %s318, 5
    %v2422 = vstv %s2421
    %vm2423 = vcmp.lt.s32.totalorder %v2422, %v74
    %s2424 = scalar_lea.vmem [#allocation4], 120
    %v2425 = vld [vmem:[%s2424] sm:$0xff]
    %v2426 = vld [vmem:[%s2424 + $0x8] sm:$0xff]
    %v2427 = vld [vmem:[%s2424 + $0x10] sm:$0xff]
    %2428 = vmatprep.subr.mxu0 %v76
    %2429 = vmatpush1.msra.mxu0 %v75
    %2430 = vmatprep.subr.mxu0 %v82
    %2431 = vmatpush1.msra.mxu0 %v81
    %2432 = vmatprep.subr.mxu0 %v88
    %2433 = vmatpush1.msra.mxu0 %v87
    %2434 = vmatprep.subr.mxu0 %v94
    %2435 = vmatpush1.msra.mxu0 %v93
    %2436 = vmatprep.subr.mxu0 %v100
    %2437 = vmatpush1.msra.mxu0 %v99
    %2438 = vmatprep.subr.mxu0 %v106
    %2439 = vmatpush1.msra.mxu0 %v105
    %2440 = vmatprep.subr.mxu0 %v112
    %2441 = vmatpush1.msra.mxu0 %v111
    %2442 = vmatprep.subr.mxu0 %v118
    %2443 = vmatpush1.msra.mxu0 %v117
    %2444 = vmatprep.subr.mxu0 %v124
    %2445 = vmatpush1.msra.mxu0 %v123
    %2446 = vmatprep.subr.mxu0 %v130
    %2447 = vmatpush1.msra.mxu0 %v129
    %2448 = vmatprep.subr.mxu0 %v136
    %2449 = vmatpush1.msra.mxu0 %v135
    %2450 = vmatprep.subr.mxu0 %v142
    %2451 = vmatpush1.msra.mxu0 %v141
    %2452 = vmatprep.subr.mxu0 %v148
    %2453 = vmatpush1.msra.mxu0 %v147
    %2454 = vmatprep.subr.mxu0 %v154
    %2455 = vmatpush1.msra.mxu0 %v153
    %2456 = vmatprep.subr.mxu0 %v160
    %2457 = vmatpush1.msra.mxu0 %v159
    %2458 = vmatprep.subr.mxu0 %v166
    %2459 = vmatpush1.msra.mxu0 %v165
    %2460 = vmatprep.subr.mxu0 %v172
    %2461 = vmatpush1.msra.mxu0 %v171
    %2462 = vmatprep.subr.mxu0 %v178
    %2463 = vmatpush1.msra.mxu0 %v177
    %2464 = vmatprep.subr.mxu0 %v184
    %2465 = vmatpush1.msra.mxu0 %v183
    %2466 = vmatprep.subr.mxu0 %v190
    %2467 = vmatpush1.msra.mxu0 %v189
    %2468 = vmatprep.subr.mxu0 %v196
    %2469 = vmatpush1.msra.mxu0 %v195
    %2470 = vmatprep.subr.mxu0 %v202
    %2471 = vmatpush1.msra.mxu0 %v201
    %2472 = vmatprep.subr.mxu0 %v208
    %2473 = vmatpush1.msra.mxu0 %v207
    %2474 = vmatprep.subr.mxu0 %v214
    %2475 = vmatpush1.msra.mxu0 %v213
    %2476 = vmatprep.subr.mxu0 %v220
    %2477 = vmatpush1.msra.mxu0 %v219
    %2478 = vmatprep.subr.mxu0 %v226
    %2479 = vmatpush1.msra.mxu0 %v225
    %2480 = vmatprep.subr.mxu0 %v232
    %2481 = vmatpush1.msra.mxu0 %v231
    %2482 = vmatprep.subr.mxu0 %v238
    %2483 = vmatpush1.msra.mxu0 %v237
    %2484 = vmatprep.subr.mxu0 %v244
    %2485 = vmatpush1.msra.mxu0 %v243
    %2486 = vmatprep.subr.mxu0 %v250
    %2487 = vmatpush1.msra.mxu0 %v249
    %2488 = vmatprep.subr.mxu0 %v256
    %2489 = vmatpush1.msra.mxu0 %v255
    %2490 = vmatprep.subr.mxu0 %v262
    %2491 = vmatpush1.msra.mxu0 %v261
    %2492 = vmatprep.mubr.f32.mxu0 %v2420
    %2493 = vmatmul.mubr.f32.gmra.mrb[0].mxu0 %v2419
    %v2494 = vpop.f32.mrb[0].mxu0
    %v2495 = vadd.f32 0.0, %v2494
    %v2496 = vpop.f32.mrb[0].mxu0
    %v2497 = vadd.f32 0.0, %v2496
    %2498 = vdwg.mxu0
    %2499 = vmatprep.subr.mxu0 %v78
    %2500 = vmatpush1.msra.mxu0 %v77
    %2501 = vmatprep.subr.mxu0 %v84
    %2502 = vmatpush1.msra.mxu0 %v83
    %2503 = vmatprep.subr.mxu0 %v90
    %2504 = vmatpush1.msra.mxu0 %v89
    %2505 = vmatprep.subr.mxu0 %v96
    %2506 = vmatpush1.msra.mxu0 %v95
    %2507 = vmatprep.subr.mxu0 %v102
    %2508 = vmatpush1.msra.mxu0 %v101
    %2509 = vmatprep.subr.mxu0 %v108
    %2510 = vmatpush1.msra.mxu0 %v107
    %2511 = vmatprep.subr.mxu0 %v114
    %2512 = vmatpush1.msra.mxu0 %v113
    %2513 = vmatprep.subr.mxu0 %v120
    %2514 = vmatpush1.msra.mxu0 %v119
    %2515 = vmatprep.subr.mxu0 %v126
    %2516 = vmatpush1.msra.mxu0 %v125
    %2517 = vmatprep.subr.mxu0 %v132
    %2518 = vmatpush1.msra.mxu0 %v131
    %2519 = vmatprep.subr.mxu0 %v138
    %2520 = vmatpush1.msra.mxu0 %v137
    %2521 = vmatprep.subr.mxu0 %v144
    %2522 = vmatpush1.msra.mxu0 %v143
    %2523 = vmatprep.subr.mxu0 %v150
    %2524 = vmatpush1.msra.mxu0 %v149
    %2525 = vmatprep.subr.mxu0 %v156
    %2526 = vmatpush1.msra.mxu0 %v155
    %2527 = vmatprep.subr.mxu0 %v162
    %2528 = vmatpush1.msra.mxu0 %v161
    %2529 = vmatprep.subr.mxu0 %v168
    %2530 = vmatpush1.msra.mxu0 %v167
    %2531 = vmatprep.subr.mxu0 %v174
    %2532 = vmatpush1.msra.mxu0 %v173
    %2533 = vmatprep.subr.mxu0 %v180
    %2534 = vmatpush1.msra.mxu0 %v179
    %2535 = vmatprep.subr.mxu0 %v186
    %2536 = vmatpush1.msra.mxu0 %v185
    %2537 = vmatprep.subr.mxu0 %v192
    %2538 = vmatpush1.msra.mxu0 %v191
    %2539 = vmatprep.subr.mxu0 %v198
    %2540 = vmatpush1.msra.mxu0 %v197
    %2541 = vmatprep.subr.mxu0 %v204
    %2542 = vmatpush1.msra.mxu0 %v203
    %2543 = vmatprep.subr.mxu0 %v210
    %2544 = vmatpush1.msra.mxu0 %v209
    %2545 = vmatprep.subr.mxu0 %v216
    %2546 = vmatpush1.msra.mxu0 %v215
    %2547 = vmatprep.subr.mxu0 %v222
    %2548 = vmatpush1.msra.mxu0 %v221
    %2549 = vmatprep.subr.mxu0 %v228
    %2550 = vmatpush1.msra.mxu0 %v227
    %2551 = vmatprep.subr.mxu0 %v234
    %2552 = vmatpush1.msra.mxu0 %v233
    %2553 = vmatprep.subr.mxu0 %v240
    %2554 = vmatpush1.msra.mxu0 %v239
    %2555 = vmatprep.subr.mxu0 %v246
    %2556 = vmatpush1.msra.mxu0 %v245
    %2557 = vmatprep.subr.mxu0 %v252
    %2558 = vmatpush1.msra.mxu0 %v251
    %2559 = vmatprep.subr.mxu0 %v258
    %2560 = vmatpush1.msra.mxu0 %v257
    %2561 = vmatprep.subr.mxu0 %v264
    %2562 = vmatpush1.msra.mxu0 %v263
    %2563 = vmatprep.mubr.f32.mxu0 %v2420
    %2564 = vmatmul.mubr.f32.gmra.mrb[0].mxu0 %v2419
    %v2565 = vpop.f32.mrb[0].mxu0
    %v2566 = vadd.f32 0.0, %v2565
    %v2567 = vpop.f32.mrb[0].mxu0
    %v2568 = vadd.f32 0.0, %v2567
    %2569 = vdwg.mxu0
    %2570 = vmatprep.subr.mxu0 %v80
    %2571 = vmatpush1.msra.mxu0 %v79
    %2572 = vmatprep.subr.mxu0 %v86
    %2573 = vmatpush1.msra.mxu0 %v85
    %2574 = vmatprep.subr.mxu0 %v92
    %2575 = vmatpush1.msra.mxu0 %v91
    %2576 = vmatprep.subr.mxu0 %v98
    %2577 = vmatpush1.msra.mxu0 %v97
    %2578 = vmatprep.subr.mxu0 %v104
    %2579 = vmatpush1.msra.mxu0 %v103
    %2580 = vmatprep.subr.mxu0 %v110
    %2581 = vmatpush1.msra.mxu0 %v109
    %2582 = vmatprep.subr.mxu0 %v116
    %2583 = vmatpush1.msra.mxu0 %v115
    %2584 = vmatprep.subr.mxu0 %v122
    %2585 = vmatpush1.msra.mxu0 %v121
    %2586 = vmatprep.subr.mxu0 %v128
    %2587 = vmatpush1.msra.mxu0 %v127
    %2588 = vmatprep.subr.mxu0 %v134
    %2589 = vmatpush1.msra.mxu0 %v133
    %2590 = vmatprep.subr.mxu0 %v140
    %2591 = vmatpush1.msra.mxu0 %v139
    %2592 = vmatprep.subr.mxu0 %v146
    %2593 = vmatpush1.msra.mxu0 %v145
    %2594 = vmatprep.subr.mxu0 %v152
    %2595 = vmatpush1.msra.mxu0 %v151
    %2596 = vmatprep.subr.mxu0 %v158
    %2597 = vmatpush1.msra.mxu0 %v157
    %2598 = vmatprep.subr.mxu0 %v164
    %2599 = vmatpush1.msra.mxu0 %v163
    %2600 = vmatprep.subr.mxu0 %v170
    %2601 = vmatpush1.msra.mxu0 %v169
    %2602 = vmatprep.subr.mxu0 %v176
    %2603 = vmatpush1.msra.mxu0 %v175
    %2604 = vmatprep.subr.mxu0 %v182
    %2605 = vmatpush1.msra.mxu0 %v181
    %2606 = vmatprep.subr.mxu0 %v188
    %2607 = vmatpush1.msra.mxu0 %v187
    %2608 = vmatprep.subr.mxu0 %v194
    %2609 = vmatpush1.msra.mxu0 %v193
    %2610 = vmatprep.subr.mxu0 %v200
    %2611 = vmatpush1.msra.mxu0 %v199
    %2612 = vmatprep.subr.mxu0 %v206
    %2613 = vmatpush1.msra.mxu0 %v205
    %2614 = vmatprep.subr.mxu0 %v212
    %2615 = vmatpush1.msra.mxu0 %v211
    %2616 = vmatprep.subr.mxu0 %v218
    %2617 = vmatpush1.msra.mxu0 %v217
    %2618 = vmatprep.subr.mxu0 %v224
    %2619 = vmatpush1.msra.mxu0 %v223
    %2620 = vmatprep.subr.mxu0 %v230
    %2621 = vmatpush1.msra.mxu0 %v229
    %2622 = vmatprep.subr.mxu0 %v236
    %2623 = vmatpush1.msra.mxu0 %v235
    %2624 = vmatprep.subr.mxu0 %v242
    %2625 = vmatpush1.msra.mxu0 %v241
    %2626 = vmatprep.subr.mxu0 %v248
    %2627 = vmatpush1.msra.mxu0 %v247
    %2628 = vmatprep.subr.mxu0 %v254
    %2629 = vmatpush1.msra.mxu0 %v253
    %2630 = vmatprep.subr.mxu0 %v260
    %2631 = vmatpush1.msra.mxu0 %v259
    %2632 = vmatprep.subr.mxu0 %v266
    %2633 = vmatpush1.msra.mxu0 %v265
    %2634 = vmatprep.mubr.f32.mxu0 %v2420
    %2635 = vmatmul.mubr.f32.gmra.mrb[0].mxu0 %v2419
    %v2636 = vpop.f32.mrb[0].mxu0
    %v2637 = vadd.f32 0.0, %v2636
    %v2638 = vpop.f32.mrb[0].mxu0
    %v2639 = vadd.f32 0.0, %v2638
    %2640 = vdwg.mxu0
    %v2641 = vadd.f32 %v2425, %v2495
    %v2642 = vxor.u32 %v2641, 2147483648
    %v2643 = vmul.f32 %v2642, 1.442695
    %v2644 = vpow.pop %v2643
    %v2645 = vadd.f32 %v2644, 1.0
    %v2646 = vrcp.pop %v2645
    %v2647 = vmul.f32 1.0, %v2646
    %v2648 = vadd.f32 %v2426, %v2497
    %v2649 = vxor.u32 %v2648, 2147483648
    %v2650 = vmul.f32 %v2649, 1.442695
    %v2651 = vpow.pop %v2650
    %v2652 = vadd.f32 %v2651, 1.0
    %v2653 = vrcp.pop %v2652
    %v2654 = vmul.f32 1.0, %v2653
    %v2655 = vadd.f32 %v2566, %v557
    %v2656 = vmul.f32 %v2647, %v2655
    %v2657 = vadd.f32 %v2427, %v2656
    %v2658 = vtanh.pop %v2657
    %v2659 = vsub.f32 1.0, %v2654
    %v2660 = vmul.f32 %v2659, %v2658
    %v2661 = vmul.f32 %v2654, %v2419
    %v2662 = vadd.f32 %v2660, %v2661
    %2663 = vmatprep.subr.mxu0 %v268
    %2664 = vmatpush1.msra.mxu0 %v267
    %2665 = vmatprep.subr.mxu0 %v271
    %2666 = vmatpush1.msra.mxu0 %v270
    %2667 = vmatprep.subr.mxu0 %v274
    %2668 = vmatpush1.msra.mxu0 %v273
    %2669 = vmatprep.subr.mxu0 %v277
    %2670 = vmatpush1.msra.mxu0 %v276
    %2671 = vmatprep.subr.mxu0 %v280
    %2672 = vmatpush1.msra.mxu0 %v279
    %2673 = vmatprep.subr.mxu0 %v283
    %2674 = vmatpush1.msra.mxu0 %v282
    %2675 = vmatprep.subr.mxu0 %v286
    %2676 = vmatpush1.msra.mxu0 %v285
    %2677 = vmatprep.subr.mxu0 %v289
    %2678 = vmatpush1.msra.mxu0 %v288
    %2679 = vmatprep.subr.mxu0 %v292
    %2680 = vmatpush1.msra.mxu0 %v291
    %2681 = vmatprep.subr.mxu0 %v295
    %2682 = vmatpush1.msra.mxu0 %v294
    %2683 = vmatprep.subr.mxu0 %v298
    %2684 = vmatpush1.msra.mxu0 %v297
    %2685 = vmatprep.subr.mxu0 %v301
    %2686 = vmatpush1.msra.mxu0 %v300
    %2687 = vmatprep.subr.mxu0 %v304
    %2688 = vmatpush1.msra.mxu0 %v303
    %2689 = vmatprep.subr.mxu0 %v307
    %2690 = vmatpush1.msra.mxu0 %v306
    %2691 = vmatprep.subr.mxu0 %v310
    %2692 = vmatpush1.msra.mxu0 %v309
    %2693 = vmatprep.subr.mxu0 %v313
    %2694 = vmatpush1.msra.mxu0 %v312
    %2695 = vmatprep.subr.mxu0 0.0
    %2696 = vmatpush1.msra.mxu0 0.0
    %2697 = vmatprep.subr.mxu0 0.0
    %2698 = vmatpush1.msra.mxu0 0.0
    %2699 = vmatprep.subr.mxu0 0.0
    %2700 = vmatpush1.msra.mxu0 0.0
    %2701 = vmatprep.subr.mxu0 0.0
    %2702 = vmatpush1.msra.mxu0 0.0
    %2703 = vmatprep.subr.mxu0 0.0
    %2704 = vmatpush1.msra.mxu0 0.0
    %2705 = vmatprep.subr.mxu0 0.0
    %2706 = vmatpush1.msra.mxu0 0.0
    %2707 = vmatprep.subr.mxu0 0.0
    %2708 = vmatpush1.msra.mxu0 0.0
    %2709 = vmatprep.subr.mxu0 0.0
    %2710 = vmatpush1.msra.mxu0 0.0
    %2711 = vmatprep.subr.mxu0 0.0
    %2712 = vmatpush1.msra.mxu0 0.0
    %2713 = vmatprep.subr.mxu0 0.0
    %2714 = vmatpush1.msra.mxu0 0.0
    %2715 = vmatprep.subr.mxu0 0.0
    %2716 = vmatpush1.msra.mxu0 0.0
    %2717 = vmatprep.subr.mxu0 0.0
    %2718 = vmatpush1.msra.mxu0 0.0
    %2719 = vmatprep.subr.mxu0 0.0
    %2720 = vmatpush1.msra.mxu0 0.0
    %2721 = vmatprep.subr.mxu0 0.0
    %2722 = vmatpush1.msra.mxu0 0.0
    %2723 = vmatprep.subr.mxu0 0.0
    %2724 = vmatpush1.msra.mxu0 0.0
    %2725 = vmatprep.subr.mxu0 0.0
    %2726 = vmatpush1.msra.mxu0 0.0
    %2727 = vmatprep.mubr.f32.mxu0 0.0
    %2728 = vmatmul.mubr.f32.gmra.mrb[0].mxu0 %v2662
    %v2729 = vpop.f32.mrb[0].mxu0
    %v2730 = vadd.f32 %v571, %v2729
    %v2731 = vpop.f32.mrb[0].mxu0
    %v2732 = vadd.f32 %v575, %v2731
    %2733 = vdwg.mxu0
    %2734 = vmatprep.subr.mxu0 0.0
    %2735 = vmatpush1.msra.mxu0 %v269
    %2736 = vmatprep.subr.mxu0 0.0
    %2737 = vmatpush1.msra.mxu0 %v272
    %2738 = vmatprep.subr.mxu0 0.0
    %2739 = vmatpush1.msra.mxu0 %v275
    %2740 = vmatprep.subr.mxu0 0.0
    %2741 = vmatpush1.msra.mxu0 %v278
    %2742 = vmatprep.subr.mxu0 0.0
    %2743 = vmatpush1.msra.mxu0 %v281
    %2744 = vmatprep.subr.mxu0 0.0
    %2745 = vmatpush1.msra.mxu0 %v284
    %2746 = vmatprep.subr.mxu0 0.0
    %2747 = vmatpush1.msra.mxu0 %v287
    %2748 = vmatprep.subr.mxu0 0.0
    %2749 = vmatpush1.msra.mxu0 %v290
    %2750 = vmatprep.subr.mxu0 0.0
    %2751 = vmatpush1.msra.mxu0 %v293
    %2752 = vmatprep.subr.mxu0 0.0
    %2753 = vmatpush1.msra.mxu0 %v296
    %2754 = vmatprep.subr.mxu0 0.0
    %2755 = vmatpush1.msra.mxu0 %v299
    %2756 = vmatprep.subr.mxu0 0.0
    %2757 = vmatpush1.msra.mxu0 %v302
    %2758 = vmatprep.subr.mxu0 0.0
    %2759 = vmatpush1.msra.mxu0 %v305
    %2760 = vmatprep.subr.mxu0 0.0
    %2761 = vmatpush1.msra.mxu0 %v308
    %2762 = vmatprep.subr.mxu0 0.0
    %2763 = vmatpush1.msra.mxu0 %v311
    %2764 = vmatprep.subr.mxu0 0.0
    %2765 = vmatpush1.msra.mxu0 %v314
    %2766 = vmatprep.subr.mxu0 0.0
    %2767 = vmatpush1.msra.mxu0 0.0
    %2768 = vmatprep.subr.mxu0 0.0
    %2769 = vmatpush1.msra.mxu0 0.0
    %2770 = vmatprep.subr.mxu0 0.0
    %2771 = vmatpush1.msra.mxu0 0.0
    %2772 = vmatprep.subr.mxu0 0.0
    %2773 = vmatpush1.msra.mxu0 0.0
    %2774 = vmatprep.subr.mxu0 0.0
    %2775 = vmatpush1.msra.mxu0 0.0
    %2776 = vmatprep.subr.mxu0 0.0
    %2777 = vmatpush1.msra.mxu0 0.0
    %2778 = vmatprep.subr.mxu0 0.0
    %2779 = vmatpush1.msra.mxu0 0.0
    %2780 = vmatprep.subr.mxu0 0.0
    %2781 = vmatpush1.msra.mxu0 0.0
    %2782 = vmatprep.subr.mxu0 0.0
    %2783 = vmatpush1.msra.mxu0 0.0
    %2784 = vmatprep.subr.mxu0 0.0
    %2785 = vmatpush1.msra.mxu0 0.0
    %2786 = vmatprep.subr.mxu0 0.0
    %2787 = vmatpush1.msra.mxu0 0.0
    %2788 = vmatprep.subr.mxu0 0.0
    %2789 = vmatpush1.msra.mxu0 0.0
    %2790 = vmatprep.subr.mxu0 0.0
    %2791 = vmatpush1.msra.mxu0 0.0
    %2792 = vmatprep.subr.mxu0 0.0
    %2793 = vmatpush1.msra.mxu0 0.0
    %2794 = vmatprep.subr.mxu0 0.0
    %2795 = vmatpush1.msra.mxu0 0.0
    %2796 = vmatprep.subr.mxu0 0.0
    %2797 = vmatpush1.msra.mxu0 0.0
    %2798 = vmatprep.mubr.f32.mxu0 0.0
    %2799 = vmatmul.mubr.f32.gmra.mrb[0].mxu0 %v2662
    %v2800 = vpop.f32.mrb[0].mxu0
    %v2801 = vadd.f32 %v579, %v2800
    %v2802 = vpop.f32.mrb[0].mxu0
    %2803 = vdwg.mxu0
    %v2804 = vadd.f32 %v2730, %v2568
    %v2805 = vxor.u32 %v2804, 2147483648
    %v2806 = vmul.f32 %v2805, 1.442695
    %v2807 = vpow.pop %v2806
    %v2808 = vadd.f32 %v2807, 1.0
    %v2809 = vrcp.pop %v2808
    %v2810 = vmul.f32 1.0, %v2809
    %v2811 = vadd.f32 %v2732, %v2637
    %v2812 = vxor.u32 %v2811, 2147483648
    %v2813 = vmul.f32 %v2812, 1.442695
    %v2814 = vpow.pop %v2813
    %v2815 = vadd.f32 %v2814, 1.0
    %v2816 = vrcp.pop %v2815
    %v2817 = vmul.f32 1.0, %v2816
    %v2818 = vadd.f32 %v2639, %v742
    %v2819 = vmul.f32 %v2810, %v2818
    %v2820 = vadd.f32 %v2801, %v2819
    %v2821 = vtanh.pop %v2820
    %v2822 = vsub.f32 1.0, %v2817
    %v2823 = vmul.f32 %v2822, %v2821
    %v2824 = vmul.f32 %v2817, %v2420
    %v2825 = vadd.f32 %v2823, %v2824
    %v2826 = vsel %vm2423, 1, 0
    %2827 = vset.pattern.permute.xlu0 0
    %2828 = vperm.xlu0 %2827, %v2826
    %v2829 = vpop.permute.xlu0 %2828
    %vm2830 = vcmp.eq.s32.totalorder %v2829, 1
    %v2831 = vsel %vm2830, %v2825, 0.0
    %s2832 = scalar_lea.vmem [#allocation10], 40
    %2833 = vst [vmem:[%s2832] sm:$0xff] %v2831
    %v2834 = vsel %vm2830, %v2662, %v2419
    %v2835 = vsel %vm2830, %v2825, %v2420
    %s2836 = sadd.s32 %s318, 6
    %v2837 = vstv %s2836
    %vm2838 = vcmp.lt.s32.totalorder %v2837, %v74
    %s2839 = scalar_lea.vmem [#allocation4], 144
    %v2840 = vld [vmem:[%s2839] sm:$0xff]
    %v2841 = vld [vmem:[%s2839 + $0x8] sm:$0xff]
    %v2842 = vld [vmem:[%s2839 + $0x10] sm:$0xff]
    %2843 = vmatprep.subr.mxu0 %v76
    %2844 = vmatpush1.msra.mxu0 %v75
    %2845 = vmatprep.subr.mxu0 %v82
    %2846 = vmatpush1.msra.mxu0 %v81
    %2847 = vmatprep.subr.mxu0 %v88
    %2848 = vmatpush1.msra.mxu0 %v87
    %2849 = vmatprep.subr.mxu0 %v94
    %2850 = vmatpush1.msra.mxu0 %v93
    %2851 = vmatprep.subr.mxu0 %v100
    %2852 = vmatpush1.msra.mxu0 %v99
    %2853 = vmatprep.subr.mxu0 %v106
    %2854 = vmatpush1.msra.mxu0 %v105
    %2855 = vmatprep.subr.mxu0 %v112
    %2856 = vmatpush1.msra.mxu0 %v111
    %2857 = vmatprep.subr.mxu0 %v118
    %2858 = vmatpush1.msra.mxu0 %v117
    %2859 = vmatprep.subr.mxu0 %v124
    %2860 = vmatpush1.msra.mxu0 %v123
    %2861 = vmatprep.subr.mxu0 %v130
    %2862 = vmatpush1.msra.mxu0 %v129
    %2863 = vmatprep.subr.mxu0 %v136
    %2864 = vmatpush1.msra.mxu0 %v135
    %2865 = vmatprep.subr.mxu0 %v142
    %2866 = vmatpush1.msra.mxu0 %v141
    %2867 = vmatprep.subr.mxu0 %v148
    %2868 = vmatpush1.msra.mxu0 %v147
    %2869 = vmatprep.subr.mxu0 %v154
    %2870 = vmatpush1.msra.mxu0 %v153
    %2871 = vmatprep.subr.mxu0 %v160
    %2872 = vmatpush1.msra.mxu0 %v159
    %2873 = vmatprep.subr.mxu0 %v166
    %2874 = vmatpush1.msra.mxu0 %v165
    %2875 = vmatprep.subr.mxu0 %v172
    %2876 = vmatpush1.msra.mxu0 %v171
    %2877 = vmatprep.subr.mxu0 %v178
    %2878 = vmatpush1.msra.mxu0 %v177
    %2879 = vmatprep.subr.mxu0 %v184
    %2880 = vmatpush1.msra.mxu0 %v183
    %2881 = vmatprep.subr.mxu0 %v190
    %2882 = vmatpush1.msra.mxu0 %v189
    %2883 = vmatprep.subr.mxu0 %v196
    %2884 = vmatpush1.msra.mxu0 %v195
    %2885 = vmatprep.subr.mxu0 %v202
    %2886 = vmatpush1.msra.mxu0 %v201
    %2887 = vmatprep.subr.mxu0 %v208
    %2888 = vmatpush1.msra.mxu0 %v207
    %2889 = vmatprep.subr.mxu0 %v214
    %2890 = vmatpush1.msra.mxu0 %v213
    %2891 = vmatprep.subr.mxu0 %v220
    %2892 = vmatpush1.msra.mxu0 %v219
    %2893 = vmatprep.subr.mxu0 %v226
    %2894 = vmatpush1.msra.mxu0 %v225
    %2895 = vmatprep.subr.mxu0 %v232
    %2896 = vmatpush1.msra.mxu0 %v231
    %2897 = vmatprep.subr.mxu0 %v238
    %2898 = vmatpush1.msra.mxu0 %v237
    %2899 = vmatprep.subr.mxu0 %v244
    %2900 = vmatpush1.msra.mxu0 %v243
    %2901 = vmatprep.subr.mxu0 %v250
    %2902 = vmatpush1.msra.mxu0 %v249
    %2903 = vmatprep.subr.mxu0 %v256
    %2904 = vmatpush1.msra.mxu0 %v255
    %2905 = vmatprep.subr.mxu0 %v262
    %2906 = vmatpush1.msra.mxu0 %v261
    %2907 = vmatprep.mubr.f32.mxu0 %v2835
    %2908 = vmatmul.mubr.f32.gmra.mrb[0].mxu0 %v2834
    %v2909 = vpop.f32.mrb[0].mxu0
    %v2910 = vadd.f32 0.0, %v2909
    %v2911 = vpop.f32.mrb[0].mxu0
    %v2912 = vadd.f32 0.0, %v2911
    %2913 = vdwg.mxu0
    %2914 = vmatprep.subr.mxu0 %v78
    %2915 = vmatpush1.msra.mxu0 %v77
    %2916 = vmatprep.subr.mxu0 %v84
    %2917 = vmatpush1.msra.mxu0 %v83
    %2918 = vmatprep.subr.mxu0 %v90
    %2919 = vmatpush1.msra.mxu0 %v89
    %2920 = vmatprep.subr.mxu0 %v96
    %2921 = vmatpush1.msra.mxu0 %v95
    %2922 = vmatprep.subr.mxu0 %v102
    %2923 = vmatpush1.msra.mxu0 %v101
    %2924 = vmatprep.subr.mxu0 %v108
    %2925 = vmatpush1.msra.mxu0 %v107
    %2926 = vmatprep.subr.mxu0 %v114
    %2927 = vmatpush1.msra.mxu0 %v113
    %2928 = vmatprep.subr.mxu0 %v120
    %2929 = vmatpush1.msra.mxu0 %v119
    %2930 = vmatprep.subr.mxu0 %v126
    %2931 = vmatpush1.msra.mxu0 %v125
    %2932 = vmatprep.subr.mxu0 %v132
    %2933 = vmatpush1.msra.mxu0 %v131
    %2934 = vmatprep.subr.mxu0 %v138
    %2935 = vmatpush1.msra.mxu0 %v137
    %2936 = vmatprep.subr.mxu0 %v144
    %2937 = vmatpush1.msra.mxu0 %v143
    %2938 = vmatprep.subr.mxu0 %v150
    %2939 = vmatpush1.msra.mxu0 %v149
    %2940 = vmatprep.subr.mxu0 %v156
    %2941 = vmatpush1.msra.mxu0 %v155
    %2942 = vmatprep.subr.mxu0 %v162
    %2943 = vmatpush1.msra.mxu0 %v161
    %2944 = vmatprep.subr.mxu0 %v168
    %2945 = vmatpush1.msra.mxu0 %v167
    %2946 = vmatprep.subr.mxu0 %v174
    %2947 = vmatpush1.msra.mxu0 %v173
    %2948 = vmatprep.subr.mxu0 %v180
    %2949 = vmatpush1.msra.mxu0 %v179
    %2950 = vmatprep.subr.mxu0 %v186
    %2951 = vmatpush1.msra.mxu0 %v185
    %2952 = vmatprep.subr.mxu0 %v192
    %2953 = vmatpush1.msra.mxu0 %v191
    %2954 = vmatprep.subr.mxu0 %v198
    %2955 = vmatpush1.msra.mxu0 %v197
    %2956 = vmatprep.subr.mxu0 %v204
    %2957 = vmatpush1.msra.mxu0 %v203
    %2958 = vmatprep.subr.mxu0 %v210
    %2959 = vmatpush1.msra.mxu0 %v209
    %2960 = vmatprep.subr.mxu0 %v216
    %2961 = vmatpush1.msra.mxu0 %v215
    %2962 = vmatprep.subr.mxu0 %v222
    %2963 = vmatpush1.msra.mxu0 %v221
    %2964 = vmatprep.subr.mxu0 %v228
    %2965 = vmatpush1.msra.mxu0 %v227
    %2966 = vmatprep.subr.mxu0 %v234
    %2967 = vmatpush1.msra.mxu0 %v233
    %2968 = vmatprep.subr.mxu0 %v240
    %2969 = vmatpush1.msra.mxu0 %v239
    %2970 = vmatprep.subr.mxu0 %v246
    %2971 = vmatpush1.msra.mxu0 %v245
    %2972 = vmatprep.subr.mxu0 %v252
    %2973 = vmatpush1.msra.mxu0 %v251
    %2974 = vmatprep.subr.mxu0 %v258
    %2975 = vmatpush1.msra.mxu0 %v257
    %2976 = vmatprep.subr.mxu0 %v264
    %2977 = vmatpush1.msra.mxu0 %v263
    %2978 = vmatprep.mubr.f32.mxu0 %v2835
    %2979 = vmatmul.mubr.f32.gmra.mrb[0].mxu0 %v2834
    %v2980 = vpop.f32.mrb[0].mxu0
    %v2981 = vadd.f32 0.0, %v2980
    %v2982 = vpop.f32.mrb[0].mxu0
    %v2983 = vadd.f32 0.0, %v2982
    %2984 = vdwg.mxu0
    %2985 = vmatprep.subr.mxu0 %v80
    %2986 = vmatpush1.msra.mxu0 %v79
    %2987 = vmatprep.subr.mxu0 %v86
    %2988 = vmatpush1.msra.mxu0 %v85
    %2989 = vmatprep.subr.mxu0 %v92
    %2990 = vmatpush1.msra.mxu0 %v91
    %2991 = vmatprep.subr.mxu0 %v98
    %2992 = vmatpush1.msra.mxu0 %v97
    %2993 = vmatprep.subr.mxu0 %v104
    %2994 = vmatpush1.msra.mxu0 %v103
    %2995 = vmatprep.subr.mxu0 %v110
    %2996 = vmatpush1.msra.mxu0 %v109
    %2997 = vmatprep.subr.mxu0 %v116
    %2998 = vmatpush1.msra.mxu0 %v115
    %2999 = vmatprep.subr.mxu0 %v122
    %3000 = vmatpush1.msra.mxu0 %v121
    %3001 = vmatprep.subr.mxu0 %v128
    %3002 = vmatpush1.msra.mxu0 %v127
    %3003 = vmatprep.subr.mxu0 %v134
    %3004 = vmatpush1.msra.mxu0 %v133
    %3005 = vmatprep.subr.mxu0 %v140
    %3006 = vmatpush1.msra.mxu0 %v139
    %3007 = vmatprep.subr.mxu0 %v146
    %3008 = vmatpush1.msra.mxu0 %v145
    %3009 = vmatprep.subr.mxu0 %v152
    %3010 = vmatpush1.msra.mxu0 %v151
    %3011 = vmatprep.subr.mxu0 %v158
    %3012 = vmatpush1.msra.mxu0 %v157
    %3013 = vmatprep.subr.mxu0 %v164
    %3014 = vmatpush1.msra.mxu0 %v163
    %3015 = vmatprep.subr.mxu0 %v170
    %3016 = vmatpush1.msra.mxu0 %v169
    %3017 = vmatprep.subr.mxu0 %v176
    %3018 = vmatpush1.msra.mxu0 %v175
    %3019 = vmatprep.subr.mxu0 %v182
    %3020 = vmatpush1.msra.mxu0 %v181
    %3021 = vmatprep.subr.mxu0 %v188
    %3022 = vmatpush1.msra.mxu0 %v187
    %3023 = vmatprep.subr.mxu0 %v194
    %3024 = vmatpush1.msra.mxu0 %v193
    %3025 = vmatprep.subr.mxu0 %v200
    %3026 = vmatpush1.msra.mxu0 %v199
    %3027 = vmatprep.subr.mxu0 %v206
    %3028 = vmatpush1.msra.mxu0 %v205
    %3029 = vmatprep.subr.mxu0 %v212
    %3030 = vmatpush1.msra.mxu0 %v211
    %3031 = vmatprep.subr.mxu0 %v218
    %3032 = vmatpush1.msra.mxu0 %v217
    %3033 = vmatprep.subr.mxu0 %v224
    %3034 = vmatpush1.msra.mxu0 %v223
    %3035 = vmatprep.subr.mxu0 %v230
    %3036 = vmatpush1.msra.mxu0 %v229
    %3037 = vmatprep.subr.mxu0 %v236
    %3038 = vmatpush1.msra.mxu0 %v235
    %3039 = vmatprep.subr.mxu0 %v242
    %3040 = vmatpush1.msra.mxu0 %v241
    %3041 = vmatprep.subr.mxu0 %v248
    %3042 = vmatpush1.msra.mxu0 %v247
    %3043 = vmatprep.subr.mxu0 %v254
    %3044 = vmatpush1.msra.mxu0 %v253
    %3045 = vmatprep.subr.mxu0 %v260
    %3046 = vmatpush1.msra.mxu0 %v259
    %3047 = vmatprep.subr.mxu0 %v266
    %3048 = vmatpush1.msra.mxu0 %v265
    %3049 = vmatprep.mubr.f32.mxu0 %v2835
    %3050 = vmatmul.mubr.f32.gmra.mrb[0].mxu0 %v2834
    %v3051 = vpop.f32.mrb[0].mxu0
    %v3052 = vadd.f32 0.0, %v3051
    %v3053 = vpop.f32.mrb[0].mxu0
    %v3054 = vadd.f32 0.0, %v3053
    %3055 = vdwg.mxu0
    %v3056 = vadd.f32 %v2840, %v2910
    %v3057 = vxor.u32 %v3056, 2147483648
    %v3058 = vmul.f32 %v3057, 1.442695
    %v3059 = vpow.pop %v3058
    %v3060 = vadd.f32 %v3059, 1.0
    %v3061 = vrcp.pop %v3060
    %v3062 = vmul.f32 1.0, %v3061
    %v3063 = vadd.f32 %v2841, %v2912
    %v3064 = vxor.u32 %v3063, 2147483648
    %v3065 = vmul.f32 %v3064, 1.442695
    %v3066 = vpow.pop %v3065
    %v3067 = vadd.f32 %v3066, 1.0
    %v3068 = vrcp.pop %v3067
    %v3069 = vmul.f32 1.0, %v3068
    %v3070 = vadd.f32 %v2981, %v557
    %v3071 = vmul.f32 %v3062, %v3070
    %v3072 = vadd.f32 %v2842, %v3071
    %v3073 = vtanh.pop %v3072
    %v3074 = vsub.f32 1.0, %v3069
    %v3075 = vmul.f32 %v3074, %v3073
    %v3076 = vmul.f32 %v3069, %v2834
    %v3077 = vadd.f32 %v3075, %v3076
    %3078 = vmatprep.subr.mxu0 %v268
    %3079 = vmatpush1.msra.mxu0 %v267
    %3080 = vmatprep.subr.mxu0 %v271
    %3081 = vmatpush1.msra.mxu0 %v270
    %3082 = vmatprep.subr.mxu0 %v274
    %3083 = vmatpush1.msra.mxu0 %v273
    %3084 = vmatprep.subr.mxu0 %v277
    %3085 = vmatpush1.msra.mxu0 %v276
    %3086 = vmatprep.subr.mxu0 %v280
    %3087 = vmatpush1.msra.mxu0 %v279
    %3088 = vmatprep.subr.mxu0 %v283
    %3089 = vmatpush1.msra.mxu0 %v282
    %3090 = vmatprep.subr.mxu0 %v286
    %3091 = vmatpush1.msra.mxu0 %v285
    %3092 = vmatprep.subr.mxu0 %v289
    %3093 = vmatpush1.msra.mxu0 %v288
    %3094 = vmatprep.subr.mxu0 %v292
    %3095 = vmatpush1.msra.mxu0 %v291
    %3096 = vmatprep.subr.mxu0 %v295
    %3097 = vmatpush1.msra.mxu0 %v294
    %3098 = vmatprep.subr.mxu0 %v298
    %3099 = vmatpush1.msra.mxu0 %v297
    %3100 = vmatprep.subr.mxu0 %v301
    %3101 = vmatpush1.msra.mxu0 %v300
    %3102 = vmatprep.subr.mxu0 %v304
    %3103 = vmatpush1.msra.mxu0 %v303
    %3104 = vmatprep.subr.mxu0 %v307
    %3105 = vmatpush1.msra.mxu0 %v306
    %3106 = vmatprep.subr.mxu0 %v310
    %3107 = vmatpush1.msra.mxu0 %v309
    %3108 = vmatprep.subr.mxu0 %v313
    %3109 = vmatpush1.msra.mxu0 %v312
    %3110 = vmatprep.subr.mxu0 0.0
    %3111 = vmatpush1.msra.mxu0 0.0
    %3112 = vmatprep.subr.mxu0 0.0
    %3113 = vmatpush1.msra.mxu0 0.0
    %3114 = vmatprep.subr.mxu0 0.0
    %3115 = vmatpush1.msra.mxu0 0.0
    %3116 = vmatprep.subr.mxu0 0.0
    %3117 = vmatpush1.msra.mxu0 0.0
    %3118 = vmatprep.subr.mxu0 0.0
    %3119 = vmatpush1.msra.mxu0 0.0
    %3120 = vmatprep.subr.mxu0 0.0
    %3121 = vmatpush1.msra.mxu0 0.0
    %3122 = vmatprep.subr.mxu0 0.0
    %3123 = vmatpush1.msra.mxu0 0.0
    %3124 = vmatprep.subr.mxu0 0.0
    %3125 = vmatpush1.msra.mxu0 0.0
    %3126 = vmatprep.subr.mxu0 0.0
    %3127 = vmatpush1.msra.mxu0 0.0
    %3128 = vmatprep.subr.mxu0 0.0
    %3129 = vmatpush1.msra.mxu0 0.0
    %3130 = vmatprep.subr.mxu0 0.0
    %3131 = vmatpush1.msra.mxu0 0.0
    %3132 = vmatprep.subr.mxu0 0.0
    %3133 = vmatpush1.msra.mxu0 0.0
    %3134 = vmatprep.subr.mxu0 0.0
    %3135 = vmatpush1.msra.mxu0 0.0
    %3136 = vmatprep.subr.mxu0 0.0
    %3137 = vmatpush1.msra.mxu0 0.0
    %3138 = vmatprep.subr.mxu0 0.0
    %3139 = vmatpush1.msra.mxu0 0.0
    %3140 = vmatprep.subr.mxu0 0.0
    %3141 = vmatpush1.msra.mxu0 0.0
    %3142 = vmatprep.mubr.f32.mxu0 0.0
    %3143 = vmatmul.mubr.f32.gmra.mrb[0].mxu0 %v3077
    %v3144 = vpop.f32.mrb[0].mxu0
    %v3145 = vadd.f32 %v571, %v3144
    %v3146 = vpop.f32.mrb[0].mxu0
    %v3147 = vadd.f32 %v575, %v3146
    %3148 = vdwg.mxu0
    %3149 = vmatprep.subr.mxu0 0.0
    %3150 = vmatpush1.msra.mxu0 %v269
    %3151 = vmatprep.subr.mxu0 0.0
    %3152 = vmatpush1.msra.mxu0 %v272
    %3153 = vmatprep.subr.mxu0 0.0
    %3154 = vmatpush1.msra.mxu0 %v275
    %3155 = vmatprep.subr.mxu0 0.0
    %3156 = vmatpush1.msra.mxu0 %v278
    %3157 = vmatprep.subr.mxu0 0.0
    %3158 = vmatpush1.msra.mxu0 %v281
    %3159 = vmatprep.subr.mxu0 0.0
    %3160 = vmatpush1.msra.mxu0 %v284
    %3161 = vmatprep.subr.mxu0 0.0
    %3162 = vmatpush1.msra.mxu0 %v287
    %3163 = vmatprep.subr.mxu0 0.0
    %3164 = vmatpush1.msra.mxu0 %v290
    %3165 = vmatprep.subr.mxu0 0.0
    %3166 = vmatpush1.msra.mxu0 %v293
    %3167 = vmatprep.subr.mxu0 0.0
    %3168 = vmatpush1.msra.mxu0 %v296
    %3169 = vmatprep.subr.mxu0 0.0
    %3170 = vmatpush1.msra.mxu0 %v299
    %3171 = vmatprep.subr.mxu0 0.0
    %3172 = vmatpush1.msra.mxu0 %v302
    %3173 = vmatprep.subr.mxu0 0.0
    %3174 = vmatpush1.msra.mxu0 %v305
    %3175 = vmatprep.subr.mxu0 0.0
    %3176 = vmatpush1.msra.mxu0 %v308
    %3177 = vmatprep.subr.mxu0 0.0
    %3178 = vmatpush1.msra.mxu0 %v311
    %3179 = vmatprep.subr.mxu0 0.0
    %3180 = vmatpush1.msra.mxu0 %v314
    %3181 = vmatprep.subr.mxu0 0.0
    %3182 = vmatpush1.msra.mxu0 0.0
    %3183 = vmatprep.subr.mxu0 0.0
    %3184 = vmatpush1.msra.mxu0 0.0
    %3185 = vmatprep.subr.mxu0 0.0
    %3186 = vmatpush1.msra.mxu0 0.0
    %3187 = vmatprep.subr.mxu0 0.0
    %3188 = vmatpush1.msra.mxu0 0.0
    %3189 = vmatprep.subr.mxu0 0.0
    %3190 = vmatpush1.msra.mxu0 0.0
    %3191 = vmatprep.subr.mxu0 0.0
    %3192 = vmatpush1.msra.mxu0 0.0
    %3193 = vmatprep.subr.mxu0 0.0
    %3194 = vmatpush1.msra.mxu0 0.0
    %3195 = vmatprep.subr.mxu0 0.0
    %3196 = vmatpush1.msra.mxu0 0.0
    %3197 = vmatprep.subr.mxu0 0.0
    %3198 = vmatpush1.msra.mxu0 0.0
    %3199 = vmatprep.subr.mxu0 0.0
    %3200 = vmatpush1.msra.mxu0 0.0
    %3201 = vmatprep.subr.mxu0 0.0
    %3202 = vmatpush1.msra.mxu0 0.0
    %3203 = vmatprep.subr.mxu0 0.0
    %3204 = vmatpush1.msra.mxu0 0.0
    %3205 = vmatprep.subr.mxu0 0.0
    %3206 = vmatpush1.msra.mxu0 0.0
    %3207 = vmatprep.subr.mxu0 0.0
    %3208 = vmatpush1.msra.mxu0 0.0
    %3209 = vmatprep.subr.mxu0 0.0
    %3210 = vmatpush1.msra.mxu0 0.0
    %3211 = vmatprep.subr.mxu0 0.0
    %3212 = vmatpush1.msra.mxu0 0.0
    %3213 = vmatprep.mubr.f32.mxu0 0.0
    %3214 = vmatmul.mubr.f32.gmra.mrb[0].mxu0 %v3077
    %v3215 = vpop.f32.mrb[0].mxu0
    %v3216 = vadd.f32 %v579, %v3215
    %v3217 = vpop.f32.mrb[0].mxu0
    %3218 = vdwg.mxu0
    %v3219 = vadd.f32 %v3145, %v2983
    %v3220 = vxor.u32 %v3219, 2147483648
    %v3221 = vmul.f32 %v3220, 1.442695
    %v3222 = vpow.pop %v3221
    %v3223 = vadd.f32 %v3222, 1.0
    %v3224 = vrcp.pop %v3223
    %v3225 = vmul.f32 1.0, %v3224
    %v3226 = vadd.f32 %v3147, %v3052
    %v3227 = vxor.u32 %v3226, 2147483648
    %v3228 = vmul.f32 %v3227, 1.442695
    %v3229 = vpow.pop %v3228
    %v3230 = vadd.f32 %v3229, 1.0
    %v3231 = vrcp.pop %v3230
    %v3232 = vmul.f32 1.0, %v3231
    %v3233 = vadd.f32 %v3054, %v742
    %v3234 = vmul.f32 %v3225, %v3233
    %v3235 = vadd.f32 %v3216, %v3234
    %v3236 = vtanh.pop %v3235
    %v3237 = vsub.f32 1.0, %v3232
    %v3238 = vmul.f32 %v3237, %v3236
    %v3239 = vmul.f32 %v3232, %v2835
    %v3240 = vadd.f32 %v3238, %v3239
    %v3241 = vsel %vm2838, 1, 0
    %3242 = vset.pattern.permute.xlu0 0
    %3243 = vperm.xlu0 %3242, %v3241
    %v3244 = vpop.permute.xlu0 %3243
    %vm3245 = vcmp.eq.s32.totalorder %v3244, 1
    %v3246 = vsel %vm3245, %v3240, 0.0
    %s3247 = scalar_lea.vmem [#allocation10], 48
    %3248 = vst [vmem:[%s3247] sm:$0xff] %v3246
    %v3249 = vsel %vm3245, %v3077, %v2834
    %v3250 = vsel %vm3245, %v3240, %v2835
    %s3251 = sadd.s32 %s318, 7
    %v3252 = vstv %s3251
    %vm3253 = vcmp.lt.s32.totalorder %v3252, %v74
    %s3254 = scalar_lea.vmem [#allocation4], 168
    %v3255 = vld [vmem:[%s3254] sm:$0xff]
    %v3256 = vld [vmem:[%s3254 + $0x8] sm:$0xff]
    %v3257 = vld [vmem:[%s3254 + $0x10] sm:$0xff]
    %3258 = vmatprep.subr.mxu0 %v76
    %3259 = vmatpush1.msra.mxu0 %v75
    %3260 = vmatprep.subr.mxu0 %v82
    %3261 = vmatpush1.msra.mxu0 %v81
    %3262 = vmatprep.subr.mxu0 %v88
    %3263 = vmatpush1.msra.mxu0 %v87
    %3264 = vmatprep.subr.mxu0 %v94
    %3265 = vmatpush1.msra.mxu0 %v93
    %3266 = vmatprep.subr.mxu0 %v100
    %3267 = vmatpush1.msra.mxu0 %v99
    %3268 = vmatprep.subr.mxu0 %v106
    %3269 = vmatpush1.msra.mxu0 %v105
    %3270 = vmatprep.subr.mxu0 %v112
    %3271 = vmatpush1.msra.mxu0 %v111
    %3272 = vmatprep.subr.mxu0 %v118
    %3273 = vmatpush1.msra.mxu0 %v117
    %3274 = vmatprep.subr.mxu0 %v124
    %3275 = vmatpush1.msra.mxu0 %v123
    %3276 = vmatprep.subr.mxu0 %v130
    %3277 = vmatpush1.msra.mxu0 %v129
    %3278 = vmatprep.subr.mxu0 %v136
    %3279 = vmatpush1.msra.mxu0 %v135
    %3280 = vmatprep.subr.mxu0 %v142
    %3281 = vmatpush1.msra.mxu0 %v141
    %3282 = vmatprep.subr.mxu0 %v148
    %3283 = vmatpush1.msra.mxu0 %v147
    %3284 = vmatprep.subr.mxu0 %v154
    %3285 = vmatpush1.msra.mxu0 %v153
    %3286 = vmatprep.subr.mxu0 %v160
    %3287 = vmatpush1.msra.mxu0 %v159
    %3288 = vmatprep.subr.mxu0 %v166
    %3289 = vmatpush1.msra.mxu0 %v165
    %3290 = vmatprep.subr.mxu0 %v172
    %3291 = vmatpush1.msra.mxu0 %v171
    %3292 = vmatprep.subr.mxu0 %v178
    %3293 = vmatpush1.msra.mxu0 %v177
    %3294 = vmatprep.subr.mxu0 %v184
    %3295 = vmatpush1.msra.mxu0 %v183
    %3296 = vmatprep.subr.mxu0 %v190
    %3297 = vmatpush1.msra.mxu0 %v189
    %3298 = vmatprep.subr.mxu0 %v196
    %3299 = vmatpush1.msra.mxu0 %v195
    %3300 = vmatprep.subr.mxu0 %v202
    %3301 = vmatpush1.msra.mxu0 %v201
    %3302 = vmatprep.subr.mxu0 %v208
    %3303 = vmatpush1.msra.mxu0 %v207
    %3304 = vmatprep.subr.mxu0 %v214
    %3305 = vmatpush1.msra.mxu0 %v213
    %3306 = vmatprep.subr.mxu0 %v220
    %3307 = vmatpush1.msra.mxu0 %v219
    %3308 = vmatprep.subr.mxu0 %v226
    %3309 = vmatpush1.msra.mxu0 %v225
    %3310 = vmatprep.subr.mxu0 %v232
    %3311 = vmatpush1.msra.mxu0 %v231
    %3312 = vmatprep.subr.mxu0 %v238
    %3313 = vmatpush1.msra.mxu0 %v237
    %3314 = vmatprep.subr.mxu0 %v244
    %3315 = vmatpush1.msra.mxu0 %v243
    %3316 = vmatprep.subr.mxu0 %v250
    %3317 = vmatpush1.msra.mxu0 %v249
    %3318 = vmatprep.subr.mxu0 %v256
    %3319 = vmatpush1.msra.mxu0 %v255
    %3320 = vmatprep.subr.mxu0 %v262
    %3321 = vmatpush1.msra.mxu0 %v261
    %3322 = vmatprep.mubr.f32.mxu0 %v3250
    %3323 = vmatmul.mubr.f32.gmra.mrb[0].mxu0 %v3249
    %v3324 = vpop.f32.mrb[0].mxu0
    %v3325 = vadd.f32 0.0, %v3324
    %v3326 = vpop.f32.mrb[0].mxu0
    %v3327 = vadd.f32 0.0, %v3326
    %3328 = vdwg.mxu0
    %3329 = vmatprep.subr.mxu0 %v78
    %3330 = vmatpush1.msra.mxu0 %v77
    %3331 = vmatprep.subr.mxu0 %v84
    %3332 = vmatpush1.msra.mxu0 %v83
    %3333 = vmatprep.subr.mxu0 %v90
    %3334 = vmatpush1.msra.mxu0 %v89
    %3335 = vmatprep.subr.mxu0 %v96
    %3336 = vmatpush1.msra.mxu0 %v95
    %3337 = vmatprep.subr.mxu0 %v102
    %3338 = vmatpush1.msra.mxu0 %v101
    %3339 = vmatprep.subr.mxu0 %v108
    %3340 = vmatpush1.msra.mxu0 %v107
    %3341 = vmatprep.subr.mxu0 %v114
    %3342 = vmatpush1.msra.mxu0 %v113
    %3343 = vmatprep.subr.mxu0 %v120
    %3344 = vmatpush1.msra.mxu0 %v119
    %3345 = vmatprep.subr.mxu0 %v126
    %3346 = vmatpush1.msra.mxu0 %v125
    %3347 = vmatprep.subr.mxu0 %v132
    %3348 = vmatpush1.msra.mxu0 %v131
    %3349 = vmatprep.subr.mxu0 %v138
    %3350 = vmatpush1.msra.mxu0 %v137
    %3351 = vmatprep.subr.mxu0 %v144
    %3352 = vmatpush1.msra.mxu0 %v143
    %3353 = vmatprep.subr.mxu0 %v150
    %3354 = vmatpush1.msra.mxu0 %v149
    %3355 = vmatprep.subr.mxu0 %v156
    %3356 = vmatpush1.msra.mxu0 %v155
    %3357 = vmatprep.subr.mxu0 %v162
    %3358 = vmatpush1.msra.mxu0 %v161
    %3359 = vmatprep.subr.mxu0 %v168
    %3360 = vmatpush1.msra.mxu0 %v167
    %3361 = vmatprep.subr.mxu0 %v174
    %3362 = vmatpush1.msra.mxu0 %v173
    %3363 = vmatprep.subr.mxu0 %v180
    %3364 = vmatpush1.msra.mxu0 %v179
    %3365 = vmatprep.subr.mxu0 %v186
    %3366 = vmatpush1.msra.mxu0 %v185
    %3367 = vmatprep.subr.mxu0 %v192
    %3368 = vmatpush1.msra.mxu0 %v191
    %3369 = vmatprep.subr.mxu0 %v198
    %3370 = vmatpush1.msra.mxu0 %v197
    %3371 = vmatprep.subr.mxu0 %v204
    %3372 = vmatpush1.msra.mxu0 %v203
    %3373 = vmatprep.subr.mxu0 %v210
    %3374 = vmatpush1.msra.mxu0 %v209
    %3375 = vmatprep.subr.mxu0 %v216
    %3376 = vmatpush1.msra.mxu0 %v215
    %3377 = vmatprep.subr.mxu0 %v222
    %3378 = vmatpush1.msra.mxu0 %v221
    %3379 = vmatprep.subr.mxu0 %v228
    %3380 = vmatpush1.msra.mxu0 %v227
    %3381 = vmatprep.subr.mxu0 %v234
    %3382 = vmatpush1.msra.mxu0 %v233
    %3383 = vmatprep.subr.mxu0 %v240
    %3384 = vmatpush1.msra.mxu0 %v239
    %3385 = vmatprep.subr.mxu0 %v246
    %3386 = vmatpush1.msra.mxu0 %v245
    %3387 = vmatprep.subr.mxu0 %v252
    %3388 = vmatpush1.msra.mxu0 %v251
    %3389 = vmatprep.subr.mxu0 %v258
    %3390 = vmatpush1.msra.mxu0 %v257
    %3391 = vmatprep.subr.mxu0 %v264
    %3392 = vmatpush1.msra.mxu0 %v263
    %3393 = vmatprep.mubr.f32.mxu0 %v3250
    %3394 = vmatmul.mubr.f32.gmra.mrb[0].mxu0 %v3249
    %v3395 = vpop.f32.mrb[0].mxu0
    %v3396 = vadd.f32 0.0, %v3395
    %v3397 = vpop.f32.mrb[0].mxu0
    %v3398 = vadd.f32 0.0, %v3397
    %3399 = vdwg.mxu0
    %3400 = vmatprep.subr.mxu0 %v80
    %3401 = vmatpush1.msra.mxu0 %v79
    %3402 = vmatprep.subr.mxu0 %v86
    %3403 = vmatpush1.msra.mxu0 %v85
    %3404 = vmatprep.subr.mxu0 %v92
    %3405 = vmatpush1.msra.mxu0 %v91
    %3406 = vmatprep.subr.mxu0 %v98
    %3407 = vmatpush1.msra.mxu0 %v97
    %3408 = vmatprep.subr.mxu0 %v104
    %3409 = vmatpush1.msra.mxu0 %v103
    %3410 = vmatprep.subr.mxu0 %v110
    %3411 = vmatpush1.msra.mxu0 %v109
    %3412 = vmatprep.subr.mxu0 %v116
    %3413 = vmatpush1.msra.mxu0 %v115
    %3414 = vmatprep.subr.mxu0 %v122
    %3415 = vmatpush1.msra.mxu0 %v121
    %3416 = vmatprep.subr.mxu0 %v128
    %3417 = vmatpush1.msra.mxu0 %v127
    %3418 = vmatprep.subr.mxu0 %v134
    %3419 = vmatpush1.msra.mxu0 %v133
    %3420 = vmatprep.subr.mxu0 %v140
    %3421 = vmatpush1.msra.mxu0 %v139
    %3422 = vmatprep.subr.mxu0 %v146
    %3423 = vmatpush1.msra.mxu0 %v145
    %3424 = vmatprep.subr.mxu0 %v152
    %3425 = vmatpush1.msra.mxu0 %v151
    %3426 = vmatprep.subr.mxu0 %v158
    %3427 = vmatpush1.msra.mxu0 %v157
    %3428 = vmatprep.subr.mxu0 %v164
    %3429 = vmatpush1.msra.mxu0 %v163
    %3430 = vmatprep.subr.mxu0 %v170
    %3431 = vmatpush1.msra.mxu0 %v169
    %3432 = vmatprep.subr.mxu0 %v176
    %3433 = vmatpush1.msra.mxu0 %v175
    %3434 = vmatprep.subr.mxu0 %v182
    %3435 = vmatpush1.msra.mxu0 %v181
    %3436 = vmatprep.subr.mxu0 %v188
    %3437 = vmatpush1.msra.mxu0 %v187
    %3438 = vmatprep.subr.mxu0 %v194
    %3439 = vmatpush1.msra.mxu0 %v193
    %3440 = vmatprep.subr.mxu0 %v200
    %3441 = vmatpush1.msra.mxu0 %v199
    %3442 = vmatprep.subr.mxu0 %v206
    %3443 = vmatpush1.msra.mxu0 %v205
    %3444 = vmatprep.subr.mxu0 %v212
    %3445 = vmatpush1.msra.mxu0 %v211
    %3446 = vmatprep.subr.mxu0 %v218
    %3447 = vmatpush1.msra.mxu0 %v217
    %3448 = vmatprep.subr.mxu0 %v224
    %3449 = vmatpush1.msra.mxu0 %v223
    %3450 = vmatprep.subr.mxu0 %v230
    %3451 = vmatpush1.msra.mxu0 %v229
    %3452 = vmatprep.subr.mxu0 %v236
    %3453 = vmatpush1.msra.mxu0 %v235
    %3454 = vmatprep.subr.mxu0 %v242
    %3455 = vmatpush1.msra.mxu0 %v241
    %3456 = vmatprep.subr.mxu0 %v248
    %3457 = vmatpush1.msra.mxu0 %v247
    %3458 = vmatprep.subr.mxu0 %v254
    %3459 = vmatpush1.msra.mxu0 %v253
    %3460 = vmatprep.subr.mxu0 %v260
    %3461 = vmatpush1.msra.mxu0 %v259
    %3462 = vmatprep.subr.mxu0 %v266
    %3463 = vmatpush1.msra.mxu0 %v265
    %3464 = vmatprep.mubr.f32.mxu0 %v3250
    %3465 = vmatmul.mubr.f32.gmra.mrb[0].mxu0 %v3249
    %v3466 = vpop.f32.mrb[0].mxu0
    %v3467 = vadd.f32 0.0, %v3466
    %v3468 = vpop.f32.mrb[0].mxu0
    %v3469 = vadd.f32 0.0, %v3468
    %3470 = vdwg.mxu0
    %v3471 = vadd.f32 %v3255, %v3325
    %v3472 = vxor.u32 %v3471, 2147483648
    %v3473 = vmul.f32 %v3472, 1.442695
    %v3474 = vpow.pop %v3473
    %v3475 = vadd.f32 %v3474, 1.0
    %v3476 = vrcp.pop %v3475
    %v3477 = vmul.f32 1.0, %v3476
    %v3478 = vadd.f32 %v3256, %v3327
    %v3479 = vxor.u32 %v3478, 2147483648
    %v3480 = vmul.f32 %v3479, 1.442695
    %v3481 = vpow.pop %v3480
    %v3482 = vadd.f32 %v3481, 1.0
    %v3483 = vrcp.pop %v3482
    %v3484 = vmul.f32 1.0, %v3483
    %v3485 = vadd.f32 %v3396, %v557
    %v3486 = vmul.f32 %v3477, %v3485
    %v3487 = vadd.f32 %v3257, %v3486
    %v3488 = vtanh.pop %v3487
    %v3489 = vsub.f32 1.0, %v3484
    %v3490 = vmul.f32 %v3489, %v3488
    %v3491 = vmul.f32 %v3484, %v3249
    %v3492 = vadd.f32 %v3490, %v3491
    %3493 = vmatprep.subr.mxu0 %v268
    %3494 = vmatpush1.msra.mxu0 %v267
    %3495 = vmatprep.subr.mxu0 %v271
    %3496 = vmatpush1.msra.mxu0 %v270
    %3497 = vmatprep.subr.mxu0 %v274
    %3498 = vmatpush1.msra.mxu0 %v273
    %3499 = vmatprep.subr.mxu0 %v277
    %3500 = vmatpush1.msra.mxu0 %v276
    %3501 = vmatprep.subr.mxu0 %v280
    %3502 = vmatpush1.msra.mxu0 %v279
    %3503 = vmatprep.subr.mxu0 %v283
    %3504 = vmatpush1.msra.mxu0 %v282
    %3505 = vmatprep.subr.mxu0 %v286
    %3506 = vmatpush1.msra.mxu0 %v285
    %3507 = vmatprep.subr.mxu0 %v289
    %3508 = vmatpush1.msra.mxu0 %v288
    %3509 = vmatprep.subr.mxu0 %v292
    %3510 = vmatpush1.msra.mxu0 %v291
    %3511 = vmatprep.subr.mxu0 %v295
    %3512 = vmatpush1.msra.mxu0 %v294
    %3513 = vmatprep.subr.mxu0 %v298
    %3514 = vmatpush1.msra.mxu0 %v297
    %3515 = vmatprep.subr.mxu0 %v301
    %3516 = vmatpush1.msra.mxu0 %v300
    %3517 = vmatprep.subr.mxu0 %v304
    %3518 = vmatpush1.msra.mxu0 %v303
    %3519 = vmatprep.subr.mxu0 %v307
    %3520 = vmatpush1.msra.mxu0 %v306
    %3521 = vmatprep.subr.mxu0 %v310
    %3522 = vmatpush1.msra.mxu0 %v309
    %3523 = vmatprep.subr.mxu0 %v313
    %3524 = vmatpush1.msra.mxu0 %v312
    %3525 = vmatprep.subr.mxu0 0.0
    %3526 = vmatpush1.msra.mxu0 0.0
    %3527 = vmatprep.subr.mxu0 0.0
    %3528 = vmatpush1.msra.mxu0 0.0
    %3529 = vmatprep.subr.mxu0 0.0
    %3530 = vmatpush1.msra.mxu0 0.0
    %3531 = vmatprep.subr.mxu0 0.0
    %3532 = vmatpush1.msra.mxu0 0.0
    %3533 = vmatprep.subr.mxu0 0.0
    %3534 = vmatpush1.msra.mxu0 0.0
    %3535 = vmatprep.subr.mxu0 0.0
    %3536 = vmatpush1.msra.mxu0 0.0
    %3537 = vmatprep.subr.mxu0 0.0
    %3538 = vmatpush1.msra.mxu0 0.0
    %3539 = vmatprep.subr.mxu0 0.0
    %3540 = vmatpush1.msra.mxu0 0.0
    %3541 = vmatprep.subr.mxu0 0.0
    %3542 = vmatpush1.msra.mxu0 0.0
    %3543 = vmatprep.subr.mxu0 0.0
    %3544 = vmatpush1.msra.mxu0 0.0
    %3545 = vmatprep.subr.mxu0 0.0
    %3546 = vmatpush1.msra.mxu0 0.0
    %3547 = vmatprep.subr.mxu0 0.0
    %3548 = vmatpush1.msra.mxu0 0.0
    %3549 = vmatprep.subr.mxu0 0.0
    %3550 = vmatpush1.msra.mxu0 0.0
    %3551 = vmatprep.subr.mxu0 0.0
    %3552 = vmatpush1.msra.mxu0 0.0
    %3553 = vmatprep.subr.mxu0 0.0
    %3554 = vmatpush1.msra.mxu0 0.0
    %3555 = vmatprep.subr.mxu0 0.0
    %3556 = vmatpush1.msra.mxu0 0.0
    %3557 = vmatprep.mubr.f32.mxu0 0.0
    %3558 = vmatmul.mubr.f32.gmra.mrb[0].mxu0 %v3492
    %v3559 = vpop.f32.mrb[0].mxu0
    %v3560 = vadd.f32 %v571, %v3559
    %v3561 = vpop.f32.mrb[0].mxu0
    %v3562 = vadd.f32 %v575, %v3561
    %3563 = vdwg.mxu0
    %3564 = vmatprep.subr.mxu0 0.0
    %3565 = vmatpush1.msra.mxu0 %v269
    %3566 = vmatprep.subr.mxu0 0.0
    %3567 = vmatpush1.msra.mxu0 %v272
    %3568 = vmatprep.subr.mxu0 0.0
    %3569 = vmatpush1.msra.mxu0 %v275
    %3570 = vmatprep.subr.mxu0 0.0
    %3571 = vmatpush1.msra.mxu0 %v278
    %3572 = vmatprep.subr.mxu0 0.0
    %3573 = vmatpush1.msra.mxu0 %v281
    %3574 = vmatprep.subr.mxu0 0.0
    %3575 = vmatpush1.msra.mxu0 %v284
    %3576 = vmatprep.subr.mxu0 0.0
    %3577 = vmatpush1.msra.mxu0 %v287
    %3578 = vmatprep.subr.mxu0 0.0
    %3579 = vmatpush1.msra.mxu0 %v290
    %3580 = vmatprep.subr.mxu0 0.0
    %3581 = vmatpush1.msra.mxu0 %v293
    %3582 = vmatprep.subr.mxu0 0.0
    %3583 = vmatpush1.msra.mxu0 %v296
    %3584 = vmatprep.subr.mxu0 0.0
    %3585 = vmatpush1.msra.mxu0 %v299
    %3586 = vmatprep.subr.mxu0 0.0
    %3587 = vmatpush1.msra.mxu0 %v302
    %3588 = vmatprep.subr.mxu0 0.0
    %3589 = vmatpush1.msra.mxu0 %v305
    %3590 = vmatprep.subr.mxu0 0.0
    %3591 = vmatpush1.msra.mxu0 %v308
    %3592 = vmatprep.subr.mxu0 0.0
    %3593 = vmatpush1.msra.mxu0 %v311
    %3594 = vmatprep.subr.mxu0 0.0
    %3595 = vmatpush1.msra.mxu0 %v314
    %3596 = vmatprep.subr.mxu0 0.0
    %3597 = vmatpush1.msra.mxu0 0.0
    %3598 = vmatprep.subr.mxu0 0.0
    %3599 = vmatpush1.msra.mxu0 0.0
    %3600 = vmatprep.subr.mxu0 0.0
    %3601 = vmatpush1.msra.mxu0 0.0
    %3602 = vmatprep.subr.mxu0 0.0
    %3603 = vmatpush1.msra.mxu0 0.0
    %3604 = vmatprep.subr.mxu0 0.0
    %3605 = vmatpush1.msra.mxu0 0.0
    %3606 = vmatprep.subr.mxu0 0.0
    %3607 = vmatpush1.msra.mxu0 0.0
    %3608 = vmatprep.subr.mxu0 0.0
    %3609 = vmatpush1.msra.mxu0 0.0
    %3610 = vmatprep.subr.mxu0 0.0
    %3611 = vmatpush1.msra.mxu0 0.0
    %3612 = vmatprep.subr.mxu0 0.0
    %3613 = vmatpush1.msra.mxu0 0.0
    %3614 = vmatprep.subr.mxu0 0.0
    %3615 = vmatpush1.msra.mxu0 0.0
    %3616 = vmatprep.subr.mxu0 0.0
    %3617 = vmatpush1.msra.mxu0 0.0
    %3618 = vmatprep.subr.mxu0 0.0
    %3619 = vmatpush1.msra.mxu0 0.0
    %3620 = vmatprep.subr.mxu0 0.0
    %3621 = vmatpush1.msra.mxu0 0.0
    %3622 = vmatprep.subr.mxu0 0.0
    %3623 = vmatpush1.msra.mxu0 0.0
    %3624 = vmatprep.subr.mxu0 0.0
    %3625 = vmatpush1.msra.mxu0 0.0
    %3626 = vmatprep.subr.mxu0 0.0
    %3627 = vmatpush1.msra.mxu0 0.0
    %3628 = vmatprep.mubr.f32.mxu0 0.0
    %3629 = vmatmul.mubr.f32.gmra.mrb[0].mxu0 %v3492
    %v3630 = vpop.f32.mrb[0].mxu0
    %v3631 = vadd.f32 %v579, %v3630
    %v3632 = vpop.f32.mrb[0].mxu0
    %3633 = vdwg.mxu0
    %v3634 = vadd.f32 %v3560, %v3398
    %v3635 = vxor.u32 %v3634, 2147483648
    %v3636 = vmul.f32 %v3635, 1.442695
    %v3637 = vpow.pop %v3636
    %v3638 = vadd.f32 %v3637, 1.0
    %v3639 = vrcp.pop %v3638
    %v3640 = vmul.f32 1.0, %v3639
    %v3641 = vadd.f32 %v3562, %v3467
    %v3642 = vxor.u32 %v3641, 2147483648
    %v3643 = vmul.f32 %v3642, 1.442695
    %v3644 = vpow.pop %v3643
    %v3645 = vadd.f32 %v3644, 1.0
    %v3646 = vrcp.pop %v3645
    %v3647 = vmul.f32 1.0, %v3646
    %v3648 = vadd.f32 %v3469, %v742
    %v3649 = vmul.f32 %v3640, %v3648
    %v3650 = vadd.f32 %v3631, %v3649
    %v3651 = vtanh.pop %v3650
    %v3652 = vsub.f32 1.0, %v3647
    %v3653 = vmul.f32 %v3652, %v3651
    %v3654 = vmul.f32 %v3647, %v3250
    %v3655 = vadd.f32 %v3653, %v3654
    %v3656 = vsel %vm3253, 1, 0
    %3657 = vset.pattern.permute.xlu0 0
    %3658 = vperm.xlu0 %3657, %v3656
    %v3659 = vpop.permute.xlu0 %3658
    %vm3660 = vcmp.eq.s32.totalorder %v3659, 1
    %v3661 = vsel %vm3660, %v3655, 0.0
    %s3662 = scalar_lea.vmem [#allocation10], 56
    %3663 = vst [vmem:[%s3662] sm:$0xff] %v3661
    %v3664 = vsel %vm3660, %v3492, %v3249
    %v3665 = vsel %vm3660, %v3655, %v3250
    %3666 = vst [vmem:[#allocation2] sm:$0xff] %v3664
    %3667 = vst [vmem:[#allocation3] sm:$0xff] %v3665
    // Predicated region
    $region46: #{tpu_custom_call.1} parent=1 // pred_check
      _
    $region47: #{tpu_custom_call.1} parent=1 // pred_check_branch
      %3669 = sbr.rel (0) target = $region49
    $region48: #{tpu_custom_call.1} parent=1 // pred_region
      %s3671 = ssub.s32 1024, 1024
      %3672 = vsyncadd [#allocation6], %s3671
      %s3673 = sshll.u32 [#allocation10], 4
      %s3674 = int_to_ptr.vmem [resolvable:$true] %s3673
      %3679 = dma.vmem_to_hbm [thread:$0]  %s3674, 1024, %s7, [#allocation6], 128, 128, 8
    $region49: #{tpu_custom_call.1} parent=1 // pred_fallthru
      _
    // Predicated region
    $region50: #{tpu_custom_call.1} parent=1 // pred_check
      _
    $region51: #{tpu_custom_call.1} parent=1 // pred_check_branch
      %3681 = sbr.rel (0) target = $region53
    $region52: #{tpu_custom_call.1} parent=1 // pred_region
      %3682 = dma.done [#allocation6], 1024
    $region53: #{tpu_custom_call.1} parent=1 // pred_fallthru
      _
    %3683 = vsyncpa [#allocation5], 1
    %3684 = vsyncpa [#allocation8], 1
    %3685 = vsyncpa [#allocation6], 1

</llo_original>
